<compile_context>
chip_gen: v7x
topology: tpu7x:2x2x1
jax: 0.10.0
libtpu: 0.0.40
codegen_flags: <defaults>
</compile_context>

<pallas_src>
import functools
import math

import jax
import jax.numpy as jnp
from jax.experimental import pallas as pl
from jax.experimental.pallas import tpu as pltpu

# ----------------------------- model config ---------------------------------
BATCH       = 2
SEQ         = 8
HIDDEN      = 48          # must be 6 * COORD (LayoutLMv2 concatenates 6 bbox embeds)
COORD       = HIDDEN // 6 # coordinate_size == shape_size
NUM_HEADS   = 4
HEAD_DIM    = HIDDEN // NUM_HEADS
FFN         = 96
NUM_LAYERS  = 2
VOCAB       = 100
MAX_POS     = 64
MAX_2D_POS  = 1024
NUM_LABELS  = 13
LOGIT_PAD   = 128         # lane-dense classifier output width
LN_EPS      = 1e-12

PADH        = 128                   # per-head lane padding (aligned slices)
HPAD_ALL    = NUM_HEADS * PADH      # 512
VEC_WIDTH   = HPAD_ALL              # width of the packed vector slab

# vector-slab row layout (all static Python ints)
ROW_EMB_G      = 0
ROW_EMB_B      = 1
ROW_LAYER0     = 2
ROWS_PER_LAYER = 10                 # bq, bk, bv, bo, ln1_g, ln1_b, bi, bf, ln2_g, ln2_b
ROW_CLS_B      = ROW_LAYER0 + NUM_LAYERS * ROWS_PER_LAYER
NUM_VEC_ROWS   = ROW_CLS_B + 1


# ------------------------------ fused kernel ---------------------------------
def _layernorm(x, g, b):
    mu = jnp.mean(x, axis=-1, keepdims=True)
    var = jnp.mean((x - mu) ** 2, axis=-1, keepdims=True)
    return (x - mu) * jax.lax.rsqrt(var + LN_EPS) * g + b


def fused_forward_kernel(x_ref, bias_ref, vec_ref, wqkv_ref, wo_ref,
                         wi_ref, wf_ref, clsw_ref, out_ref):
    """Whole LayoutLMv2 text forward for the full (B*S, H) activation slab.

    x_ref    : (B*S, H)                summed embeddings
    bias_ref : (B, S)                  additive attention mask
    vec_ref  : (NUM_VEC_ROWS, 512)     packed LN gammas/betas + biases (zero-padded)
    wqkv_ref : (L, H, 3*NH*128)        lane-padded fused Q|K|V weights
    wo_ref   : (L, NH*128, H)          row-padded output projection
    wi_ref   : (L, H, FFN)
    wf_ref   : (L, FFN, H)
    clsw_ref : (H, LOGIT_PAD)          lane-dense (zero-padded) classifier
    out_ref  : (B*S, LOGIT_PAD)
    """
    def vrow(i, w=HIDDEN):
        return vec_ref[i:i + 1, 0:w]

    x = _layernorm(x_ref[...].astype(jnp.float32),
                   vrow(ROW_EMB_G), vrow(ROW_EMB_B))

    # hoisted per-batch additive masks, broadcast to (S, S) once (not per layer/head)
    bias = bias_ref[...]                                            # (B, S)
    bias_sq = [jnp.broadcast_to(bias[b:b + 1, :], (SEQ, SEQ)) for b in range(BATCH)]

    scale = 1.0 / math.sqrt(HEAD_DIM)

    for l in range(NUM_LAYERS):                                     # static layer loop
        base = ROW_LAYER0 + l * ROWS_PER_LAYER
        wqkv = wqkv_ref[l]                                          # (H, 3*512)
        wo   = wo_ref[l]                                            # (512, H)
        wi   = wi_ref[l]                                            # (H, FFN)
        wf   = wf_ref[l]                                            # (FFN, H)

        # ---- single QKV slab GEMM; q/k/v splits are 128-lane aligned ----
        qkv = jnp.dot(x, wqkv, preferred_element_type=jnp.float32)  # (B*S, 1536)
        q = qkv[:, 0 * HPAD_ALL:1 * HPAD_ALL] + vec_ref[base + 0:base + 1, :]
        k = qkv[:, 1 * HPAD_ALL:2 * HPAD_ALL] + vec_ref[base + 1:base + 2, :]
        v = qkv[:, 2 * HPAD_ALL:3 * HPAD_ALL] + vec_ref[base + 2:base + 3, :]

        # ---- attention: tiny per-(batch, head) blocks, all slices aligned ----
        ctx_rows = []
        for b in range(BATCH):                                      # static (B=2)
            r0 = b * SEQ
            head_ctx = []
            for h in range(NUM_HEADS):                              # static (NH=4)
                c0 = h * PADH
                qbh = q[r0:r0 + SEQ, c0:c0 + PADH]                  # (S, 128)
                kbh = k[r0:r0 + SEQ, c0:c0 + PADH]
                vbh = v[r0:r0 + SEQ, c0:c0 + PADH]
                # scores: q @ k^T (zero-padded lanes contribute nothing)
                s = jax.lax.dot_general(
                    qbh, kbh, (((1,), (1,)), ((), ())),
                    preferred_element_type=jnp.float32) * scale      # (S, S)
                s = s + bias_sq[b]
                s = s - jnp.max(s, axis=-1, keepdims=True)
                p = jnp.exp(s)
                p = p * pl.reciprocal(jnp.sum(p, axis=-1, keepdims=True), approx=True)
                head_ctx.append(
                    jnp.dot(p, vbh, preferred_element_type=jnp.float32))  # (S, 128)
            ctx_rows.append(jnp.concatenate(head_ctx, axis=-1))      # (S, 512)
        ctx = jnp.concatenate(ctx_rows, axis=0)                      # (B*S, 512)

        # ---- output projection: one slab GEMM (row-padded Wo), no head-sum ----
        attn = jnp.dot(ctx, wo, preferred_element_type=jnp.float32) + vrow(base + 3)
        h1 = _layernorm(x + attn, vrow(base + 4), vrow(base + 5))

        # ---- FFN ----
        ff = jnp.dot(h1, wi, preferred_element_type=jnp.float32) + vrow(base + 6, FFN)
        ff = jax.nn.gelu(ff, approximate=True)   # TODO(synk): exact erf GELU
        ff = jnp.dot(ff, wf, preferred_element_type=jnp.float32) + vrow(base + 7)
        x = _layernorm(h1 + ff, vrow(base + 8), vrow(base + 9))

    # ---- lane-dense classifier head ----
    logits = jnp.dot(x, clsw_ref[...], preferred_element_type=jnp.float32) \
        + vec_ref[ROW_CLS_B:ROW_CLS_B + 1, 0:LOGIT_PAD]
    out_ref[...] = logits.astype(out_ref.dtype)                      # (B*S, 128)


# ------------------------------ parameters -----------------------------------
def init_params(key):
    def normal(k, shape, scale=0.02):
        return (scale * jax.random.normal(k, shape)).astype(jnp.float32)

    keys = iter(jax.random.split(key, 64))
    p = {
        "word_emb":  normal(next(keys), (VOCAB, HIDDEN)),
        "pos_emb":   normal(next(keys), (MAX_POS, HIDDEN)),
        "tok_emb":   normal(next(keys), (2, HIDDEN)),
        "x_emb":     normal(next(keys), (MAX_2D_POS, COORD)),
        "y_emb":     normal(next(keys), (MAX_2D_POS, COORD)),
        "h_emb":     normal(next(keys), (MAX_2D_POS, COORD)),
        "w_emb":     normal(next(keys), (MAX_2D_POS, COORD)),
        "emb_ln_g":  jnp.ones((1, HIDDEN), jnp.float32),
        "emb_ln_b":  jnp.zeros((1, HIDDEN), jnp.float32),
        "cls_w":     normal(next(keys), (HIDDEN, NUM_LABELS)),
        "cls_b":     jnp.zeros((1, NUM_LABELS), jnp.float32),
        "layers": [],
    }
    for _ in range(NUM_LAYERS):
        lp = {
            "wq": normal(next(keys), (HIDDEN, HIDDEN)),
            "bq": jnp.zeros((1, HIDDEN), jnp.float32),
            "wk": normal(next(keys), (HIDDEN, HIDDEN)),
            "bk": jnp.zeros((1, HIDDEN), jnp.float32),
            "wv": normal(next(keys), (HIDDEN, HIDDEN)),
            "bv": jnp.zeros((1, HIDDEN), jnp.float32),
            "wo": normal(next(keys), (HIDDEN, HIDDEN)),
            "bo": jnp.zeros((1, HIDDEN), jnp.float32),
            "ln1_g": jnp.ones((1, HIDDEN), jnp.float32),
            "ln1_b": jnp.zeros((1, HIDDEN), jnp.float32),
            "wi": normal(next(keys), (HIDDEN, FFN)),
            "bi": jnp.zeros((1, FFN), jnp.float32),
            "wf": normal(next(keys), (FFN, HIDDEN)),
            "bf": jnp.zeros((1, HIDDEN), jnp.float32),
            "ln2_g": jnp.ones((1, HIDDEN), jnp.float32),
            "ln2_b": jnp.zeros((1, HIDDEN), jnp.float32),
        }
        p["layers"].append(lp)
    return p


# ----------------- one-time weight restructuring (cached, NOT per-call) -------
def _pad_head_cols(w):   # (H, NH*HD) -> (H, NH*PADH), head h at lanes [h*PADH, h*PADH+HD)
    w = w.reshape(HIDDEN, NUM_HEADS, HEAD_DIM)
    out = jnp.zeros((HIDDEN, NUM_HEADS, PADH), jnp.float32)
    return out.at[:, :, :HEAD_DIM].set(w).reshape(HIDDEN, HPAD_ALL)


def _pad_head_bias(b):   # (1, NH*HD) -> (1, NH*PADH)
    b = b.reshape(1, NUM_HEADS, HEAD_DIM)
    out = jnp.zeros((1, NUM_HEADS, PADH), jnp.float32)
    return out.at[:, :, :HEAD_DIM].set(b).reshape(1, HPAD_ALL)


def _pad_head_rows(w):   # (NH*HD, H) -> (NH*PADH, H)
    w = w.reshape(NUM_HEADS, HEAD_DIM, HIDDEN)
    out = jnp.zeros((NUM_HEADS, PADH, HIDDEN), jnp.float32)
    return out.at[:, :HEAD_DIM, :].set(w).reshape(HPAD_ALL, HIDDEN)


def _vec_row(v):         # zero-pad any (1, n) vector to (1, VEC_WIDTH)
    v = v.reshape(1, -1).astype(jnp.float32)
    return jnp.zeros((1, VEC_WIDTH), jnp.float32).at[:, :v.shape[1]].set(v)


def prepare_fused_weights(params):
    """Run ONCE; returns the cached pytree consumed by the jitted forward."""
    layers = params["layers"]

    wqkv = jnp.stack([
        jnp.concatenate([_pad_head_cols(lp["wq"]),
                         _pad_head_cols(lp["wk"]),
                         _pad_head_cols(lp["wv"])], axis=-1)
        for lp in layers], axis=0)                                  # (L, H, 3*512)
    wo = jnp.stack([_pad_head_rows(lp["wo"]) for lp in layers], axis=0)  # (L, 512, H)
    wi = jnp.stack([lp["wi"] for lp in layers], axis=0)             # (L, H, FFN)
    wf = jnp.stack([lp["wf"] for lp in layers], axis=0)             # (L, FFN, H)

    cls_w = jnp.zeros((HIDDEN, LOGIT_PAD), jnp.float32
                      ).at[:, :NUM_LABELS].set(params["cls_w"])
    cls_b = jnp.zeros((1, LOGIT_PAD), jnp.float32
                      ).at[:, :NUM_LABELS].set(params["cls_b"])

    rows = [_vec_row(params["emb_ln_g"]), _vec_row(params["emb_ln_b"])]
    for lp in layers:
        rows += [
            _vec_row(_pad_head_bias(lp["bq"])),
            _vec_row(_pad_head_bias(lp["bk"])),
            _vec_row(_pad_head_bias(lp["bv"])),
            _vec_row(lp["bo"]),
            _vec_row(lp["ln1_g"]), _vec_row(lp["ln1_b"]),
            _vec_row(lp["bi"]), _vec_row(lp["bf"]),
            _vec_row(lp["ln2_g"]), _vec_row(lp["ln2_b"]),
        ]
    rows.append(_vec_row(cls_b))
    vecs = jnp.concatenate(rows, axis=0)                            # (23, 512)

    emb = {k: params[k] for k in ("word_emb", "pos_emb", "tok_emb",
                                  "x_emb", "y_emb", "h_emb", "w_emb")}
    return {"emb": emb, "vecs": vecs, "wqkv": wqkv, "wo": wo,
            "wi": wi, "wf": wf, "cls_w": cls_w}


# ------------------------------ forward pass ---------------------------------
@jax.jit
def nutrition_layout_forward(fused, input_ids, attention_mask, bbox, labels=None):
    """Mirrors LayoutLMv2ForTokenClassification.forward (text path)."""
    B, S = input_ids.shape
    emb = fused["emb"]

    # --- embeddings (gathers are glue; everything downstream is one kernel) ---
    word_e = emb["word_emb"][input_ids]                             # (B,S,H)
    pos_e = emb["pos_emb"][jnp.arange(S)][None]                     # (1,S,H)
    tok_e = emb["tok_emb"][0][None, None]                           # (1,1,H)

    clip = functools.partial(jnp.clip, min=0, max=MAX_2D_POS - 1)
    left  = emb["x_emb"][clip(bbox[..., 0])]
    upper = emb["y_emb"][clip(bbox[..., 1])]
    right = emb["x_emb"][clip(bbox[..., 2])]
    lower = emb["y_emb"][clip(bbox[..., 3])]
    h_e   = emb["h_emb"][clip(bbox[..., 3] - bbox[..., 1])]
    w_e   = emb["w_emb"][clip(bbox[..., 2] - bbox[..., 0])]
    spatial = jnp.concatenate([left, upper, right, lower, h_e, w_e], axis=-1)

    emb_sum = (word_e + pos_e + spatial + tok_e).reshape(B * S, HIDDEN)
    attn_bias = (1.0 - attention_mask.astype(jnp.float32)) * -1e9   # (B, S)

    # --- single fused pallas_call: embed-LN -> encoder layers -> classifier ---
    vmem = pl.BlockSpec(memory_space=pltpu.MemorySpace.VMEM)
    out = pl.pallas_call(
        fused_forward_kernel,
        out_shape=jax.ShapeDtypeStruct((B * S, LOGIT_PAD), jnp.float32),
        in_specs=[vmem] * 8,
        out_specs=vmem,
    )(emb_sum, attn_bias, fused["vecs"], fused["wqkv"], fused["wo"],
      fused["wi"], fused["wf"], fused["cls_w"])

    logits = out.reshape(B, S, LOGIT_PAD)[:, :, :NUM_LABELS]        # (B,S,L)

    loss = None
    if labels is not None:
        # masked cross-entropy over active tokens (glue reduction)
        logp = jax.nn.log_softmax(logits, axis=-1)
        nll = -jnp.take_along_axis(logp, labels[..., None], axis=-1)[..., 0]
        m = attention_mask.astype(jnp.float32)
        loss = jnp.sum(nll * m) / jnp.maximum(jnp.sum(m), 1.0)
    return logits, loss


# --------------------------------- main ---------------------------------------
if __name__ == "__main__":
    root = jax.random.PRNGKey(0)
    k_param, k_ids, k_bb, k_lab = jax.random.split(root, 4)

    params = init_params(k_param)
    # one-time (cached) weight repack — hoisted out of the per-call path
    fused = jax.tree_util.tree_map(jax.block_until_ready,
                                   prepare_fused_weights(params))

    input_ids = jax.random.randint(k_ids, (BATCH, SEQ), 0, VOCAB, dtype=jnp.int32)
    attention_mask = jnp.ones((BATCH, SEQ), jnp.int32).at[1, -2:].set(0)

    kb1, kb2, kb3, kb4 = jax.random.split(k_bb, 4)
    x1 = jax.random.randint(kb1, (BATCH, SEQ), 0, 500, dtype=jnp.int32)
    y1 = jax.random.randint(kb2, (BATCH, SEQ), 0, 500, dtype=jnp.int32)
    x2 = x1 + jax.random.randint(kb3, (BATCH, SEQ), 1, 400, dtype=jnp.int32)
    y2 = y1 + jax.random.randint(kb4, (BATCH, SEQ), 1, 400, dtype=jnp.int32)
    bbox = jnp.stack([x1, y1, x2, y2], axis=-1)                     # (B,S,4)

    labels = jax.random.randint(k_lab, (BATCH, SEQ), 0, NUM_LABELS, dtype=jnp.int32)

    logits, loss = nutrition_layout_forward(fused, input_ids, attention_mask,
                                            bbox, labels)
    jax.block_until_ready((logits, loss))

    assert logits.shape == (BATCH, SEQ, NUM_LABELS)
    assert bool(jnp.isfinite(logits).all()) and bool(jnp.isfinite(loss))
    print("KERNEL_OK")
</pallas_src>

<mosaic_0001>
module attributes {stable_mosaic.version = 11 : i64} {
  func.func @fused_forward_kernel(%arg0: memref<16x48xf32, #tpu.memory_space<vmem>>, %arg1: memref<2x8xf32, #tpu.memory_space<vmem>>, %arg2: memref<23x512xf32, #tpu.memory_space<vmem>>, %arg3: memref<2x48x1536xf32, #tpu.memory_space<vmem>>, %arg4: memref<2x512x48xf32, #tpu.memory_space<vmem>>, %arg5: memref<2x48x96xf32, #tpu.memory_space<vmem>>, %arg6: memref<2x96x48xf32, #tpu.memory_space<vmem>>, %arg7: memref<48x128xf32, #tpu.memory_space<vmem>>, %arg8: memref<16x128xf32, #tpu.memory_space<vmem>>) attributes {dimension_semantics = [], scalar_prefetch = 0 : i64, scratch_operands = 0 : i64, tpu.core_type = #tpu.core_type<tc>} {
    %c0 = arith.constant 0 : index
    %c0_0 = arith.constant 0 : index
    %0 = vector.load %arg0[%c0, %c0_0] : memref<16x48xf32, #tpu.memory_space<vmem>>, vector<16x48xf32>
    %c0_1 = arith.constant 0 : index
    %c0_2 = arith.constant 0 : index
    %1 = vector.load %arg2[%c0_1, %c0_2] : memref<23x512xf32, #tpu.memory_space<vmem>>, vector<1x48xf32>
    %c1 = arith.constant 1 : index
    %c0_3 = arith.constant 0 : index
    %2 = vector.load %arg2[%c1, %c0_3] : memref<23x512xf32, #tpu.memory_space<vmem>>, vector<1x48xf32>
    %cst = arith.constant dense<0.000000e+00> : vector<16xf32>
    %3 = vector.multi_reduction <add>, %0, %cst [1] : vector<16x48xf32> to vector<16xf32>
    %4 = vector.shape_cast %3 : vector<16xf32> to vector<16x1xf32>
    %cst_4 = arith.constant 4.800000e+01 : f32
    %5 = vector.broadcast %cst_4 : f32 to vector<16x1xf32>
    %6 = arith.divf %4, %5 : vector<16x1xf32>
    %7 = vector.broadcast %6 : vector<16x1xf32> to vector<16x48xf32>
    %8 = arith.subf %0, %7 : vector<16x48xf32>
    %9 = arith.mulf %8, %8 : vector<16x48xf32>
    %cst_5 = arith.constant dense<0.000000e+00> : vector<16xf32>
    %10 = vector.multi_reduction <add>, %9, %cst_5 [1] : vector<16x48xf32> to vector<16xf32>
    %11 = vector.shape_cast %10 : vector<16xf32> to vector<16x1xf32>
    %cst_6 = arith.constant 4.800000e+01 : f32
    %12 = vector.broadcast %cst_6 : f32 to vector<16x1xf32>
    %13 = arith.divf %11, %12 : vector<16x1xf32>
    %14 = vector.broadcast %6 : vector<16x1xf32> to vector<16x48xf32>
    %15 = arith.subf %0, %14 : vector<16x48xf32>
    %cst_7 = arith.constant 9.99999996E-13 : f32
    %16 = vector.broadcast %cst_7 : f32 to vector<16x1xf32>
    %17 = arith.addf %13, %16 : vector<16x1xf32>
    %18 = math.rsqrt %17 : vector<16x1xf32>
    %19 = vector.broadcast %18 : vector<16x1xf32> to vector<16x48xf32>
    %20 = arith.mulf %15, %19 : vector<16x48xf32>
    %21 = vector.broadcast %1 : vector<1x48xf32> to vector<16x48xf32>
    %22 = arith.mulf %20, %21 : vector<16x48xf32>
    %23 = vector.broadcast %2 : vector<1x48xf32> to vector<16x48xf32>
    %24 = arith.addf %22, %23 : vector<16x48xf32>
    %c0_8 = arith.constant 0 : index
    %c0_9 = arith.constant 0 : index
    %25 = vector.load %arg1[%c0_8, %c0_9] : memref<2x8xf32, #tpu.memory_space<vmem>>, vector<2x8xf32>
    %26 = vector.extract_strided_slice %25 {offsets = [0, 0], sizes = [1, 8], strides = [1, 1]} : vector<2x8xf32> to vector<1x8xf32>
    %27 = vector.shape_cast %26 : vector<1x8xf32> to vector<1x8xf32>
    %28 = vector.broadcast %27 : vector<1x8xf32> to vector<8x8xf32>
    %29 = vector.extract_strided_slice %25 {offsets = [1, 0], sizes = [1, 8], strides = [1, 1]} : vector<2x8xf32> to vector<1x8xf32>
    %30 = vector.shape_cast %29 : vector<1x8xf32> to vector<1x8xf32>
    %31 = vector.broadcast %30 : vector<1x8xf32> to vector<8x8xf32>
    %c0_10 = arith.constant 0 : index
    %c0_11 = arith.constant 0 : index
    %c0_12 = arith.constant 0 : index
    %32 = vector.load %arg3[%c0_10, %c0_11, %c0_12] : memref<2x48x1536xf32, #tpu.memory_space<vmem>>, vector<1x48x1536xf32>
    %33 = vector.shape_cast %32 : vector<1x48x1536xf32> to vector<48x1536xf32>
    %c0_13 = arith.constant 0 : index
    %c0_14 = arith.constant 0 : index
    %c0_15 = arith.constant 0 : index
    %34 = vector.load %arg4[%c0_13, %c0_14, %c0_15] : memref<2x512x48xf32, #tpu.memory_space<vmem>>, vector<1x512x48xf32>
    %35 = vector.shape_cast %34 : vector<1x512x48xf32> to vector<512x48xf32>
    %c0_16 = arith.constant 0 : index
    %c0_17 = arith.constant 0 : index
    %c0_18 = arith.constant 0 : index
    %36 = vector.load %arg5[%c0_16, %c0_17, %c0_18] : memref<2x48x96xf32, #tpu.memory_space<vmem>>, vector<1x48x96xf32>
    %37 = vector.shape_cast %36 : vector<1x48x96xf32> to vector<48x96xf32>
    %c0_19 = arith.constant 0 : index
    %c0_20 = arith.constant 0 : index
    %c0_21 = arith.constant 0 : index
    %38 = vector.load %arg6[%c0_19, %c0_20, %c0_21] : memref<2x96x48xf32, #tpu.memory_space<vmem>>, vector<1x96x48xf32>
    %39 = vector.shape_cast %38 : vector<1x96x48xf32> to vector<96x48xf32>
    %cst_22 = arith.constant dense<0.000000e+00> : vector<16x1536xf32>
    %40 = tpu.matmul %24, %33, %cst_22 {dimension_numbers = #tpu.dot_dimension_numbers<[1], [0], [0], [1], [0, 0, 1, 1], [], []>} : vector<16x48xf32>, vector<48x1536xf32>, vector<16x1536xf32> -> vector<16x1536xf32>
    %41 = vector.extract_strided_slice %40 {offsets = [0, 0], sizes = [16, 512], strides = [1, 1]} : vector<16x1536xf32> to vector<16x512xf32>
    %c2 = arith.constant 2 : index
    %c0_23 = arith.constant 0 : index
    %42 = vector.load %arg2[%c2, %c0_23] : memref<23x512xf32, #tpu.memory_space<vmem>>, vector<1x512xf32>
    %43 = vector.broadcast %42 : vector<1x512xf32> to vector<16x512xf32>
    %44 = arith.addf %41, %43 : vector<16x512xf32>
    %45 = vector.extract_strided_slice %40 {offsets = [0, 512], sizes = [16, 512], strides = [1, 1]} : vector<16x1536xf32> to vector<16x512xf32>
    %c3 = arith.constant 3 : index
    %c0_24 = arith.constant 0 : index
    %46 = vector.load %arg2[%c3, %c0_24] : memref<23x512xf32, #tpu.memory_space<vmem>>, vector<1x512xf32>
    %47 = vector.broadcast %46 : vector<1x512xf32> to vector<16x512xf32>
    %48 = arith.addf %45, %47 : vector<16x512xf32>
    %49 = vector.extract_strided_slice %40 {offsets = [0, 1024], sizes = [16, 512], strides = [1, 1]} : vector<16x1536xf32> to vector<16x512xf32>
    %c4 = arith.constant 4 : index
    %c0_25 = arith.constant 0 : index
    %50 = vector.load %arg2[%c4, %c0_25] : memref<23x512xf32, #tpu.memory_space<vmem>>, vector<1x512xf32>
    %51 = vector.broadcast %50 : vector<1x512xf32> to vector<16x512xf32>
    %52 = arith.addf %49, %51 : vector<16x512xf32>
    %53 = vector.extract_strided_slice %44 {offsets = [0, 0], sizes = [8, 128], strides = [1, 1]} : vector<16x512xf32> to vector<8x128xf32>
    %54 = vector.extract_strided_slice %48 {offsets = [0, 0], sizes = [8, 128], strides = [1, 1]} : vector<16x512xf32> to vector<8x128xf32>
    %55 = vector.extract_strided_slice %52 {offsets = [0, 0], sizes = [8, 128], strides = [1, 1]} : vector<16x512xf32> to vector<8x128xf32>
    %cst_26 = arith.constant dense<0.000000e+00> : vector<8x8xf32>
    %56 = tpu.matmul %53, %54, %cst_26 {dimension_numbers = #tpu.dot_dimension_numbers<[1], [1], [0], [0], [0, 0, 1, 0], [], []>} : vector<8x128xf32>, vector<8x128xf32>, vector<8x8xf32> -> vector<8x8xf32>
    %cst_27 = arith.constant 0.288675129 : f32
    %57 = vector.broadcast %cst_27 : f32 to vector<8x8xf32>
    %58 = arith.mulf %56, %57 : vector<8x8xf32>
    %59 = arith.addf %58, %28 : vector<8x8xf32>
    %cst_28 = arith.constant dense<0xFF800000> : vector<8xf32>
    %60 = vector.multi_reduction <maximumf>, %59, %cst_28 [1] : vector<8x8xf32> to vector<8xf32>
    %61 = vector.shape_cast %60 : vector<8xf32> to vector<8x1xf32>
    %62 = vector.broadcast %61 : vector<8x1xf32> to vector<8x8xf32>
    %63 = arith.subf %59, %62 : vector<8x8xf32>
    %64 = math.exp %63 : vector<8x8xf32>
    %cst_29 = arith.constant dense<0.000000e+00> : vector<8xf32>
    %65 = vector.multi_reduction <add>, %64, %cst_29 [1] : vector<8x8xf32> to vector<8xf32>
    %66 = vector.shape_cast %65 : vector<8xf32> to vector<8x1xf32>
    %67 = tpu.reciprocal %66 {approx = true} : vector<8x1xf32> -> vector<8x1xf32>
    %68 = vector.broadcast %67 : vector<8x1xf32> to vector<8x8xf32>
    %69 = arith.mulf %64, %68 : vector<8x8xf32>
    %cst_30 = arith.constant dense<0.000000e+00> : vector<8x128xf32>
    %70 = tpu.matmul %69, %55, %cst_30 {dimension_numbers = #tpu.dot_dimension_numbers<[1], [0], [0], [1], [0, 0, 1, 1], [], []>} : vector<8x8xf32>, vector<8x128xf32>, vector<8x128xf32> -> vector<8x128xf32>
    %71 = vector.extract_strided_slice %44 {offsets = [0, 128], sizes = [8, 128], strides = [1, 1]} : vector<16x512xf32> to vector<8x128xf32>
    %72 = vector.extract_strided_slice %48 {offsets = [0, 128], sizes = [8, 128], strides = [1, 1]} : vector<16x512xf32> to vector<8x128xf32>
    %73 = vector.extract_strided_slice %52 {offsets = [0, 128], sizes = [8, 128], strides = [1, 1]} : vector<16x512xf32> to vector<8x128xf32>
    %cst_31 = arith.constant dense<0.000000e+00> : vector<8x8xf32>
    %74 = tpu.matmul %71, %72, %cst_31 {dimension_numbers = #tpu.dot_dimension_numbers<[1], [1], [0], [0], [0, 0, 1, 0], [], []>} : vector<8x128xf32>, vector<8x128xf32>, vector<8x8xf32> -> vector<8x8xf32>
    %cst_32 = arith.constant 0.288675129 : f32
    %75 = vector.broadcast %cst_32 : f32 to vector<8x8xf32>
    %76 = arith.mulf %74, %75 : vector<8x8xf32>
    %77 = arith.addf %76, %28 : vector<8x8xf32>
    %cst_33 = arith.constant dense<0xFF800000> : vector<8xf32>
    %78 = vector.multi_reduction <maximumf>, %77, %cst_33 [1] : vector<8x8xf32> to vector<8xf32>
    %79 = vector.shape_cast %78 : vector<8xf32> to vector<8x1xf32>
    %80 = vector.broadcast %79 : vector<8x1xf32> to vector<8x8xf32>
    %81 = arith.subf %77, %80 : vector<8x8xf32>
    %82 = math.exp %81 : vector<8x8xf32>
    %cst_34 = arith.constant dense<0.000000e+00> : vector<8xf32>
    %83 = vector.multi_reduction <add>, %82, %cst_34 [1] : vector<8x8xf32> to vector<8xf32>
    %84 = vector.shape_cast %83 : vector<8xf32> to vector<8x1xf32>
    %85 = tpu.reciprocal %84 {approx = true} : vector<8x1xf32> -> vector<8x1xf32>
    %86 = vector.broadcast %85 : vector<8x1xf32> to vector<8x8xf32>
    %87 = arith.mulf %82, %86 : vector<8x8xf32>
    %cst_35 = arith.constant dense<0.000000e+00> : vector<8x128xf32>
    %88 = tpu.matmul %87, %73, %cst_35 {dimension_numbers = #tpu.dot_dimension_numbers<[1], [0], [0], [1], [0, 0, 1, 1], [], []>} : vector<8x8xf32>, vector<8x128xf32>, vector<8x128xf32> -> vector<8x128xf32>
    %89 = vector.extract_strided_slice %44 {offsets = [0, 256], sizes = [8, 128], strides = [1, 1]} : vector<16x512xf32> to vector<8x128xf32>
    %90 = vector.extract_strided_slice %48 {offsets = [0, 256], sizes = [8, 128], strides = [1, 1]} : vector<16x512xf32> to vector<8x128xf32>
    %91 = vector.extract_strided_slice %52 {offsets = [0, 256], sizes = [8, 128], strides = [1, 1]} : vector<16x512xf32> to vector<8x128xf32>
    %cst_36 = arith.constant dense<0.000000e+00> : vector<8x8xf32>
    %92 = tpu.matmul %89, %90, %cst_36 {dimension_numbers = #tpu.dot_dimension_numbers<[1], [1], [0], [0], [0, 0, 1, 0], [], []>} : vector<8x128xf32>, vector<8x128xf32>, vector<8x8xf32> -> vector<8x8xf32>
    %cst_37 = arith.constant 0.288675129 : f32
    %93 = vector.broadcast %cst_37 : f32 to vector<8x8xf32>
    %94 = arith.mulf %92, %93 : vector<8x8xf32>
    %95 = arith.addf %94, %28 : vector<8x8xf32>
    %cst_38 = arith.constant dense<0xFF800000> : vector<8xf32>
    %96 = vector.multi_reduction <maximumf>, %95, %cst_38 [1] : vector<8x8xf32> to vector<8xf32>
    %97 = vector.shape_cast %96 : vector<8xf32> to vector<8x1xf32>
    %98 = vector.broadcast %97 : vector<8x1xf32> to vector<8x8xf32>
    %99 = arith.subf %95, %98 : vector<8x8xf32>
    %100 = math.exp %99 : vector<8x8xf32>
    %cst_39 = arith.constant dense<0.000000e+00> : vector<8xf32>
    %101 = vector.multi_reduction <add>, %100, %cst_39 [1] : vector<8x8xf32> to vector<8xf32>
    %102 = vector.shape_cast %101 : vector<8xf32> to vector<8x1xf32>
    %103 = tpu.reciprocal %102 {approx = true} : vector<8x1xf32> -> vector<8x1xf32>
    %104 = vector.broadcast %103 : vector<8x1xf32> to vector<8x8xf32>
    %105 = arith.mulf %100, %104 : vector<8x8xf32>
    %cst_40 = arith.constant dense<0.000000e+00> : vector<8x128xf32>
    %106 = tpu.matmul %105, %91, %cst_40 {dimension_numbers = #tpu.dot_dimension_numbers<[1], [0], [0], [1], [0, 0, 1, 1], [], []>} : vector<8x8xf32>, vector<8x128xf32>, vector<8x128xf32> -> vector<8x128xf32>
    %107 = vector.extract_strided_slice %44 {offsets = [0, 384], sizes = [8, 128], strides = [1, 1]} : vector<16x512xf32> to vector<8x128xf32>
    %108 = vector.extract_strided_slice %48 {offsets = [0, 384], sizes = [8, 128], strides = [1, 1]} : vector<16x512xf32> to vector<8x128xf32>
    %109 = vector.extract_strided_slice %52 {offsets = [0, 384], sizes = [8, 128], strides = [1, 1]} : vector<16x512xf32> to vector<8x128xf32>
    %cst_41 = arith.constant dense<0.000000e+00> : vector<8x8xf32>
    %110 = tpu.matmul %107, %108, %cst_41 {dimension_numbers = #tpu.dot_dimension_numbers<[1], [1], [0], [0], [0, 0, 1, 0], [], []>} : vector<8x128xf32>, vector<8x128xf32>, vector<8x8xf32> -> vector<8x8xf32>
    %cst_42 = arith.constant 0.288675129 : f32
    %111 = vector.broadcast %cst_42 : f32 to vector<8x8xf32>
    %112 = arith.mulf %110, %111 : vector<8x8xf32>
    %113 = arith.addf %112, %28 : vector<8x8xf32>
    %cst_43 = arith.constant dense<0xFF800000> : vector<8xf32>
    %114 = vector.multi_reduction <maximumf>, %113, %cst_43 [1] : vector<8x8xf32> to vector<8xf32>
    %115 = vector.shape_cast %114 : vector<8xf32> to vector<8x1xf32>
    %116 = vector.broadcast %115 : vector<8x1xf32> to vector<8x8xf32>
    %117 = arith.subf %113, %116 : vector<8x8xf32>
    %118 = math.exp %117 : vector<8x8xf32>
    %cst_44 = arith.constant dense<0.000000e+00> : vector<8xf32>
    %119 = vector.multi_reduction <add>, %118, %cst_44 [1] : vector<8x8xf32> to vector<8xf32>
    %120 = vector.shape_cast %119 : vector<8xf32> to vector<8x1xf32>
    %121 = tpu.reciprocal %120 {approx = true} : vector<8x1xf32> -> vector<8x1xf32>
    %122 = vector.broadcast %121 : vector<8x1xf32> to vector<8x8xf32>
    %123 = arith.mulf %118, %122 : vector<8x8xf32>
    %cst_45 = arith.constant dense<0.000000e+00> : vector<8x128xf32>
    %124 = tpu.matmul %123, %109, %cst_45 {dimension_numbers = #tpu.dot_dimension_numbers<[1], [0], [0], [1], [0, 0, 1, 1], [], []>} : vector<8x8xf32>, vector<8x128xf32>, vector<8x128xf32> -> vector<8x128xf32>
    %125 = tpu.concatenate %70, %88, %106, %124 in 1 : vector<8x128xf32>, vector<8x128xf32>, vector<8x128xf32>, vector<8x128xf32> -> vector<8x512xf32>
    %126 = vector.extract_strided_slice %44 {offsets = [8, 0], sizes = [8, 128], strides = [1, 1]} : vector<16x512xf32> to vector<8x128xf32>
    %127 = vector.extract_strided_slice %48 {offsets = [8, 0], sizes = [8, 128], strides = [1, 1]} : vector<16x512xf32> to vector<8x128xf32>
    %128 = vector.extract_strided_slice %52 {offsets = [8, 0], sizes = [8, 128], strides = [1, 1]} : vector<16x512xf32> to vector<8x128xf32>
    %cst_46 = arith.constant dense<0.000000e+00> : vector<8x8xf32>
    %129 = tpu.matmul %126, %127, %cst_46 {dimension_numbers = #tpu.dot_dimension_numbers<[1], [1], [0], [0], [0, 0, 1, 0], [], []>} : vector<8x128xf32>, vector<8x128xf32>, vector<8x8xf32> -> vector<8x8xf32>
    %cst_47 = arith.constant 0.288675129 : f32
    %130 = vector.broadcast %cst_47 : f32 to vector<8x8xf32>
    %131 = arith.mulf %129, %130 : vector<8x8xf32>
    %132 = arith.addf %131, %31 : vector<8x8xf32>
    %cst_48 = arith.constant dense<0xFF800000> : vector<8xf32>
    %133 = vector.multi_reduction <maximumf>, %132, %cst_48 [1] : vector<8x8xf32> to vector<8xf32>
    %134 = vector.shape_cast %133 : vector<8xf32> to vector<8x1xf32>
    %135 = vector.broadcast %134 : vector<8x1xf32> to vector<8x8xf32>
    %136 = arith.subf %132, %135 : vector<8x8xf32>
    %137 = math.exp %136 : vector<8x8xf32>
    %cst_49 = arith.constant dense<0.000000e+00> : vector<8xf32>
    %138 = vector.multi_reduction <add>, %137, %cst_49 [1] : vector<8x8xf32> to vector<8xf32>
    %139 = vector.shape_cast %138 : vector<8xf32> to vector<8x1xf32>
    %140 = tpu.reciprocal %139 {approx = true} : vector<8x1xf32> -> vector<8x1xf32>
    %141 = vector.broadcast %140 : vector<8x1xf32> to vector<8x8xf32>
    %142 = arith.mulf %137, %141 : vector<8x8xf32>
    %cst_50 = arith.constant dense<0.000000e+00> : vector<8x128xf32>
    %143 = tpu.matmul %142, %128, %cst_50 {dimension_numbers = #tpu.dot_dimension_numbers<[1], [0], [0], [1], [0, 0, 1, 1], [], []>} : vector<8x8xf32>, vector<8x128xf32>, vector<8x128xf32> -> vector<8x128xf32>
    %144 = vector.extract_strided_slice %44 {offsets = [8, 128], sizes = [8, 128], strides = [1, 1]} : vector<16x512xf32> to vector<8x128xf32>
    %145 = vector.extract_strided_slice %48 {offsets = [8, 128], sizes = [8, 128], strides = [1, 1]} : vector<16x512xf32> to vector<8x128xf32>
    %146 = vector.extract_strided_slice %52 {offsets = [8, 128], sizes = [8, 128], strides = [1, 1]} : vector<16x512xf32> to vector<8x128xf32>
    %cst_51 = arith.constant dense<0.000000e+00> : vector<8x8xf32>
    %147 = tpu.matmul %144, %145, %cst_51 {dimension_numbers = #tpu.dot_dimension_numbers<[1], [1], [0], [0], [0, 0, 1, 0], [], []>} : vector<8x128xf32>, vector<8x128xf32>, vector<8x8xf32> -> vector<8x8xf32>
    %cst_52 = arith.constant 0.288675129 : f32
    %148 = vector.broadcast %cst_52 : f32 to vector<8x8xf32>
    %149 = arith.mulf %147, %148 : vector<8x8xf32>
    %150 = arith.addf %149, %31 : vector<8x8xf32>
    %cst_53 = arith.constant dense<0xFF800000> : vector<8xf32>
    %151 = vector.multi_reduction <maximumf>, %150, %cst_53 [1] : vector<8x8xf32> to vector<8xf32>
    %152 = vector.shape_cast %151 : vector<8xf32> to vector<8x1xf32>
    %153 = vector.broadcast %152 : vector<8x1xf32> to vector<8x8xf32>
    %154 = arith.subf %150, %153 : vector<8x8xf32>
    %155 = math.exp %154 : vector<8x8xf32>
    %cst_54 = arith.constant dense<0.000000e+00> : vector<8xf32>
    %156 = vector.multi_reduction <add>, %155, %cst_54 [1] : vector<8x8xf32> to vector<8xf32>
    %157 = vector.shape_cast %156 : vector<8xf32> to vector<8x1xf32>
    %158 = tpu.reciprocal %157 {approx = true} : vector<8x1xf32> -> vector<8x1xf32>
    %159 = vector.broadcast %158 : vector<8x1xf32> to vector<8x8xf32>
    %160 = arith.mulf %155, %159 : vector<8x8xf32>
    %cst_55 = arith.constant dense<0.000000e+00> : vector<8x128xf32>
    %161 = tpu.matmul %160, %146, %cst_55 {dimension_numbers = #tpu.dot_dimension_numbers<[1], [0], [0], [1], [0, 0, 1, 1], [], []>} : vector<8x8xf32>, vector<8x128xf32>, vector<8x128xf32> -> vector<8x128xf32>
    %162 = vector.extract_strided_slice %44 {offsets = [8, 256], sizes = [8, 128], strides = [1, 1]} : vector<16x512xf32> to vector<8x128xf32>
    %163 = vector.extract_strided_slice %48 {offsets = [8, 256], sizes = [8, 128], strides = [1, 1]} : vector<16x512xf32> to vector<8x128xf32>
    %164 = vector.extract_strided_slice %52 {offsets = [8, 256], sizes = [8, 128], strides = [1, 1]} : vector<16x512xf32> to vector<8x128xf32>
    %cst_56 = arith.constant dense<0.000000e+00> : vector<8x8xf32>
    %165 = tpu.matmul %162, %163, %cst_56 {dimension_numbers = #tpu.dot_dimension_numbers<[1], [1], [0], [0], [0, 0, 1, 0], [], []>} : vector<8x128xf32>, vector<8x128xf32>, vector<8x8xf32> -> vector<8x8xf32>
    %cst_57 = arith.constant 0.288675129 : f32
    %166 = vector.broadcast %cst_57 : f32 to vector<8x8xf32>
    %167 = arith.mulf %165, %166 : vector<8x8xf32>
    %168 = arith.addf %167, %31 : vector<8x8xf32>
    %cst_58 = arith.constant dense<0xFF800000> : vector<8xf32>
    %169 = vector.multi_reduction <maximumf>, %168, %cst_58 [1] : vector<8x8xf32> to vector<8xf32>
    %170 = vector.shape_cast %169 : vector<8xf32> to vector<8x1xf32>
    %171 = vector.broadcast %170 : vector<8x1xf32> to vector<8x8xf32>
    %172 = arith.subf %168, %171 : vector<8x8xf32>
    %173 = math.exp %172 : vector<8x8xf32>
    %cst_59 = arith.constant dense<0.000000e+00> : vector<8xf32>
    %174 = vector.multi_reduction <add>, %173, %cst_59 [1] : vector<8x8xf32> to vector<8xf32>
    %175 = vector.shape_cast %174 : vector<8xf32> to vector<8x1xf32>
    %176 = tpu.reciprocal %175 {approx = true} : vector<8x1xf32> -> vector<8x1xf32>
    %177 = vector.broadcast %176 : vector<8x1xf32> to vector<8x8xf32>
    %178 = arith.mulf %173, %177 : vector<8x8xf32>
    %cst_60 = arith.constant dense<0.000000e+00> : vector<8x128xf32>
    %179 = tpu.matmul %178, %164, %cst_60 {dimension_numbers = #tpu.dot_dimension_numbers<[1], [0], [0], [1], [0, 0, 1, 1], [], []>} : vector<8x8xf32>, vector<8x128xf32>, vector<8x128xf32> -> vector<8x128xf32>
    %180 = vector.extract_strided_slice %44 {offsets = [8, 384], sizes = [8, 128], strides = [1, 1]} : vector<16x512xf32> to vector<8x128xf32>
    %181 = vector.extract_strided_slice %48 {offsets = [8, 384], sizes = [8, 128], strides = [1, 1]} : vector<16x512xf32> to vector<8x128xf32>
    %182 = vector.extract_strided_slice %52 {offsets = [8, 384], sizes = [8, 128], strides = [1, 1]} : vector<16x512xf32> to vector<8x128xf32>
    %cst_61 = arith.constant dense<0.000000e+00> : vector<8x8xf32>
    %183 = tpu.matmul %180, %181, %cst_61 {dimension_numbers = #tpu.dot_dimension_numbers<[1], [1], [0], [0], [0, 0, 1, 0], [], []>} : vector<8x128xf32>, vector<8x128xf32>, vector<8x8xf32> -> vector<8x8xf32>
    %cst_62 = arith.constant 0.288675129 : f32
    %184 = vector.broadcast %cst_62 : f32 to vector<8x8xf32>
    %185 = arith.mulf %183, %184 : vector<8x8xf32>
    %186 = arith.addf %185, %31 : vector<8x8xf32>
    %cst_63 = arith.constant dense<0xFF800000> : vector<8xf32>
    %187 = vector.multi_reduction <maximumf>, %186, %cst_63 [1] : vector<8x8xf32> to vector<8xf32>
    %188 = vector.shape_cast %187 : vector<8xf32> to vector<8x1xf32>
    %189 = vector.broadcast %188 : vector<8x1xf32> to vector<8x8xf32>
    %190 = arith.subf %186, %189 : vector<8x8xf32>
    %191 = math.exp %190 : vector<8x8xf32>
    %cst_64 = arith.constant dense<0.000000e+00> : vector<8xf32>
    %192 = vector.multi_reduction <add>, %191, %cst_64 [1] : vector<8x8xf32> to vector<8xf32>
    %193 = vector.shape_cast %192 : vector<8xf32> to vector<8x1xf32>
    %194 = tpu.reciprocal %193 {approx = true} : vector<8x1xf32> -> vector<8x1xf32>
    %195 = vector.broadcast %194 : vector<8x1xf32> to vector<8x8xf32>
    %196 = arith.mulf %191, %195 : vector<8x8xf32>
    %cst_65 = arith.constant dense<0.000000e+00> : vector<8x128xf32>
    %197 = tpu.matmul %196, %182, %cst_65 {dimension_numbers = #tpu.dot_dimension_numbers<[1], [0], [0], [1], [0, 0, 1, 1], [], []>} : vector<8x8xf32>, vector<8x128xf32>, vector<8x128xf32> -> vector<8x128xf32>
    %198 = tpu.concatenate %143, %161, %179, %197 in 1 : vector<8x128xf32>, vector<8x128xf32>, vector<8x128xf32>, vector<8x128xf32> -> vector<8x512xf32>
    %199 = tpu.concatenate %125, %198 in 0 : vector<8x512xf32>, vector<8x512xf32> -> vector<16x512xf32>
    %cst_66 = arith.constant dense<0.000000e+00> : vector<16x48xf32>
    %200 = tpu.matmul %199, %35, %cst_66 {dimension_numbers = #tpu.dot_dimension_numbers<[1], [0], [0], [1], [0, 0, 1, 1], [], []>} : vector<16x512xf32>, vector<512x48xf32>, vector<16x48xf32> -> vector<16x48xf32>
    %c5 = arith.constant 5 : index
    %c0_67 = arith.constant 0 : index
    %201 = vector.load %arg2[%c5, %c0_67] : memref<23x512xf32, #tpu.memory_space<vmem>>, vector<1x48xf32>
    %202 = vector.broadcast %201 : vector<1x48xf32> to vector<16x48xf32>
    %203 = arith.addf %200, %202 : vector<16x48xf32>
    %204 = arith.addf %24, %203 : vector<16x48xf32>
    %c6 = arith.constant 6 : index
    %c0_68 = arith.constant 0 : index
    %205 = vector.load %arg2[%c6, %c0_68] : memref<23x512xf32, #tpu.memory_space<vmem>>, vector<1x48xf32>
    %c7 = arith.constant 7 : index
    %c0_69 = arith.constant 0 : index
    %206 = vector.load %arg2[%c7, %c0_69] : memref<23x512xf32, #tpu.memory_space<vmem>>, vector<1x48xf32>
    %cst_70 = arith.constant dense<0.000000e+00> : vector<16xf32>
    %207 = vector.multi_reduction <add>, %204, %cst_70 [1] : vector<16x48xf32> to vector<16xf32>
    %208 = vector.shape_cast %207 : vector<16xf32> to vector<16x1xf32>
    %cst_71 = arith.constant 4.800000e+01 : f32
    %209 = vector.broadcast %cst_71 : f32 to vector<16x1xf32>
    %210 = arith.divf %208, %209 : vector<16x1xf32>
    %211 = vector.broadcast %210 : vector<16x1xf32> to vector<16x48xf32>
    %212 = arith.subf %204, %211 : vector<16x48xf32>
    %213 = arith.mulf %212, %212 : vector<16x48xf32>
    %cst_72 = arith.constant dense<0.000000e+00> : vector<16xf32>
    %214 = vector.multi_reduction <add>, %213, %cst_72 [1] : vector<16x48xf32> to vector<16xf32>
    %215 = vector.shape_cast %214 : vector<16xf32> to vector<16x1xf32>
    %cst_73 = arith.constant 4.800000e+01 : f32
    %216 = vector.broadcast %cst_73 : f32 to vector<16x1xf32>
    %217 = arith.divf %215, %216 : vector<16x1xf32>
    %218 = vector.broadcast %210 : vector<16x1xf32> to vector<16x48xf32>
    %219 = arith.subf %204, %218 : vector<16x48xf32>
    %cst_74 = arith.constant 9.99999996E-13 : f32
    %220 = vector.broadcast %cst_74 : f32 to vector<16x1xf32>
    %221 = arith.addf %217, %220 : vector<16x1xf32>
    %222 = math.rsqrt %221 : vector<16x1xf32>
    %223 = vector.broadcast %222 : vector<16x1xf32> to vector<16x48xf32>
    %224 = arith.mulf %219, %223 : vector<16x48xf32>
    %225 = vector.broadcast %205 : vector<1x48xf32> to vector<16x48xf32>
    %226 = arith.mulf %224, %225 : vector<16x48xf32>
    %227 = vector.broadcast %206 : vector<1x48xf32> to vector<16x48xf32>
    %228 = arith.addf %226, %227 : vector<16x48xf32>
    %cst_75 = arith.constant dense<0.000000e+00> : vector<16x96xf32>
    %229 = tpu.matmul %228, %37, %cst_75 {dimension_numbers = #tpu.dot_dimension_numbers<[1], [0], [0], [1], [0, 0, 1, 1], [], []>} : vector<16x48xf32>, vector<48x96xf32>, vector<16x96xf32> -> vector<16x96xf32>
    %c8 = arith.constant 8 : index
    %c0_76 = arith.constant 0 : index
    %230 = vector.load %arg2[%c8, %c0_76] : memref<23x512xf32, #tpu.memory_space<vmem>>, vector<1x96xf32>
    %231 = vector.broadcast %230 : vector<1x96xf32> to vector<16x96xf32>
    %232 = arith.addf %229, %231 : vector<16x96xf32>
    %233 = arith.mulf %232, %232 : vector<16x96xf32>
    %234 = arith.mulf %232, %233 : vector<16x96xf32>
    %cst_77 = arith.constant 4.471500e-02 : f32
    %235 = vector.broadcast %cst_77 : f32 to vector<16x96xf32>
    %236 = arith.mulf %235, %234 : vector<16x96xf32>
    %237 = arith.addf %232, %236 : vector<16x96xf32>
    %cst_78 = arith.constant 0.797884583 : f32
    %238 = vector.broadcast %cst_78 : f32 to vector<16x96xf32>
    %239 = arith.mulf %238, %237 : vector<16x96xf32>
    %240 = math.tanh %239 : vector<16x96xf32>
    %cst_79 = arith.constant 1.000000e+00 : f32
    %241 = vector.broadcast %cst_79 : f32 to vector<16x96xf32>
    %242 = arith.addf %241, %240 : vector<16x96xf32>
    %cst_80 = arith.constant 5.000000e-01 : f32
    %243 = vector.broadcast %cst_80 : f32 to vector<16x96xf32>
    %244 = arith.mulf %243, %242 : vector<16x96xf32>
    %245 = arith.mulf %232, %244 : vector<16x96xf32>
    %cst_81 = arith.constant dense<0.000000e+00> : vector<16x48xf32>
    %246 = tpu.matmul %245, %39, %cst_81 {dimension_numbers = #tpu.dot_dimension_numbers<[1], [0], [0], [1], [0, 0, 1, 1], [], []>} : vector<16x96xf32>, vector<96x48xf32>, vector<16x48xf32> -> vector<16x48xf32>
    %c9 = arith.constant 9 : index
    %c0_82 = arith.constant 0 : index
    %247 = vector.load %arg2[%c9, %c0_82] : memref<23x512xf32, #tpu.memory_space<vmem>>, vector<1x48xf32>
    %248 = vector.broadcast %247 : vector<1x48xf32> to vector<16x48xf32>
    %249 = arith.addf %246, %248 : vector<16x48xf32>
    %250 = arith.addf %228, %249 : vector<16x48xf32>
    %c10 = arith.constant 10 : index
    %c0_83 = arith.constant 0 : index
    %251 = vector.load %arg2[%c10, %c0_83] : memref<23x512xf32, #tpu.memory_space<vmem>>, vector<1x48xf32>
    %c11 = arith.constant 11 : index
    %c0_84 = arith.constant 0 : index
    %252 = vector.load %arg2[%c11, %c0_84] : memref<23x512xf32, #tpu.memory_space<vmem>>, vector<1x48xf32>
    %cst_85 = arith.constant dense<0.000000e+00> : vector<16xf32>
    %253 = vector.multi_reduction <add>, %250, %cst_85 [1] : vector<16x48xf32> to vector<16xf32>
    %254 = vector.shape_cast %253 : vector<16xf32> to vector<16x1xf32>
    %cst_86 = arith.constant 4.800000e+01 : f32
    %255 = vector.broadcast %cst_86 : f32 to vector<16x1xf32>
    %256 = arith.divf %254, %255 : vector<16x1xf32>
    %257 = vector.broadcast %256 : vector<16x1xf32> to vector<16x48xf32>
    %258 = arith.subf %250, %257 : vector<16x48xf32>
    %259 = arith.mulf %258, %258 : vector<16x48xf32>
    %cst_87 = arith.constant dense<0.000000e+00> : vector<16xf32>
    %260 = vector.multi_reduction <add>, %259, %cst_87 [1] : vector<16x48xf32> to vector<16xf32>
    %261 = vector.shape_cast %260 : vector<16xf32> to vector<16x1xf32>
    %cst_88 = arith.constant 4.800000e+01 : f32
    %262 = vector.broadcast %cst_88 : f32 to vector<16x1xf32>
    %263 = arith.divf %261, %262 : vector<16x1xf32>
    %264 = vector.broadcast %256 : vector<16x1xf32> to vector<16x48xf32>
    %265 = arith.subf %250, %264 : vector<16x48xf32>
    %cst_89 = arith.constant 9.99999996E-13 : f32
    %266 = vector.broadcast %cst_89 : f32 to vector<16x1xf32>
    %267 = arith.addf %263, %266 : vector<16x1xf32>
    %268 = math.rsqrt %267 : vector<16x1xf32>
    %269 = vector.broadcast %268 : vector<16x1xf32> to vector<16x48xf32>
    %270 = arith.mulf %265, %269 : vector<16x48xf32>
    %271 = vector.broadcast %251 : vector<1x48xf32> to vector<16x48xf32>
    %272 = arith.mulf %270, %271 : vector<16x48xf32>
    %273 = vector.broadcast %252 : vector<1x48xf32> to vector<16x48xf32>
    %274 = arith.addf %272, %273 : vector<16x48xf32>
    %c1_90 = arith.constant 1 : index
    %c0_91 = arith.constant 0 : index
    %c0_92 = arith.constant 0 : index
    %275 = vector.load %arg3[%c1_90, %c0_91, %c0_92] : memref<2x48x1536xf32, #tpu.memory_space<vmem>>, vector<1x48x1536xf32>
    %276 = vector.shape_cast %275 : vector<1x48x1536xf32> to vector<48x1536xf32>
    %c1_93 = arith.constant 1 : index
    %c0_94 = arith.constant 0 : index
    %c0_95 = arith.constant 0 : index
    %277 = vector.load %arg4[%c1_93, %c0_94, %c0_95] : memref<2x512x48xf32, #tpu.memory_space<vmem>>, vector<1x512x48xf32>
    %278 = vector.shape_cast %277 : vector<1x512x48xf32> to vector<512x48xf32>
    %c1_96 = arith.constant 1 : index
    %c0_97 = arith.constant 0 : index
    %c0_98 = arith.constant 0 : index
    %279 = vector.load %arg5[%c1_96, %c0_97, %c0_98] : memref<2x48x96xf32, #tpu.memory_space<vmem>>, vector<1x48x96xf32>
    %280 = vector.shape_cast %279 : vector<1x48x96xf32> to vector<48x96xf32>
    %c1_99 = arith.constant 1 : index
    %c0_100 = arith.constant 0 : index
    %c0_101 = arith.constant 0 : index
    %281 = vector.load %arg6[%c1_99, %c0_100, %c0_101] : memref<2x96x48xf32, #tpu.memory_space<vmem>>, vector<1x96x48xf32>
    %282 = vector.shape_cast %281 : vector<1x96x48xf32> to vector<96x48xf32>
    %cst_102 = arith.constant dense<0.000000e+00> : vector<16x1536xf32>
    %283 = tpu.matmul %274, %276, %cst_102 {dimension_numbers = #tpu.dot_dimension_numbers<[1], [0], [0], [1], [0, 0, 1, 1], [], []>} : vector<16x48xf32>, vector<48x1536xf32>, vector<16x1536xf32> -> vector<16x1536xf32>
    %284 = vector.extract_strided_slice %283 {offsets = [0, 0], sizes = [16, 512], strides = [1, 1]} : vector<16x1536xf32> to vector<16x512xf32>
    %c12 = arith.constant 12 : index
    %c0_103 = arith.constant 0 : index
    %285 = vector.load %arg2[%c12, %c0_103] : memref<23x512xf32, #tpu.memory_space<vmem>>, vector<1x512xf32>
    %286 = vector.broadcast %285 : vector<1x512xf32> to vector<16x512xf32>
    %287 = arith.addf %284, %286 : vector<16x512xf32>
    %288 = vector.extract_strided_slice %283 {offsets = [0, 512], sizes = [16, 512], strides = [1, 1]} : vector<16x1536xf32> to vector<16x512xf32>
    %c13 = arith.constant 13 : index
    %c0_104 = arith.constant 0 : index
    %289 = vector.load %arg2[%c13, %c0_104] : memref<23x512xf32, #tpu.memory_space<vmem>>, vector<1x512xf32>
    %290 = vector.broadcast %289 : vector<1x512xf32> to vector<16x512xf32>
    %291 = arith.addf %288, %290 : vector<16x512xf32>
    %292 = vector.extract_strided_slice %283 {offsets = [0, 1024], sizes = [16, 512], strides = [1, 1]} : vector<16x1536xf32> to vector<16x512xf32>
    %c14 = arith.constant 14 : index
    %c0_105 = arith.constant 0 : index
    %293 = vector.load %arg2[%c14, %c0_105] : memref<23x512xf32, #tpu.memory_space<vmem>>, vector<1x512xf32>
    %294 = vector.broadcast %293 : vector<1x512xf32> to vector<16x512xf32>
    %295 = arith.addf %292, %294 : vector<16x512xf32>
    %296 = vector.extract_strided_slice %287 {offsets = [0, 0], sizes = [8, 128], strides = [1, 1]} : vector<16x512xf32> to vector<8x128xf32>
    %297 = vector.extract_strided_slice %291 {offsets = [0, 0], sizes = [8, 128], strides = [1, 1]} : vector<16x512xf32> to vector<8x128xf32>
    %298 = vector.extract_strided_slice %295 {offsets = [0, 0], sizes = [8, 128], strides = [1, 1]} : vector<16x512xf32> to vector<8x128xf32>
    %cst_106 = arith.constant dense<0.000000e+00> : vector<8x8xf32>
    %299 = tpu.matmul %296, %297, %cst_106 {dimension_numbers = #tpu.dot_dimension_numbers<[1], [1], [0], [0], [0, 0, 1, 0], [], []>} : vector<8x128xf32>, vector<8x128xf32>, vector<8x8xf32> -> vector<8x8xf32>
    %cst_107 = arith.constant 0.288675129 : f32
    %300 = vector.broadcast %cst_107 : f32 to vector<8x8xf32>
    %301 = arith.mulf %299, %300 : vector<8x8xf32>
    %302 = arith.addf %301, %28 : vector<8x8xf32>
    %cst_108 = arith.constant dense<0xFF800000> : vector<8xf32>
    %303 = vector.multi_reduction <maximumf>, %302, %cst_108 [1] : vector<8x8xf32> to vector<8xf32>
    %304 = vector.shape_cast %303 : vector<8xf32> to vector<8x1xf32>
    %305 = vector.broadcast %304 : vector<8x1xf32> to vector<8x8xf32>
    %306 = arith.subf %302, %305 : vector<8x8xf32>
    %307 = math.exp %306 : vector<8x8xf32>
    %cst_109 = arith.constant dense<0.000000e+00> : vector<8xf32>
    %308 = vector.multi_reduction <add>, %307, %cst_109 [1] : vector<8x8xf32> to vector<8xf32>
    %309 = vector.shape_cast %308 : vector<8xf32> to vector<8x1xf32>
    %310 = tpu.reciprocal %309 {approx = true} : vector<8x1xf32> -> vector<8x1xf32>
    %311 = vector.broadcast %310 : vector<8x1xf32> to vector<8x8xf32>
    %312 = arith.mulf %307, %311 : vector<8x8xf32>
    %cst_110 = arith.constant dense<0.000000e+00> : vector<8x128xf32>
    %313 = tpu.matmul %312, %298, %cst_110 {dimension_numbers = #tpu.dot_dimension_numbers<[1], [0], [0], [1], [0, 0, 1, 1], [], []>} : vector<8x8xf32>, vector<8x128xf32>, vector<8x128xf32> -> vector<8x128xf32>
    %314 = vector.extract_strided_slice %287 {offsets = [0, 128], sizes = [8, 128], strides = [1, 1]} : vector<16x512xf32> to vector<8x128xf32>
    %315 = vector.extract_strided_slice %291 {offsets = [0, 128], sizes = [8, 128], strides = [1, 1]} : vector<16x512xf32> to vector<8x128xf32>
    %316 = vector.extract_strided_slice %295 {offsets = [0, 128], sizes = [8, 128], strides = [1, 1]} : vector<16x512xf32> to vector<8x128xf32>
    %cst_111 = arith.constant dense<0.000000e+00> : vector<8x8xf32>
    %317 = tpu.matmul %314, %315, %cst_111 {dimension_numbers = #tpu.dot_dimension_numbers<[1], [1], [0], [0], [0, 0, 1, 0], [], []>} : vector<8x128xf32>, vector<8x128xf32>, vector<8x8xf32> -> vector<8x8xf32>
    %cst_112 = arith.constant 0.288675129 : f32
    %318 = vector.broadcast %cst_112 : f32 to vector<8x8xf32>
    %319 = arith.mulf %317, %318 : vector<8x8xf32>
    %320 = arith.addf %319, %28 : vector<8x8xf32>
    %cst_113 = arith.constant dense<0xFF800000> : vector<8xf32>
    %321 = vector.multi_reduction <maximumf>, %320, %cst_113 [1] : vector<8x8xf32> to vector<8xf32>
    %322 = vector.shape_cast %321 : vector<8xf32> to vector<8x1xf32>
    %323 = vector.broadcast %322 : vector<8x1xf32> to vector<8x8xf32>
    %324 = arith.subf %320, %323 : vector<8x8xf32>
    %325 = math.exp %324 : vector<8x8xf32>
    %cst_114 = arith.constant dense<0.000000e+00> : vector<8xf32>
    %326 = vector.multi_reduction <add>, %325, %cst_114 [1] : vector<8x8xf32> to vector<8xf32>
    %327 = vector.shape_cast %326 : vector<8xf32> to vector<8x1xf32>
    %328 = tpu.reciprocal %327 {approx = true} : vector<8x1xf32> -> vector<8x1xf32>
    %329 = vector.broadcast %328 : vector<8x1xf32> to vector<8x8xf32>
    %330 = arith.mulf %325, %329 : vector<8x8xf32>
    %cst_115 = arith.constant dense<0.000000e+00> : vector<8x128xf32>
    %331 = tpu.matmul %330, %316, %cst_115 {dimension_numbers = #tpu.dot_dimension_numbers<[1], [0], [0], [1], [0, 0, 1, 1], [], []>} : vector<8x8xf32>, vector<8x128xf32>, vector<8x128xf32> -> vector<8x128xf32>
    %332 = vector.extract_strided_slice %287 {offsets = [0, 256], sizes = [8, 128], strides = [1, 1]} : vector<16x512xf32> to vector<8x128xf32>
    %333 = vector.extract_strided_slice %291 {offsets = [0, 256], sizes = [8, 128], strides = [1, 1]} : vector<16x512xf32> to vector<8x128xf32>
    %334 = vector.extract_strided_slice %295 {offsets = [0, 256], sizes = [8, 128], strides = [1, 1]} : vector<16x512xf32> to vector<8x128xf32>
    %cst_116 = arith.constant dense<0.000000e+00> : vector<8x8xf32>
    %335 = tpu.matmul %332, %333, %cst_116 {dimension_numbers = #tpu.dot_dimension_numbers<[1], [1], [0], [0], [0, 0, 1, 0], [], []>} : vector<8x128xf32>, vector<8x128xf32>, vector<8x8xf32> -> vector<8x8xf32>
    %cst_117 = arith.constant 0.288675129 : f32
    %336 = vector.broadcast %cst_117 : f32 to vector<8x8xf32>
    %337 = arith.mulf %335, %336 : vector<8x8xf32>
    %338 = arith.addf %337, %28 : vector<8x8xf32>
    %cst_118 = arith.constant dense<0xFF800000> : vector<8xf32>
    %339 = vector.multi_reduction <maximumf>, %338, %cst_118 [1] : vector<8x8xf32> to vector<8xf32>
    %340 = vector.shape_cast %339 : vector<8xf32> to vector<8x1xf32>
    %341 = vector.broadcast %340 : vector<8x1xf32> to vector<8x8xf32>
    %342 = arith.subf %338, %341 : vector<8x8xf32>
    %343 = math.exp %342 : vector<8x8xf32>
    %cst_119 = arith.constant dense<0.000000e+00> : vector<8xf32>
    %344 = vector.multi_reduction <add>, %343, %cst_119 [1] : vector<8x8xf32> to vector<8xf32>
    %345 = vector.shape_cast %344 : vector<8xf32> to vector<8x1xf32>
    %346 = tpu.reciprocal %345 {approx = true} : vector<8x1xf32> -> vector<8x1xf32>
    %347 = vector.broadcast %346 : vector<8x1xf32> to vector<8x8xf32>
    %348 = arith.mulf %343, %347 : vector<8x8xf32>
    %cst_120 = arith.constant dense<0.000000e+00> : vector<8x128xf32>
    %349 = tpu.matmul %348, %334, %cst_120 {dimension_numbers = #tpu.dot_dimension_numbers<[1], [0], [0], [1], [0, 0, 1, 1], [], []>} : vector<8x8xf32>, vector<8x128xf32>, vector<8x128xf32> -> vector<8x128xf32>
    %350 = vector.extract_strided_slice %287 {offsets = [0, 384], sizes = [8, 128], strides = [1, 1]} : vector<16x512xf32> to vector<8x128xf32>
    %351 = vector.extract_strided_slice %291 {offsets = [0, 384], sizes = [8, 128], strides = [1, 1]} : vector<16x512xf32> to vector<8x128xf32>
    %352 = vector.extract_strided_slice %295 {offsets = [0, 384], sizes = [8, 128], strides = [1, 1]} : vector<16x512xf32> to vector<8x128xf32>
    %cst_121 = arith.constant dense<0.000000e+00> : vector<8x8xf32>
    %353 = tpu.matmul %350, %351, %cst_121 {dimension_numbers = #tpu.dot_dimension_numbers<[1], [1], [0], [0], [0, 0, 1, 0], [], []>} : vector<8x128xf32>, vector<8x128xf32>, vector<8x8xf32> -> vector<8x8xf32>
    %cst_122 = arith.constant 0.288675129 : f32
    %354 = vector.broadcast %cst_122 : f32 to vector<8x8xf32>
    %355 = arith.mulf %353, %354 : vector<8x8xf32>
    %356 = arith.addf %355, %28 : vector<8x8xf32>
    %cst_123 = arith.constant dense<0xFF800000> : vector<8xf32>
    %357 = vector.multi_reduction <maximumf>, %356, %cst_123 [1] : vector<8x8xf32> to vector<8xf32>
    %358 = vector.shape_cast %357 : vector<8xf32> to vector<8x1xf32>
    %359 = vector.broadcast %358 : vector<8x1xf32> to vector<8x8xf32>
    %360 = arith.subf %356, %359 : vector<8x8xf32>
    %361 = math.exp %360 : vector<8x8xf32>
    %cst_124 = arith.constant dense<0.000000e+00> : vector<8xf32>
    %362 = vector.multi_reduction <add>, %361, %cst_124 [1] : vector<8x8xf32> to vector<8xf32>
    %363 = vector.shape_cast %362 : vector<8xf32> to vector<8x1xf32>
    %364 = tpu.reciprocal %363 {approx = true} : vector<8x1xf32> -> vector<8x1xf32>
    %365 = vector.broadcast %364 : vector<8x1xf32> to vector<8x8xf32>
    %366 = arith.mulf %361, %365 : vector<8x8xf32>
    %cst_125 = arith.constant dense<0.000000e+00> : vector<8x128xf32>
    %367 = tpu.matmul %366, %352, %cst_125 {dimension_numbers = #tpu.dot_dimension_numbers<[1], [0], [0], [1], [0, 0, 1, 1], [], []>} : vector<8x8xf32>, vector<8x128xf32>, vector<8x128xf32> -> vector<8x128xf32>
    %368 = tpu.concatenate %313, %331, %349, %367 in 1 : vector<8x128xf32>, vector<8x128xf32>, vector<8x128xf32>, vector<8x128xf32> -> vector<8x512xf32>
    %369 = vector.extract_strided_slice %287 {offsets = [8, 0], sizes = [8, 128], strides = [1, 1]} : vector<16x512xf32> to vector<8x128xf32>
    %370 = vector.extract_strided_slice %291 {offsets = [8, 0], sizes = [8, 128], strides = [1, 1]} : vector<16x512xf32> to vector<8x128xf32>
    %371 = vector.extract_strided_slice %295 {offsets = [8, 0], sizes = [8, 128], strides = [1, 1]} : vector<16x512xf32> to vector<8x128xf32>
    %cst_126 = arith.constant dense<0.000000e+00> : vector<8x8xf32>
    %372 = tpu.matmul %369, %370, %cst_126 {dimension_numbers = #tpu.dot_dimension_numbers<[1], [1], [0], [0], [0, 0, 1, 0], [], []>} : vector<8x128xf32>, vector<8x128xf32>, vector<8x8xf32> -> vector<8x8xf32>
    %cst_127 = arith.constant 0.288675129 : f32
    %373 = vector.broadcast %cst_127 : f32 to vector<8x8xf32>
    %374 = arith.mulf %372, %373 : vector<8x8xf32>
    %375 = arith.addf %374, %31 : vector<8x8xf32>
    %cst_128 = arith.constant dense<0xFF800000> : vector<8xf32>
    %376 = vector.multi_reduction <maximumf>, %375, %cst_128 [1] : vector<8x8xf32> to vector<8xf32>
    %377 = vector.shape_cast %376 : vector<8xf32> to vector<8x1xf32>
    %378 = vector.broadcast %377 : vector<8x1xf32> to vector<8x8xf32>
    %379 = arith.subf %375, %378 : vector<8x8xf32>
    %380 = math.exp %379 : vector<8x8xf32>
    %cst_129 = arith.constant dense<0.000000e+00> : vector<8xf32>
    %381 = vector.multi_reduction <add>, %380, %cst_129 [1] : vector<8x8xf32> to vector<8xf32>
    %382 = vector.shape_cast %381 : vector<8xf32> to vector<8x1xf32>
    %383 = tpu.reciprocal %382 {approx = true} : vector<8x1xf32> -> vector<8x1xf32>
    %384 = vector.broadcast %383 : vector<8x1xf32> to vector<8x8xf32>
    %385 = arith.mulf %380, %384 : vector<8x8xf32>
    %cst_130 = arith.constant dense<0.000000e+00> : vector<8x128xf32>
    %386 = tpu.matmul %385, %371, %cst_130 {dimension_numbers = #tpu.dot_dimension_numbers<[1], [0], [0], [1], [0, 0, 1, 1], [], []>} : vector<8x8xf32>, vector<8x128xf32>, vector<8x128xf32> -> vector<8x128xf32>
    %387 = vector.extract_strided_slice %287 {offsets = [8, 128], sizes = [8, 128], strides = [1, 1]} : vector<16x512xf32> to vector<8x128xf32>
    %388 = vector.extract_strided_slice %291 {offsets = [8, 128], sizes = [8, 128], strides = [1, 1]} : vector<16x512xf32> to vector<8x128xf32>
    %389 = vector.extract_strided_slice %295 {offsets = [8, 128], sizes = [8, 128], strides = [1, 1]} : vector<16x512xf32> to vector<8x128xf32>
    %cst_131 = arith.constant dense<0.000000e+00> : vector<8x8xf32>
    %390 = tpu.matmul %387, %388, %cst_131 {dimension_numbers = #tpu.dot_dimension_numbers<[1], [1], [0], [0], [0, 0, 1, 0], [], []>} : vector<8x128xf32>, vector<8x128xf32>, vector<8x8xf32> -> vector<8x8xf32>
    %cst_132 = arith.constant 0.288675129 : f32
    %391 = vector.broadcast %cst_132 : f32 to vector<8x8xf32>
    %392 = arith.mulf %390, %391 : vector<8x8xf32>
    %393 = arith.addf %392, %31 : vector<8x8xf32>
    %cst_133 = arith.constant dense<0xFF800000> : vector<8xf32>
    %394 = vector.multi_reduction <maximumf>, %393, %cst_133 [1] : vector<8x8xf32> to vector<8xf32>
    %395 = vector.shape_cast %394 : vector<8xf32> to vector<8x1xf32>
    %396 = vector.broadcast %395 : vector<8x1xf32> to vector<8x8xf32>
    %397 = arith.subf %393, %396 : vector<8x8xf32>
    %398 = math.exp %397 : vector<8x8xf32>
    %cst_134 = arith.constant dense<0.000000e+00> : vector<8xf32>
    %399 = vector.multi_reduction <add>, %398, %cst_134 [1] : vector<8x8xf32> to vector<8xf32>
    %400 = vector.shape_cast %399 : vector<8xf32> to vector<8x1xf32>
    %401 = tpu.reciprocal %400 {approx = true} : vector<8x1xf32> -> vector<8x1xf32>
    %402 = vector.broadcast %401 : vector<8x1xf32> to vector<8x8xf32>
    %403 = arith.mulf %398, %402 : vector<8x8xf32>
    %cst_135 = arith.constant dense<0.000000e+00> : vector<8x128xf32>
    %404 = tpu.matmul %403, %389, %cst_135 {dimension_numbers = #tpu.dot_dimension_numbers<[1], [0], [0], [1], [0, 0, 1, 1], [], []>} : vector<8x8xf32>, vector<8x128xf32>, vector<8x128xf32> -> vector<8x128xf32>
    %405 = vector.extract_strided_slice %287 {offsets = [8, 256], sizes = [8, 128], strides = [1, 1]} : vector<16x512xf32> to vector<8x128xf32>
    %406 = vector.extract_strided_slice %291 {offsets = [8, 256], sizes = [8, 128], strides = [1, 1]} : vector<16x512xf32> to vector<8x128xf32>
    %407 = vector.extract_strided_slice %295 {offsets = [8, 256], sizes = [8, 128], strides = [1, 1]} : vector<16x512xf32> to vector<8x128xf32>
    %cst_136 = arith.constant dense<0.000000e+00> : vector<8x8xf32>
    %408 = tpu.matmul %405, %406, %cst_136 {dimension_numbers = #tpu.dot_dimension_numbers<[1], [1], [0], [0], [0, 0, 1, 0], [], []>} : vector<8x128xf32>, vector<8x128xf32>, vector<8x8xf32> -> vector<8x8xf32>
    %cst_137 = arith.constant 0.288675129 : f32
    %409 = vector.broadcast %cst_137 : f32 to vector<8x8xf32>
    %410 = arith.mulf %408, %409 : vector<8x8xf32>
    %411 = arith.addf %410, %31 : vector<8x8xf32>
    %cst_138 = arith.constant dense<0xFF800000> : vector<8xf32>
    %412 = vector.multi_reduction <maximumf>, %411, %cst_138 [1] : vector<8x8xf32> to vector<8xf32>
    %413 = vector.shape_cast %412 : vector<8xf32> to vector<8x1xf32>
    %414 = vector.broadcast %413 : vector<8x1xf32> to vector<8x8xf32>
    %415 = arith.subf %411, %414 : vector<8x8xf32>
    %416 = math.exp %415 : vector<8x8xf32>
    %cst_139 = arith.constant dense<0.000000e+00> : vector<8xf32>
    %417 = vector.multi_reduction <add>, %416, %cst_139 [1] : vector<8x8xf32> to vector<8xf32>
    %418 = vector.shape_cast %417 : vector<8xf32> to vector<8x1xf32>
    %419 = tpu.reciprocal %418 {approx = true} : vector<8x1xf32> -> vector<8x1xf32>
    %420 = vector.broadcast %419 : vector<8x1xf32> to vector<8x8xf32>
    %421 = arith.mulf %416, %420 : vector<8x8xf32>
    %cst_140 = arith.constant dense<0.000000e+00> : vector<8x128xf32>
    %422 = tpu.matmul %421, %407, %cst_140 {dimension_numbers = #tpu.dot_dimension_numbers<[1], [0], [0], [1], [0, 0, 1, 1], [], []>} : vector<8x8xf32>, vector<8x128xf32>, vector<8x128xf32> -> vector<8x128xf32>
    %423 = vector.extract_strided_slice %287 {offsets = [8, 384], sizes = [8, 128], strides = [1, 1]} : vector<16x512xf32> to vector<8x128xf32>
    %424 = vector.extract_strided_slice %291 {offsets = [8, 384], sizes = [8, 128], strides = [1, 1]} : vector<16x512xf32> to vector<8x128xf32>
    %425 = vector.extract_strided_slice %295 {offsets = [8, 384], sizes = [8, 128], strides = [1, 1]} : vector<16x512xf32> to vector<8x128xf32>
    %cst_141 = arith.constant dense<0.000000e+00> : vector<8x8xf32>
    %426 = tpu.matmul %423, %424, %cst_141 {dimension_numbers = #tpu.dot_dimension_numbers<[1], [1], [0], [0], [0, 0, 1, 0], [], []>} : vector<8x128xf32>, vector<8x128xf32>, vector<8x8xf32> -> vector<8x8xf32>
    %cst_142 = arith.constant 0.288675129 : f32
    %427 = vector.broadcast %cst_142 : f32 to vector<8x8xf32>
    %428 = arith.mulf %426, %427 : vector<8x8xf32>
    %429 = arith.addf %428, %31 : vector<8x8xf32>
    %cst_143 = arith.constant dense<0xFF800000> : vector<8xf32>
    %430 = vector.multi_reduction <maximumf>, %429, %cst_143 [1] : vector<8x8xf32> to vector<8xf32>
    %431 = vector.shape_cast %430 : vector<8xf32> to vector<8x1xf32>
    %432 = vector.broadcast %431 : vector<8x1xf32> to vector<8x8xf32>
    %433 = arith.subf %429, %432 : vector<8x8xf32>
    %434 = math.exp %433 : vector<8x8xf32>
    %cst_144 = arith.constant dense<0.000000e+00> : vector<8xf32>
    %435 = vector.multi_reduction <add>, %434, %cst_144 [1] : vector<8x8xf32> to vector<8xf32>
    %436 = vector.shape_cast %435 : vector<8xf32> to vector<8x1xf32>
    %437 = tpu.reciprocal %436 {approx = true} : vector<8x1xf32> -> vector<8x1xf32>
    %438 = vector.broadcast %437 : vector<8x1xf32> to vector<8x8xf32>
    %439 = arith.mulf %434, %438 : vector<8x8xf32>
    %cst_145 = arith.constant dense<0.000000e+00> : vector<8x128xf32>
    %440 = tpu.matmul %439, %425, %cst_145 {dimension_numbers = #tpu.dot_dimension_numbers<[1], [0], [0], [1], [0, 0, 1, 1], [], []>} : vector<8x8xf32>, vector<8x128xf32>, vector<8x128xf32> -> vector<8x128xf32>
    %441 = tpu.concatenate %386, %404, %422, %440 in 1 : vector<8x128xf32>, vector<8x128xf32>, vector<8x128xf32>, vector<8x128xf32> -> vector<8x512xf32>
    %442 = tpu.concatenate %368, %441 in 0 : vector<8x512xf32>, vector<8x512xf32> -> vector<16x512xf32>
    %cst_146 = arith.constant dense<0.000000e+00> : vector<16x48xf32>
    %443 = tpu.matmul %442, %278, %cst_146 {dimension_numbers = #tpu.dot_dimension_numbers<[1], [0], [0], [1], [0, 0, 1, 1], [], []>} : vector<16x512xf32>, vector<512x48xf32>, vector<16x48xf32> -> vector<16x48xf32>
    %c15 = arith.constant 15 : index
    %c0_147 = arith.constant 0 : index
    %444 = vector.load %arg2[%c15, %c0_147] : memref<23x512xf32, #tpu.memory_space<vmem>>, vector<1x48xf32>
    %445 = vector.broadcast %444 : vector<1x48xf32> to vector<16x48xf32>
    %446 = arith.addf %443, %445 : vector<16x48xf32>
    %447 = arith.addf %274, %446 : vector<16x48xf32>
    %c16 = arith.constant 16 : index
    %c0_148 = arith.constant 0 : index
    %448 = vector.load %arg2[%c16, %c0_148] : memref<23x512xf32, #tpu.memory_space<vmem>>, vector<1x48xf32>
    %c17 = arith.constant 17 : index
    %c0_149 = arith.constant 0 : index
    %449 = vector.load %arg2[%c17, %c0_149] : memref<23x512xf32, #tpu.memory_space<vmem>>, vector<1x48xf32>
    %cst_150 = arith.constant dense<0.000000e+00> : vector<16xf32>
    %450 = vector.multi_reduction <add>, %447, %cst_150 [1] : vector<16x48xf32> to vector<16xf32>
    %451 = vector.shape_cast %450 : vector<16xf32> to vector<16x1xf32>
    %cst_151 = arith.constant 4.800000e+01 : f32
    %452 = vector.broadcast %cst_151 : f32 to vector<16x1xf32>
    %453 = arith.divf %451, %452 : vector<16x1xf32>
    %454 = vector.broadcast %453 : vector<16x1xf32> to vector<16x48xf32>
    %455 = arith.subf %447, %454 : vector<16x48xf32>
    %456 = arith.mulf %455, %455 : vector<16x48xf32>
    %cst_152 = arith.constant dense<0.000000e+00> : vector<16xf32>
    %457 = vector.multi_reduction <add>, %456, %cst_152 [1] : vector<16x48xf32> to vector<16xf32>
    %458 = vector.shape_cast %457 : vector<16xf32> to vector<16x1xf32>
    %cst_153 = arith.constant 4.800000e+01 : f32
    %459 = vector.broadcast %cst_153 : f32 to vector<16x1xf32>
    %460 = arith.divf %458, %459 : vector<16x1xf32>
    %461 = vector.broadcast %453 : vector<16x1xf32> to vector<16x48xf32>
    %462 = arith.subf %447, %461 : vector<16x48xf32>
    %cst_154 = arith.constant 9.99999996E-13 : f32
    %463 = vector.broadcast %cst_154 : f32 to vector<16x1xf32>
    %464 = arith.addf %460, %463 : vector<16x1xf32>
    %465 = math.rsqrt %464 : vector<16x1xf32>
    %466 = vector.broadcast %465 : vector<16x1xf32> to vector<16x48xf32>
    %467 = arith.mulf %462, %466 : vector<16x48xf32>
    %468 = vector.broadcast %448 : vector<1x48xf32> to vector<16x48xf32>
    %469 = arith.mulf %467, %468 : vector<16x48xf32>
    %470 = vector.broadcast %449 : vector<1x48xf32> to vector<16x48xf32>
    %471 = arith.addf %469, %470 : vector<16x48xf32>
    %cst_155 = arith.constant dense<0.000000e+00> : vector<16x96xf32>
    %472 = tpu.matmul %471, %280, %cst_155 {dimension_numbers = #tpu.dot_dimension_numbers<[1], [0], [0], [1], [0, 0, 1, 1], [], []>} : vector<16x48xf32>, vector<48x96xf32>, vector<16x96xf32> -> vector<16x96xf32>
    %c18 = arith.constant 18 : index
    %c0_156 = arith.constant 0 : index
    %473 = vector.load %arg2[%c18, %c0_156] : memref<23x512xf32, #tpu.memory_space<vmem>>, vector<1x96xf32>
    %474 = vector.broadcast %473 : vector<1x96xf32> to vector<16x96xf32>
    %475 = arith.addf %472, %474 : vector<16x96xf32>
    %476 = arith.mulf %475, %475 : vector<16x96xf32>
    %477 = arith.mulf %475, %476 : vector<16x96xf32>
    %cst_157 = arith.constant 4.471500e-02 : f32
    %478 = vector.broadcast %cst_157 : f32 to vector<16x96xf32>
    %479 = arith.mulf %478, %477 : vector<16x96xf32>
    %480 = arith.addf %475, %479 : vector<16x96xf32>
    %cst_158 = arith.constant 0.797884583 : f32
    %481 = vector.broadcast %cst_158 : f32 to vector<16x96xf32>
    %482 = arith.mulf %481, %480 : vector<16x96xf32>
    %483 = math.tanh %482 : vector<16x96xf32>
    %cst_159 = arith.constant 1.000000e+00 : f32
    %484 = vector.broadcast %cst_159 : f32 to vector<16x96xf32>
    %485 = arith.addf %484, %483 : vector<16x96xf32>
    %cst_160 = arith.constant 5.000000e-01 : f32
    %486 = vector.broadcast %cst_160 : f32 to vector<16x96xf32>
    %487 = arith.mulf %486, %485 : vector<16x96xf32>
    %488 = arith.mulf %475, %487 : vector<16x96xf32>
    %cst_161 = arith.constant dense<0.000000e+00> : vector<16x48xf32>
    %489 = tpu.matmul %488, %282, %cst_161 {dimension_numbers = #tpu.dot_dimension_numbers<[1], [0], [0], [1], [0, 0, 1, 1], [], []>} : vector<16x96xf32>, vector<96x48xf32>, vector<16x48xf32> -> vector<16x48xf32>
    %c19 = arith.constant 19 : index
    %c0_162 = arith.constant 0 : index
    %490 = vector.load %arg2[%c19, %c0_162] : memref<23x512xf32, #tpu.memory_space<vmem>>, vector<1x48xf32>
    %491 = vector.broadcast %490 : vector<1x48xf32> to vector<16x48xf32>
    %492 = arith.addf %489, %491 : vector<16x48xf32>
    %493 = arith.addf %471, %492 : vector<16x48xf32>
    %c20 = arith.constant 20 : index
    %c0_163 = arith.constant 0 : index
    %494 = vector.load %arg2[%c20, %c0_163] : memref<23x512xf32, #tpu.memory_space<vmem>>, vector<1x48xf32>
    %c21 = arith.constant 21 : index
    %c0_164 = arith.constant 0 : index
    %495 = vector.load %arg2[%c21, %c0_164] : memref<23x512xf32, #tpu.memory_space<vmem>>, vector<1x48xf32>
    %cst_165 = arith.constant dense<0.000000e+00> : vector<16xf32>
    %496 = vector.multi_reduction <add>, %493, %cst_165 [1] : vector<16x48xf32> to vector<16xf32>
    %497 = vector.shape_cast %496 : vector<16xf32> to vector<16x1xf32>
    %cst_166 = arith.constant 4.800000e+01 : f32
    %498 = vector.broadcast %cst_166 : f32 to vector<16x1xf32>
    %499 = arith.divf %497, %498 : vector<16x1xf32>
    %500 = vector.broadcast %499 : vector<16x1xf32> to vector<16x48xf32>
    %501 = arith.subf %493, %500 : vector<16x48xf32>
    %502 = arith.mulf %501, %501 : vector<16x48xf32>
    %cst_167 = arith.constant dense<0.000000e+00> : vector<16xf32>
    %503 = vector.multi_reduction <add>, %502, %cst_167 [1] : vector<16x48xf32> to vector<16xf32>
    %504 = vector.shape_cast %503 : vector<16xf32> to vector<16x1xf32>
    %cst_168 = arith.constant 4.800000e+01 : f32
    %505 = vector.broadcast %cst_168 : f32 to vector<16x1xf32>
    %506 = arith.divf %504, %505 : vector<16x1xf32>
    %507 = vector.broadcast %499 : vector<16x1xf32> to vector<16x48xf32>
    %508 = arith.subf %493, %507 : vector<16x48xf32>
    %cst_169 = arith.constant 9.99999996E-13 : f32
    %509 = vector.broadcast %cst_169 : f32 to vector<16x1xf32>
    %510 = arith.addf %506, %509 : vector<16x1xf32>
    %511 = math.rsqrt %510 : vector<16x1xf32>
    %512 = vector.broadcast %511 : vector<16x1xf32> to vector<16x48xf32>
    %513 = arith.mulf %508, %512 : vector<16x48xf32>
    %514 = vector.broadcast %494 : vector<1x48xf32> to vector<16x48xf32>
    %515 = arith.mulf %513, %514 : vector<16x48xf32>
    %516 = vector.broadcast %495 : vector<1x48xf32> to vector<16x48xf32>
    %517 = arith.addf %515, %516 : vector<16x48xf32>
    %c0_170 = arith.constant 0 : index
    %c0_171 = arith.constant 0 : index
    %518 = vector.load %arg7[%c0_170, %c0_171] : memref<48x128xf32, #tpu.memory_space<vmem>>, vector<48x128xf32>
    %cst_172 = arith.constant dense<0.000000e+00> : vector<16x128xf32>
    %519 = tpu.matmul %517, %518, %cst_172 {dimension_numbers = #tpu.dot_dimension_numbers<[1], [0], [0], [1], [0, 0, 1, 1], [], []>} : vector<16x48xf32>, vector<48x128xf32>, vector<16x128xf32> -> vector<16x128xf32>
    %c22 = arith.constant 22 : index
    %c0_173 = arith.constant 0 : index
    %520 = vector.load %arg2[%c22, %c0_173] : memref<23x512xf32, #tpu.memory_space<vmem>>, vector<1x128xf32>
    %521 = vector.broadcast %520 : vector<1x128xf32> to vector<16x128xf32>
    %522 = arith.addf %519, %521 : vector<16x128xf32>
    %c0_174 = arith.constant 0 : index
    %c0_175 = arith.constant 0 : index
    %523 = vector.load %arg8[%c0_174, %c0_175] : memref<16x128xf32, #tpu.memory_space<vmem>>, vector<16x128xf32>
    tpu.vector_store %arg8[%c0_174, %c0_175], %522 {strides = array<i32>} : memref<16x128xf32, #tpu.memory_space<vmem>>, vector<16x128xf32>,
    return
  }
}

</mosaic_0001>

<llo_original>
// kernel: nutrition_layout_forward.1
$region0: #{nutrition_layout_forward.1}
  #allocation0 [shape = 'u32[]', space=smem, size = 0x4, offset = 0x4, fixed_abs, tag = 'smem constant byte address 0x4 - core index']
  #allocation1 [shape = 'u32[144,128]{1,0:T(1,128)}', space=vmem, size = 0x12000, scoped, tag = 'internal scratch']
  %s0 = inlined_call_operand.vmem [shape: f32[16,48], index: 0, kind: input, shape index: {}]
  %s1 = inlined_call_operand.vmem [shape: f32[2,8], index: 1, kind: input, shape index: {}]
  %s2 = inlined_call_operand.vmem [shape: f32[23,512], index: 2, kind: input, shape index: {}]
  %s3 = inlined_call_operand.vmem [shape: f32[2,48,1536], index: 3, kind: input, shape index: {}]
  %s4 = inlined_call_operand.vmem [shape: f32[2,512,48], index: 4, kind: input, shape index: {}]
  %s5 = inlined_call_operand.vmem [shape: f32[2,48,96], index: 5, kind: input, shape index: {}]
  %s6 = inlined_call_operand.vmem [shape: f32[2,96,48], index: 6, kind: input, shape index: {}]
  %s7 = inlined_call_operand.vmem [shape: f32[48,128], index: 7, kind: input, shape index: {}]
  %s8 = inlined_call_operand.vmem [shape: f32[16,128], index: 8, kind: output, shape index: {}]
  %s9 = sld [smem:[#allocation0]]
  $region42: #{nutrition_layout_forward.1} parent=0
    _
  %s11 = ssub.s32 1, %s9
  %s12 = scalar_select 0, %s11, %s9
  // Predicated region
  $region2: #{nutrition_layout_forward.1} parent=0 // pred_check
    _
  $region3: #{nutrition_layout_forward.1} parent=0 // pred_check_branch
    %14 = sbr.rel (0) target = $region5
  $region4: #{nutrition_layout_forward.1} parent=0 // pred_region
    _
  $region5: #{nutrition_layout_forward.1} parent=0 // pred_fallthru
    _
  // Predicated region
  $region6: #{nutrition_layout_forward.1} parent=0 // pred_check
    _
  $region7: #{nutrition_layout_forward.1} parent=0 // pred_check_branch
    %16 = sbr.rel (0) target = $region9
  $region8: #{nutrition_layout_forward.1} parent=0 // pred_region
    _
  $region9: #{nutrition_layout_forward.1} parent=0 // pred_fallthru
    _
  // Predicated region
  $region10: #{nutrition_layout_forward.1} parent=0 // pred_check
    _
  $region11: #{nutrition_layout_forward.1} parent=0 // pred_check_branch
    %18 = sbr.rel (0) target = $region13
  $region12: #{nutrition_layout_forward.1} parent=0 // pred_region
    _
  $region13: #{nutrition_layout_forward.1} parent=0 // pred_fallthru
    _
  // Predicated region
  $region14: #{nutrition_layout_forward.1} parent=0 // pred_check
    _
  $region15: #{nutrition_layout_forward.1} parent=0 // pred_check_branch
    %20 = sbr.rel (0) target = $region17
  $region16: #{nutrition_layout_forward.1} parent=0 // pred_region
    _
  $region17: #{nutrition_layout_forward.1} parent=0 // pred_fallthru
    _
  // Predicated region
  $region18: #{nutrition_layout_forward.1} parent=0 // pred_check
    _
  $region19: #{nutrition_layout_forward.1} parent=0 // pred_check_branch
    %22 = sbr.rel (0) target = $region21
  $region20: #{nutrition_layout_forward.1} parent=0 // pred_region
    _
  $region21: #{nutrition_layout_forward.1} parent=0 // pred_fallthru
    _
  // Predicated region
  $region22: #{nutrition_layout_forward.1} parent=0 // pred_check
    _
  $region23: #{nutrition_layout_forward.1} parent=0 // pred_check_branch
    %24 = sbr.rel (0) target = $region25
  $region24: #{nutrition_layout_forward.1} parent=0 // pred_region
    _
  $region25: #{nutrition_layout_forward.1} parent=0 // pred_fallthru
    _
  // Predicated region
  $region26: #{nutrition_layout_forward.1} parent=0 // pred_check
    _
  $region27: #{nutrition_layout_forward.1} parent=0 // pred_check_branch
    %26 = sbr.rel (0) target = $region29
  $region28: #{nutrition_layout_forward.1} parent=0 // pred_region
    _
  $region29: #{nutrition_layout_forward.1} parent=0 // pred_fallthru
    _
  // Predicated region
  $region30: #{nutrition_layout_forward.1} parent=0 // pred_check
    _
  $region31: #{nutrition_layout_forward.1} parent=0 // pred_check_branch
    %28 = sbr.rel (0) target = $region33
  $region32: #{nutrition_layout_forward.1} parent=0 // pred_region
    _
  $region33: #{nutrition_layout_forward.1} parent=0 // pred_fallthru
    _
  %v29 = vld [vmem:[%s0] sm:$0xff]
  %v30 = vld [vmem:[%s0 + $0x8] sm:$0xff]
  %v31 = vld [vmem:[%s2] ss:$0 sm:$0xff]
  %v32 = vld [vmem:[%s2 + $0x1] ss:$0 sm:$0xff]
  %vm33 = vcmask 392192
  %v34 = vsel %vm33, %v29, 0.0
  %35 = vadd.xlane.f32.xlu0 %v34
  %v36 = vpop.xlane.xlu0 %35
  %v37 = vsel %vm33, %v30, 0.0
  %38 = vadd.xlane.f32.xlu0 %v37
  %v39 = vpop.xlane.xlu0 %38
  %v40 = vrcp.pop 48.0
  %v41 = vmul.f32 %v36, %v40
  %v42 = vmul.f32 %v39, %v40
  %v43 = vsub.f32 %v29, %v41
  %v44 = vsub.f32 %v30, %v42
  %v45 = vmul.f32 %v43, %v43
  %v46 = vmul.f32 %v44, %v44
  %v47 = vsel %vm33, %v45, 0.0
  %48 = vadd.xlane.f32.xlu0 %v47
  %v49 = vpop.xlane.xlu0 %48
  %v50 = vsel %vm33, %v46, 0.0
  %51 = vadd.xlane.f32.xlu0 %v50
  %v52 = vpop.xlane.xlu0 %51
  %v53 = vmul.f32 %v49, %v40
  %v54 = vmul.f32 %v52, %v40
  %v55 = vadd.f32 %v53, 1e-12
  %v56 = vadd.f32 %v54, 1e-12
  %v57 = vrsqrt.pop %v55
  %v58 = vrsqrt.pop %v56
  %v59 = vmul.f32 %v43, %v57
  %v60 = vmul.f32 %v44, %v58
  %v61 = vmul.f32 %v59, %v31
  %v62 = vmul.f32 %v60, %v31
  %v63 = vadd.f32 %v61, %v32
  %v64 = vadd.f32 %v62, %v32
  %v65 = vld [vmem:[%s1] sm:$0x3]
  %v66 = vlaneseq
  %v67 = vshrl.u32 %v66, 7
  %v68 = vsub.s32 0, %v67
  %v69 = vrot.slane %v65, %v68
  %v70 = vlaneseq
  %v71 = vshrl.u32 %v70, 7
  %v72 = vsub.s32 1, %v71
  %v73 = vrot.slane %v65, %v72
  %v74 = vld [vmem:[%s3] sm:$0xff]
  %v75 = vld [vmem:[%s3 + $0x8] sm:$0xff]
  %v76 = vld [vmem:[%s3 + $0x10] sm:$0xff]
  %v77 = vld [vmem:[%s3 + $0x18] sm:$0xff]
  %v78 = vld [vmem:[%s3 + $0x20] sm:$0xff]
  %v79 = vld [vmem:[%s3 + $0x28] sm:$0xff]
  %v80 = vld [vmem:[%s3 + $0x30] sm:$0xff]
  %v81 = vld [vmem:[%s3 + $0x38] sm:$0xff]
  %v82 = vld [vmem:[%s3 + $0x40] sm:$0xff]
  %v83 = vld [vmem:[%s3 + $0x48] sm:$0xff]
  %v84 = vld [vmem:[%s3 + $0x50] sm:$0xff]
  %v85 = vld [vmem:[%s3 + $0x58] sm:$0xff]
  %v86 = vld [vmem:[%s3 + $0x60] sm:$0xff]
  %v87 = vld [vmem:[%s3 + $0x68] sm:$0xff]
  %v88 = vld [vmem:[%s3 + $0x70] sm:$0xff]
  %v89 = vld [vmem:[%s3 + $0x78] sm:$0xff]
  %v90 = vld [vmem:[%s3 + $0x80] sm:$0xff]
  %v91 = vld [vmem:[%s3 + $0x88] sm:$0xff]
  %v92 = vld [vmem:[%s3 + $0x90] sm:$0xff]
  %v93 = vld [vmem:[%s3 + $0x98] sm:$0xff]
  %v94 = vld [vmem:[%s3 + $0xa0] sm:$0xff]
  %v95 = vld [vmem:[%s3 + $0xa8] sm:$0xff]
  %v96 = vld [vmem:[%s3 + $0xb0] sm:$0xff]
  %v97 = vld [vmem:[%s3 + $0xb8] sm:$0xff]
  %v98 = vld [vmem:[%s3 + $0xc0] sm:$0xff]
  %v99 = vld [vmem:[%s3 + $0xc8] sm:$0xff]
  %v100 = vld [vmem:[%s3 + $0xd0] sm:$0xff]
  %v101 = vld [vmem:[%s3 + $0xd8] sm:$0xff]
  %v102 = vld [vmem:[%s3 + $0xe0] sm:$0xff]
  %v103 = vld [vmem:[%s3 + $0xe8] sm:$0xff]
  %v104 = vld [vmem:[%s3 + $0xf0] sm:$0xff]
  %v105 = vld [vmem:[%s3 + $0xf8] sm:$0xff]
  %v106 = vld [vmem:[%s3 + $0x100] sm:$0xff]
  %v107 = vld [vmem:[%s3 + $0x108] sm:$0xff]
  %v108 = vld [vmem:[%s3 + $0x110] sm:$0xff]
  %v109 = vld [vmem:[%s3 + $0x118] sm:$0xff]
  %v110 = vld [vmem:[%s3 + $0x120] sm:$0xff]
  %v111 = vld [vmem:[%s3 + $0x128] sm:$0xff]
  %v112 = vld [vmem:[%s3 + $0x130] sm:$0xff]
  %v113 = vld [vmem:[%s3 + $0x138] sm:$0xff]
  %v114 = vld [vmem:[%s3 + $0x140] sm:$0xff]
  %v115 = vld [vmem:[%s3 + $0x148] sm:$0xff]
  %v116 = vld [vmem:[%s3 + $0x150] sm:$0xff]
  %v117 = vld [vmem:[%s3 + $0x158] sm:$0xff]
  %v118 = vld [vmem:[%s3 + $0x160] sm:$0xff]
  %v119 = vld [vmem:[%s3 + $0x168] sm:$0xff]
  %v120 = vld [vmem:[%s3 + $0x170] sm:$0xff]
  %v121 = vld [vmem:[%s3 + $0x178] sm:$0xff]
  %v122 = vld [vmem:[%s3 + $0x180] sm:$0xff]
  %v123 = vld [vmem:[%s3 + $0x188] sm:$0xff]
  %v124 = vld [vmem:[%s3 + $0x190] sm:$0xff]
  %v125 = vld [vmem:[%s3 + $0x198] sm:$0xff]
  %v126 = vld [vmem:[%s3 + $0x1a0] sm:$0xff]
  %v127 = vld [vmem:[%s3 + $0x1a8] sm:$0xff]
  %v128 = vld [vmem:[%s3 + $0x1b0] sm:$0xff]
  %v129 = vld [vmem:[%s3 + $0x1b8] sm:$0xff]
  %v130 = vld [vmem:[%s3 + $0x1c0] sm:$0xff]
  %v131 = vld [vmem:[%s3 + $0x1c8] sm:$0xff]
  %v132 = vld [vmem:[%s3 + $0x1d0] sm:$0xff]
  %v133 = vld [vmem:[%s3 + $0x1d8] sm:$0xff]
  %v134 = vld [vmem:[%s3 + $0x1e0] sm:$0xff]
  %v135 = vld [vmem:[%s3 + $0x1e8] sm:$0xff]
  %v136 = vld [vmem:[%s3 + $0x1f0] sm:$0xff]
  %v137 = vld [vmem:[%s3 + $0x1f8] sm:$0xff]
  %v138 = vld [vmem:[%s3 + $0x200] sm:$0xff]
  %v139 = vld [vmem:[%s3 + $0x208] sm:$0xff]
  %v140 = vld [vmem:[%s3 + $0x210] sm:$0xff]
  %v141 = vld [vmem:[%s3 + $0x218] sm:$0xff]
  %v142 = vld [vmem:[%s3 + $0x220] sm:$0xff]
  %v143 = vld [vmem:[%s3 + $0x228] sm:$0xff]
  %v144 = vld [vmem:[%s3 + $0x230] sm:$0xff]
  %v145 = vld [vmem:[%s3 + $0x238] sm:$0xff]
  %v146 = vld [vmem:[%s4] sm:$0xff]
  %v147 = vld [vmem:[%s4 + $0x8] sm:$0xff]
  %v148 = vld [vmem:[%s4 + $0x10] sm:$0xff]
  %v149 = vld [vmem:[%s4 + $0x18] sm:$0xff]
  %v150 = vld [vmem:[%s4 + $0x20] sm:$0xff]
  %v151 = vld [vmem:[%s4 + $0x28] sm:$0xff]
  %v152 = vld [vmem:[%s4 + $0x30] sm:$0xff]
  %v153 = vld [vmem:[%s4 + $0x38] sm:$0xff]
  %v154 = vld [vmem:[%s4 + $0x40] sm:$0xff]
  %v155 = vld [vmem:[%s4 + $0x48] sm:$0xff]
  %v156 = vld [vmem:[%s4 + $0x50] sm:$0xff]
  %v157 = vld [vmem:[%s4 + $0x58] sm:$0xff]
  %v158 = vld [vmem:[%s4 + $0x60] sm:$0xff]
  %v159 = vld [vmem:[%s4 + $0x68] sm:$0xff]
  %v160 = vld [vmem:[%s4 + $0x70] sm:$0xff]
  %v161 = vld [vmem:[%s4 + $0x78] sm:$0xff]
  %v162 = vld [vmem:[%s4 + $0x80] sm:$0xff]
  %v163 = vld [vmem:[%s4 + $0x88] sm:$0xff]
  %v164 = vld [vmem:[%s4 + $0x90] sm:$0xff]
  %v165 = vld [vmem:[%s4 + $0x98] sm:$0xff]
  %v166 = vld [vmem:[%s4 + $0xa0] sm:$0xff]
  %v167 = vld [vmem:[%s4 + $0xa8] sm:$0xff]
  %v168 = vld [vmem:[%s4 + $0xb0] sm:$0xff]
  %v169 = vld [vmem:[%s4 + $0xb8] sm:$0xff]
  %v170 = vld [vmem:[%s4 + $0xc0] sm:$0xff]
  %v171 = vld [vmem:[%s4 + $0xc8] sm:$0xff]
  %v172 = vld [vmem:[%s4 + $0xd0] sm:$0xff]
  %v173 = vld [vmem:[%s4 + $0xd8] sm:$0xff]
  %v174 = vld [vmem:[%s4 + $0xe0] sm:$0xff]
  %v175 = vld [vmem:[%s4 + $0xe8] sm:$0xff]
  %v176 = vld [vmem:[%s4 + $0xf0] sm:$0xff]
  %v177 = vld [vmem:[%s4 + $0xf8] sm:$0xff]
  %v178 = vld [vmem:[%s4 + $0x100] sm:$0xff]
  %v179 = vld [vmem:[%s4 + $0x108] sm:$0xff]
  %v180 = vld [vmem:[%s4 + $0x110] sm:$0xff]
  %v181 = vld [vmem:[%s4 + $0x118] sm:$0xff]
  %v182 = vld [vmem:[%s4 + $0x120] sm:$0xff]
  %v183 = vld [vmem:[%s4 + $0x128] sm:$0xff]
  %v184 = vld [vmem:[%s4 + $0x130] sm:$0xff]
  %v185 = vld [vmem:[%s4 + $0x138] sm:$0xff]
  %v186 = vld [vmem:[%s4 + $0x140] sm:$0xff]
  %v187 = vld [vmem:[%s4 + $0x148] sm:$0xff]
  %v188 = vld [vmem:[%s4 + $0x150] sm:$0xff]
  %v189 = vld [vmem:[%s4 + $0x158] sm:$0xff]
  %v190 = vld [vmem:[%s4 + $0x160] sm:$0xff]
  %v191 = vld [vmem:[%s4 + $0x168] sm:$0xff]
  %v192 = vld [vmem:[%s4 + $0x170] sm:$0xff]
  %v193 = vld [vmem:[%s4 + $0x178] sm:$0xff]
  %v194 = vld [vmem:[%s4 + $0x180] sm:$0xff]
  %v195 = vld [vmem:[%s4 + $0x188] sm:$0xff]
  %v196 = vld [vmem:[%s4 + $0x190] sm:$0xff]
  %v197 = vld [vmem:[%s4 + $0x198] sm:$0xff]
  %v198 = vld [vmem:[%s4 + $0x1a0] sm:$0xff]
  %v199 = vld [vmem:[%s4 + $0x1a8] sm:$0xff]
  %v200 = vld [vmem:[%s4 + $0x1b0] sm:$0xff]
  %v201 = vld [vmem:[%s4 + $0x1b8] sm:$0xff]
  %v202 = vld [vmem:[%s4 + $0x1c0] sm:$0xff]
  %v203 = vld [vmem:[%s4 + $0x1c8] sm:$0xff]
  %v204 = vld [vmem:[%s4 + $0x1d0] sm:$0xff]
  %v205 = vld [vmem:[%s4 + $0x1d8] sm:$0xff]
  %v206 = vld [vmem:[%s4 + $0x1e0] sm:$0xff]
  %v207 = vld [vmem:[%s4 + $0x1e8] sm:$0xff]
  %v208 = vld [vmem:[%s4 + $0x1f0] sm:$0xff]
  %v209 = vld [vmem:[%s4 + $0x1f8] sm:$0xff]
  %v210 = vld [vmem:[%s5] sm:$0xff]
  %v211 = vld [vmem:[%s5 + $0x8] sm:$0xff]
  %v212 = vld [vmem:[%s5 + $0x10] sm:$0xff]
  %v213 = vld [vmem:[%s5 + $0x18] sm:$0xff]
  %v214 = vld [vmem:[%s5 + $0x20] sm:$0xff]
  %v215 = vld [vmem:[%s5 + $0x28] sm:$0xff]
  %v216 = vld [vmem:[%s6] sm:$0xff]
  %v217 = vld [vmem:[%s6 + $0x8] sm:$0xff]
  %v218 = vld [vmem:[%s6 + $0x10] sm:$0xff]
  %v219 = vld [vmem:[%s6 + $0x18] sm:$0xff]
  %v220 = vld [vmem:[%s6 + $0x20] sm:$0xff]
  %v221 = vld [vmem:[%s6 + $0x28] sm:$0xff]
  %v222 = vld [vmem:[%s6 + $0x30] sm:$0xff]
  %v223 = vld [vmem:[%s6 + $0x38] sm:$0xff]
  %v224 = vld [vmem:[%s6 + $0x40] sm:$0xff]
  %v225 = vld [vmem:[%s6 + $0x48] sm:$0xff]
  %v226 = vld [vmem:[%s6 + $0x50] sm:$0xff]
  %v227 = vld [vmem:[%s6 + $0x58] sm:$0xff]
  %v229 = vsel %vm33, %v63, 0
  %v232 = vsel %vm33, %v64, 0
  %234 = vmatprep.subr.mxu0 %v75
  %235 = vmatpush1.msra.mxu0 %v74
  %236 = vmatprep.subr.mxu0 %v87
  %237 = vmatpush1.msra.mxu0 %v86
  %238 = vmatprep.subr.mxu0 %v99
  %239 = vmatpush1.msra.mxu0 %v98
  %240 = vmatprep.subr.mxu0 %v111
  %241 = vmatpush1.msra.mxu0 %v110
  %242 = vmatprep.subr.mxu0 %v123
  %243 = vmatpush1.msra.mxu0 %v122
  %244 = vmatprep.subr.mxu0 %v135
  %245 = vmatpush1.msra.mxu0 %v134
  %246 = vmatprep.subr.mxu0 0.0
  %247 = vmatpush1.msra.mxu0 0.0
  %248 = vmatprep.subr.mxu0 0.0
  %249 = vmatpush1.msra.mxu0 0.0
  %250 = vmatprep.subr.mxu0 0.0
  %251 = vmatpush1.msra.mxu0 0.0
  %252 = vmatprep.subr.mxu0 0.0
  %253 = vmatpush1.msra.mxu0 0.0
  %254 = vmatprep.subr.mxu0 0.0
  %255 = vmatpush1.msra.mxu0 0.0
  %256 = vmatprep.subr.mxu0 0.0
  %257 = vmatpush1.msra.mxu0 0.0
  %258 = vmatprep.subr.mxu0 0.0
  %259 = vmatpush1.msra.mxu0 0.0
  %260 = vmatprep.subr.mxu0 0.0
  %261 = vmatpush1.msra.mxu0 0.0
  %262 = vmatprep.subr.mxu0 0.0
  %263 = vmatpush1.msra.mxu0 0.0
  %264 = vmatprep.subr.mxu0 0.0
  %265 = vmatpush1.msra.mxu0 0.0
  %266 = vmatprep.subr.mxu0 0.0
  %267 = vmatpush1.msra.mxu0 0.0
  %268 = vmatprep.subr.mxu0 0.0
  %269 = vmatpush1.msra.mxu0 0.0
  %270 = vmatprep.subr.mxu0 0.0
  %271 = vmatpush1.msra.mxu0 0.0
  %272 = vmatprep.subr.mxu0 0.0
  %273 = vmatpush1.msra.mxu0 0.0
  %274 = vmatprep.subr.mxu0 0.0
  %275 = vmatpush1.msra.mxu0 0.0
  %276 = vmatprep.subr.mxu0 0.0
  %277 = vmatpush1.msra.mxu0 0.0
  %278 = vmatprep.subr.mxu0 0.0
  %279 = vmatpush1.msra.mxu0 0.0
  %280 = vmatprep.subr.mxu0 0.0
  %281 = vmatpush1.msra.mxu0 0.0
  %282 = vmatprep.subr.mxu0 0.0
  %283 = vmatpush1.msra.mxu0 0.0
  %284 = vmatprep.subr.mxu0 0.0
  %285 = vmatpush1.msra.mxu0 0.0
  %286 = vmatprep.subr.mxu0 0.0
  %287 = vmatpush1.msra.mxu0 0.0
  %288 = vmatprep.subr.mxu0 0.0
  %289 = vmatpush1.msra.mxu0 0.0
  %290 = vmatprep.subr.mxu0 0.0
  %291 = vmatpush1.msra.mxu0 0.0
  %292 = vmatprep.subr.mxu0 0.0
  %293 = vmatpush1.msra.mxu0 0.0
  %294 = vmatprep.subr.mxu0 0.0
  %295 = vmatpush1.msra.mxu0 0.0
  %296 = vmatprep.subr.mxu0 0.0
  %297 = vmatpush1.msra.mxu0 0.0
  %298 = vmatprep.mubr.f32.mxu0 0.0
  %299 = vmatmul.mubr.f32.gmra.mrb[0].mxu0 %v229
  %v300 = vpop.f32.mrb[0].mxu0
  %v301 = vadd.f32 0.0, %v300
  %v302 = vpop.f32.mrb[0].mxu0
  %v303 = vadd.f32 0.0, %v302
  %304 = vmatprep.mubr.f32.mxu0 0.0
  %305 = vmatmul.mubr.f32.gmra.mrb[0].mxu0 %v232
  %v306 = vpop.f32.mrb[0].mxu0
  %v307 = vadd.f32 0.0, %v306
  %v308 = vpop.f32.mrb[0].mxu0
  %v309 = vadd.f32 0.0, %v308
  %310 = vdwg.mxu0
  %311 = vmatprep.subr.mxu0 %v77
  %312 = vmatpush1.msra.mxu0 %v76
  %313 = vmatprep.subr.mxu0 %v89
  %314 = vmatpush1.msra.mxu0 %v88
  %315 = vmatprep.subr.mxu0 %v101
  %316 = vmatpush1.msra.mxu0 %v100
  %317 = vmatprep.subr.mxu0 %v113
  %318 = vmatpush1.msra.mxu0 %v112
  %319 = vmatprep.subr.mxu0 %v125
  %320 = vmatpush1.msra.mxu0 %v124
  %321 = vmatprep.subr.mxu0 %v137
  %322 = vmatpush1.msra.mxu0 %v136
  %323 = vmatprep.subr.mxu0 0.0
  %324 = vmatpush1.msra.mxu0 0.0
  %325 = vmatprep.subr.mxu0 0.0
  %326 = vmatpush1.msra.mxu0 0.0
  %327 = vmatprep.subr.mxu0 0.0
  %328 = vmatpush1.msra.mxu0 0.0
  %329 = vmatprep.subr.mxu0 0.0
  %330 = vmatpush1.msra.mxu0 0.0
  %331 = vmatprep.subr.mxu0 0.0
  %332 = vmatpush1.msra.mxu0 0.0
  %333 = vmatprep.subr.mxu0 0.0
  %334 = vmatpush1.msra.mxu0 0.0
  %335 = vmatprep.subr.mxu0 0.0
  %336 = vmatpush1.msra.mxu0 0.0
  %337 = vmatprep.subr.mxu0 0.0
  %338 = vmatpush1.msra.mxu0 0.0
  %339 = vmatprep.subr.mxu0 0.0
  %340 = vmatpush1.msra.mxu0 0.0
  %341 = vmatprep.subr.mxu0 0.0
  %342 = vmatpush1.msra.mxu0 0.0
  %343 = vmatprep.subr.mxu0 0.0
  %344 = vmatpush1.msra.mxu0 0.0
  %345 = vmatprep.subr.mxu0 0.0
  %346 = vmatpush1.msra.mxu0 0.0
  %347 = vmatprep.subr.mxu0 0.0
  %348 = vmatpush1.msra.mxu0 0.0
  %349 = vmatprep.subr.mxu0 0.0
  %350 = vmatpush1.msra.mxu0 0.0
  %351 = vmatprep.subr.mxu0 0.0
  %352 = vmatpush1.msra.mxu0 0.0
  %353 = vmatprep.subr.mxu0 0.0
  %354 = vmatpush1.msra.mxu0 0.0
  %355 = vmatprep.subr.mxu0 0.0
  %356 = vmatpush1.msra.mxu0 0.0
  %357 = vmatprep.subr.mxu0 0.0
  %358 = vmatpush1.msra.mxu0 0.0
  %359 = vmatprep.subr.mxu0 0.0
  %360 = vmatpush1.msra.mxu0 0.0
  %361 = vmatprep.subr.mxu0 0.0
  %362 = vmatpush1.msra.mxu0 0.0
  %363 = vmatprep.subr.mxu0 0.0
  %364 = vmatpush1.msra.mxu0 0.0
  %365 = vmatprep.subr.mxu0 0.0
  %366 = vmatpush1.msra.mxu0 0.0
  %367 = vmatprep.subr.mxu0 0.0
  %368 = vmatpush1.msra.mxu0 0.0
  %369 = vmatprep.subr.mxu0 0.0
  %370 = vmatpush1.msra.mxu0 0.0
  %371 = vmatprep.subr.mxu0 0.0
  %372 = vmatpush1.msra.mxu0 0.0
  %373 = vmatprep.subr.mxu0 0.0
  %374 = vmatpush1.msra.mxu0 0.0
  %375 = vmatprep.mubr.f32.mxu0 0.0
  %376 = vmatmul.mubr.f32.gmra.mrb[0].mxu0 %v229
  %v377 = vpop.f32.mrb[0].mxu0
  %v378 = vadd.f32 0.0, %v377
  %v379 = vpop.f32.mrb[0].mxu0
  %v380 = vadd.f32 0.0, %v379
  %381 = vmatprep.mubr.f32.mxu0 0.0
  %382 = vmatmul.mubr.f32.gmra.mrb[0].mxu0 %v232
  %v383 = vpop.f32.mrb[0].mxu0
  %v384 = vadd.f32 0.0, %v383
  %v385 = vpop.f32.mrb[0].mxu0
  %v386 = vadd.f32 0.0, %v385
  %387 = vdwg.mxu0
  %388 = vmatprep.subr.mxu0 %v79
  %389 = vmatpush1.msra.mxu0 %v78
  %390 = vmatprep.subr.mxu0 %v91
  %391 = vmatpush1.msra.mxu0 %v90
  %392 = vmatprep.subr.mxu0 %v103
  %393 = vmatpush1.msra.mxu0 %v102
  %394 = vmatprep.subr.mxu0 %v115
  %395 = vmatpush1.msra.mxu0 %v114
  %396 = vmatprep.subr.mxu0 %v127
  %397 = vmatpush1.msra.mxu0 %v126
  %398 = vmatprep.subr.mxu0 %v139
  %399 = vmatpush1.msra.mxu0 %v138
  %400 = vmatprep.subr.mxu0 0.0
  %401 = vmatpush1.msra.mxu0 0.0
  %402 = vmatprep.subr.mxu0 0.0
  %403 = vmatpush1.msra.mxu0 0.0
  %404 = vmatprep.subr.mxu0 0.0
  %405 = vmatpush1.msra.mxu0 0.0
  %406 = vmatprep.subr.mxu0 0.0
  %407 = vmatpush1.msra.mxu0 0.0
  %408 = vmatprep.subr.mxu0 0.0
  %409 = vmatpush1.msra.mxu0 0.0
  %410 = vmatprep.subr.mxu0 0.0
  %411 = vmatpush1.msra.mxu0 0.0
  %412 = vmatprep.subr.mxu0 0.0
  %413 = vmatpush1.msra.mxu0 0.0
  %414 = vmatprep.subr.mxu0 0.0
  %415 = vmatpush1.msra.mxu0 0.0
  %416 = vmatprep.subr.mxu0 0.0
  %417 = vmatpush1.msra.mxu0 0.0
  %418 = vmatprep.subr.mxu0 0.0
  %419 = vmatpush1.msra.mxu0 0.0
  %420 = vmatprep.subr.mxu0 0.0
  %421 = vmatpush1.msra.mxu0 0.0
  %422 = vmatprep.subr.mxu0 0.0
  %423 = vmatpush1.msra.mxu0 0.0
  %424 = vmatprep.subr.mxu0 0.0
  %425 = vmatpush1.msra.mxu0 0.0
  %426 = vmatprep.subr.mxu0 0.0
  %427 = vmatpush1.msra.mxu0 0.0
  %428 = vmatprep.subr.mxu0 0.0
  %429 = vmatpush1.msra.mxu0 0.0
  %430 = vmatprep.subr.mxu0 0.0
  %431 = vmatpush1.msra.mxu0 0.0
  %432 = vmatprep.subr.mxu0 0.0
  %433 = vmatpush1.msra.mxu0 0.0
  %434 = vmatprep.subr.mxu0 0.0
  %435 = vmatpush1.msra.mxu0 0.0
  %436 = vmatprep.subr.mxu0 0.0
  %437 = vmatpush1.msra.mxu0 0.0
  %438 = vmatprep.subr.mxu0 0.0
  %439 = vmatpush1.msra.mxu0 0.0
  %440 = vmatprep.subr.mxu0 0.0
  %441 = vmatpush1.msra.mxu0 0.0
  %442 = vmatprep.subr.mxu0 0.0
  %443 = vmatpush1.msra.mxu0 0.0
  %444 = vmatprep.subr.mxu0 0.0
  %445 = vmatpush1.msra.mxu0 0.0
  %446 = vmatprep.subr.mxu0 0.0
  %447 = vmatpush1.msra.mxu0 0.0
  %448 = vmatprep.subr.mxu0 0.0
  %449 = vmatpush1.msra.mxu0 0.0
  %450 = vmatprep.subr.mxu0 0.0
  %451 = vmatpush1.msra.mxu0 0.0
  %452 = vmatprep.mubr.f32.mxu0 0.0
  %453 = vmatmul.mubr.f32.gmra.mrb[0].mxu0 %v229
  %v454 = vpop.f32.mrb[0].mxu0
  %v455 = vadd.f32 0.0, %v454
  %v456 = vpop.f32.mrb[0].mxu0
  %v457 = vadd.f32 0.0, %v456
  %458 = vmatprep.mubr.f32.mxu0 0.0
  %459 = vmatmul.mubr.f32.gmra.mrb[0].mxu0 %v232
  %v460 = vpop.f32.mrb[0].mxu0
  %v461 = vadd.f32 0.0, %v460
  %v462 = vpop.f32.mrb[0].mxu0
  %v463 = vadd.f32 0.0, %v462
  %464 = vdwg.mxu0
  %465 = vmatprep.subr.mxu0 %v81
  %466 = vmatpush1.msra.mxu0 %v80
  %467 = vmatprep.subr.mxu0 %v93
  %468 = vmatpush1.msra.mxu0 %v92
  %469 = vmatprep.subr.mxu0 %v105
  %470 = vmatpush1.msra.mxu0 %v104
  %471 = vmatprep.subr.mxu0 %v117
  %472 = vmatpush1.msra.mxu0 %v116
  %473 = vmatprep.subr.mxu0 %v129
  %474 = vmatpush1.msra.mxu0 %v128
  %475 = vmatprep.subr.mxu0 %v141
  %476 = vmatpush1.msra.mxu0 %v140
  %477 = vmatprep.subr.mxu0 0.0
  %478 = vmatpush1.msra.mxu0 0.0
  %479 = vmatprep.subr.mxu0 0.0
  %480 = vmatpush1.msra.mxu0 0.0
  %481 = vmatprep.subr.mxu0 0.0
  %482 = vmatpush1.msra.mxu0 0.0
  %483 = vmatprep.subr.mxu0 0.0
  %484 = vmatpush1.msra.mxu0 0.0
  %485 = vmatprep.subr.mxu0 0.0
  %486 = vmatpush1.msra.mxu0 0.0
  %487 = vmatprep.subr.mxu0 0.0
  %488 = vmatpush1.msra.mxu0 0.0
  %489 = vmatprep.subr.mxu0 0.0
  %490 = vmatpush1.msra.mxu0 0.0
  %491 = vmatprep.subr.mxu0 0.0
  %492 = vmatpush1.msra.mxu0 0.0
  %493 = vmatprep.subr.mxu0 0.0
  %494 = vmatpush1.msra.mxu0 0.0
  %495 = vmatprep.subr.mxu0 0.0
  %496 = vmatpush1.msra.mxu0 0.0
  %497 = vmatprep.subr.mxu0 0.0
  %498 = vmatpush1.msra.mxu0 0.0
  %499 = vmatprep.subr.mxu0 0.0
  %500 = vmatpush1.msra.mxu0 0.0
  %501 = vmatprep.subr.mxu0 0.0
  %502 = vmatpush1.msra.mxu0 0.0
  %503 = vmatprep.subr.mxu0 0.0
  %504 = vmatpush1.msra.mxu0 0.0
  %505 = vmatprep.subr.mxu0 0.0
  %506 = vmatpush1.msra.mxu0 0.0
  %507 = vmatprep.subr.mxu0 0.0
  %508 = vmatpush1.msra.mxu0 0.0
  %509 = vmatprep.subr.mxu0 0.0
  %510 = vmatpush1.msra.mxu0 0.0
  %511 = vmatprep.subr.mxu0 0.0
  %512 = vmatpush1.msra.mxu0 0.0
  %513 = vmatprep.subr.mxu0 0.0
  %514 = vmatpush1.msra.mxu0 0.0
  %515 = vmatprep.subr.mxu0 0.0
  %516 = vmatpush1.msra.mxu0 0.0
  %517 = vmatprep.subr.mxu0 0.0
  %518 = vmatpush1.msra.mxu0 0.0
  %519 = vmatprep.subr.mxu0 0.0
  %520 = vmatpush1.msra.mxu0 0.0
  %521 = vmatprep.subr.mxu0 0.0
  %522 = vmatpush1.msra.mxu0 0.0
  %523 = vmatprep.subr.mxu0 0.0
  %524 = vmatpush1.msra.mxu0 0.0
  %525 = vmatprep.subr.mxu0 0.0
  %526 = vmatpush1.msra.mxu0 0.0
  %527 = vmatprep.subr.mxu0 0.0
  %528 = vmatpush1.msra.mxu0 0.0
  %529 = vmatprep.mubr.f32.mxu0 0.0
  %530 = vmatmul.mubr.f32.gmra.mrb[0].mxu0 %v229
  %v531 = vpop.f32.mrb[0].mxu0
  %v532 = vadd.f32 0.0, %v531
  %v533 = vpop.f32.mrb[0].mxu0
  %v534 = vadd.f32 0.0, %v533
  %535 = vmatprep.mubr.f32.mxu0 0.0
  %536 = vmatmul.mubr.f32.gmra.mrb[0].mxu0 %v232
  %v537 = vpop.f32.mrb[0].mxu0
  %v538 = vadd.f32 0.0, %v537
  %v539 = vpop.f32.mrb[0].mxu0
  %v540 = vadd.f32 0.0, %v539
  %541 = vdwg.mxu0
  %542 = vmatprep.subr.mxu0 %v83
  %543 = vmatpush1.msra.mxu0 %v82
  %544 = vmatprep.subr.mxu0 %v95
  %545 = vmatpush1.msra.mxu0 %v94
  %546 = vmatprep.subr.mxu0 %v107
  %547 = vmatpush1.msra.mxu0 %v106
  %548 = vmatprep.subr.mxu0 %v119
  %549 = vmatpush1.msra.mxu0 %v118
  %550 = vmatprep.subr.mxu0 %v131
  %551 = vmatpush1.msra.mxu0 %v130
  %552 = vmatprep.subr.mxu0 %v143
  %553 = vmatpush1.msra.mxu0 %v142
  %554 = vmatprep.subr.mxu0 0.0
  %555 = vmatpush1.msra.mxu0 0.0
  %556 = vmatprep.subr.mxu0 0.0
  %557 = vmatpush1.msra.mxu0 0.0
  %558 = vmatprep.subr.mxu0 0.0
  %559 = vmatpush1.msra.mxu0 0.0
  %560 = vmatprep.subr.mxu0 0.0
  %561 = vmatpush1.msra.mxu0 0.0
  %562 = vmatprep.subr.mxu0 0.0
  %563 = vmatpush1.msra.mxu0 0.0
  %564 = vmatprep.subr.mxu0 0.0
  %565 = vmatpush1.msra.mxu0 0.0
  %566 = vmatprep.subr.mxu0 0.0
  %567 = vmatpush1.msra.mxu0 0.0
  %568 = vmatprep.subr.mxu0 0.0
  %569 = vmatpush1.msra.mxu0 0.0
  %570 = vmatprep.subr.mxu0 0.0
  %571 = vmatpush1.msra.mxu0 0.0
  %572 = vmatprep.subr.mxu0 0.0
  %573 = vmatpush1.msra.mxu0 0.0
  %574 = vmatprep.subr.mxu0 0.0
  %575 = vmatpush1.msra.mxu0 0.0
  %576 = vmatprep.subr.mxu0 0.0
  %577 = vmatpush1.msra.mxu0 0.0
  %578 = vmatprep.subr.mxu0 0.0
  %579 = vmatpush1.msra.mxu0 0.0
  %580 = vmatprep.subr.mxu0 0.0
  %581 = vmatpush1.msra.mxu0 0.0
  %582 = vmatprep.subr.mxu0 0.0
  %583 = vmatpush1.msra.mxu0 0.0
  %584 = vmatprep.subr.mxu0 0.0
  %585 = vmatpush1.msra.mxu0 0.0
  %586 = vmatprep.subr.mxu0 0.0
  %587 = vmatpush1.msra.mxu0 0.0
  %588 = vmatprep.subr.mxu0 0.0
  %589 = vmatpush1.msra.mxu0 0.0
  %590 = vmatprep.subr.mxu0 0.0
  %591 = vmatpush1.msra.mxu0 0.0
  %592 = vmatprep.subr.mxu0 0.0
  %593 = vmatpush1.msra.mxu0 0.0
  %594 = vmatprep.subr.mxu0 0.0
  %595 = vmatpush1.msra.mxu0 0.0
  %596 = vmatprep.subr.mxu0 0.0
  %597 = vmatpush1.msra.mxu0 0.0
  %598 = vmatprep.subr.mxu0 0.0
  %599 = vmatpush1.msra.mxu0 0.0
  %600 = vmatprep.subr.mxu0 0.0
  %601 = vmatpush1.msra.mxu0 0.0
  %602 = vmatprep.subr.mxu0 0.0
  %603 = vmatpush1.msra.mxu0 0.0
  %604 = vmatprep.subr.mxu0 0.0
  %605 = vmatpush1.msra.mxu0 0.0
  %606 = vmatprep.mubr.f32.mxu0 0.0
  %607 = vmatmul.mubr.f32.gmra.mrb[0].mxu0 %v229
  %v608 = vpop.f32.mrb[0].mxu0
  %v609 = vadd.f32 0.0, %v608
  %v610 = vpop.f32.mrb[0].mxu0
  %v611 = vadd.f32 0.0, %v610
  %612 = vmatprep.mubr.f32.mxu0 0.0
  %613 = vmatmul.mubr.f32.gmra.mrb[0].mxu0 %v232
  %v614 = vpop.f32.mrb[0].mxu0
  %v615 = vadd.f32 0.0, %v614
  %v616 = vpop.f32.mrb[0].mxu0
  %v617 = vadd.f32 0.0, %v616
  %618 = vdwg.mxu0
  %619 = vmatprep.subr.mxu0 %v85
  %620 = vmatpush1.msra.mxu0 %v84
  %621 = vmatprep.subr.mxu0 %v97
  %622 = vmatpush1.msra.mxu0 %v96
  %623 = vmatprep.subr.mxu0 %v109
  %624 = vmatpush1.msra.mxu0 %v108
  %625 = vmatprep.subr.mxu0 %v121
  %626 = vmatpush1.msra.mxu0 %v120
  %627 = vmatprep.subr.mxu0 %v133
  %628 = vmatpush1.msra.mxu0 %v132
  %629 = vmatprep.subr.mxu0 %v145
  %630 = vmatpush1.msra.mxu0 %v144
  %631 = vmatprep.subr.mxu0 0.0
  %632 = vmatpush1.msra.mxu0 0.0
  %633 = vmatprep.subr.mxu0 0.0
  %634 = vmatpush1.msra.mxu0 0.0
  %635 = vmatprep.subr.mxu0 0.0
  %636 = vmatpush1.msra.mxu0 0.0
  %637 = vmatprep.subr.mxu0 0.0
  %638 = vmatpush1.msra.mxu0 0.0
  %639 = vmatprep.subr.mxu0 0.0
  %640 = vmatpush1.msra.mxu0 0.0
  %641 = vmatprep.subr.mxu0 0.0
  %642 = vmatpush1.msra.mxu0 0.0
  %643 = vmatprep.subr.mxu0 0.0
  %644 = vmatpush1.msra.mxu0 0.0
  %645 = vmatprep.subr.mxu0 0.0
  %646 = vmatpush1.msra.mxu0 0.0
  %647 = vmatprep.subr.mxu0 0.0
  %648 = vmatpush1.msra.mxu0 0.0
  %649 = vmatprep.subr.mxu0 0.0
  %650 = vmatpush1.msra.mxu0 0.0
  %651 = vmatprep.subr.mxu0 0.0
  %652 = vmatpush1.msra.mxu0 0.0
  %653 = vmatprep.subr.mxu0 0.0
  %654 = vmatpush1.msra.mxu0 0.0
  %655 = vmatprep.subr.mxu0 0.0
  %656 = vmatpush1.msra.mxu0 0.0
  %657 = vmatprep.subr.mxu0 0.0
  %658 = vmatpush1.msra.mxu0 0.0
  %659 = vmatprep.subr.mxu0 0.0
  %660 = vmatpush1.msra.mxu0 0.0
  %661 = vmatprep.subr.mxu0 0.0
  %662 = vmatpush1.msra.mxu0 0.0
  %663 = vmatprep.subr.mxu0 0.0
  %664 = vmatpush1.msra.mxu0 0.0
  %665 = vmatprep.subr.mxu0 0.0
  %666 = vmatpush1.msra.mxu0 0.0
  %667 = vmatprep.subr.mxu0 0.0
  %668 = vmatpush1.msra.mxu0 0.0
  %669 = vmatprep.subr.mxu0 0.0
  %670 = vmatpush1.msra.mxu0 0.0
  %671 = vmatprep.subr.mxu0 0.0
  %672 = vmatpush1.msra.mxu0 0.0
  %673 = vmatprep.subr.mxu0 0.0
  %674 = vmatpush1.msra.mxu0 0.0
  %675 = vmatprep.subr.mxu0 0.0
  %676 = vmatpush1.msra.mxu0 0.0
  %677 = vmatprep.subr.mxu0 0.0
  %678 = vmatpush1.msra.mxu0 0.0
  %679 = vmatprep.subr.mxu0 0.0
  %680 = vmatpush1.msra.mxu0 0.0
  %681 = vmatprep.subr.mxu0 0.0
  %682 = vmatpush1.msra.mxu0 0.0
  %683 = vmatprep.mubr.f32.mxu0 0.0
  %684 = vmatmul.mubr.f32.gmra.mrb[0].mxu0 %v229
  %v685 = vpop.f32.mrb[0].mxu0
  %v686 = vadd.f32 0.0, %v685
  %v687 = vpop.f32.mrb[0].mxu0
  %v688 = vadd.f32 0.0, %v687
  %689 = vmatprep.mubr.f32.mxu0 0.0
  %690 = vmatmul.mubr.f32.gmra.mrb[0].mxu0 %v232
  %v691 = vpop.f32.mrb[0].mxu0
  %v692 = vadd.f32 0.0, %v691
  %v693 = vpop.f32.mrb[0].mxu0
  %v694 = vadd.f32 0.0, %v693
  %695 = vdwg.mxu0
  %s696 = scalar_lea.vmem %s2, 2
  %v697 = vld [vmem:[%s696] ss:$8 sm:$0xf]
  %v699 = vlaneseq
  %v700 = vshrl.u32 %v699, 7
  %v701 = vsub.s32 0, %v700
  %v702 = vrot.slane %v697, %v701
  %v703 = vlaneseq
  %v704 = vshrl.u32 %v703, 7
  %v705 = vsub.s32 1, %v704
  %v706 = vrot.slane %v697, %v705
  %v707 = vlaneseq
  %v708 = vshrl.u32 %v707, 7
  %v709 = vsub.s32 2, %v708
  %v710 = vrot.slane %v697, %v709
  %v711 = vlaneseq
  %v712 = vshrl.u32 %v711, 7
  %v713 = vsub.s32 3, %v712
  %v714 = vrot.slane %v697, %v713
  %v719 = vadd.f32 %v301, %v702
  %v720 = vadd.f32 %v303, %v706
  %v721 = vadd.f32 %v378, %v710
  %v722 = vadd.f32 %v380, %v714
  %v723 = vadd.f32 %v307, %v702
  %v724 = vadd.f32 %v309, %v706
  %v725 = vadd.f32 %v384, %v710
  %v726 = vadd.f32 %v386, %v714
  %s727 = scalar_lea.vmem %s2, 3
  %v728 = vld [vmem:[%s727] ss:$8 sm:$0xf]
  %v730 = vlaneseq
  %v731 = vshrl.u32 %v730, 7
  %v732 = vsub.s32 0, %v731
  %v733 = vrot.slane %v728, %v732
  %v734 = vlaneseq
  %v735 = vshrl.u32 %v734, 7
  %v736 = vsub.s32 1, %v735
  %v737 = vrot.slane %v728, %v736
  %v738 = vlaneseq
  %v739 = vshrl.u32 %v738, 7
  %v740 = vsub.s32 2, %v739
  %v741 = vrot.slane %v728, %v740
  %v742 = vlaneseq
  %v743 = vshrl.u32 %v742, 7
  %v744 = vsub.s32 3, %v743
  %v745 = vrot.slane %v728, %v744
  %v750 = vadd.f32 %v455, %v733
  %v751 = vadd.f32 %v457, %v737
  %v752 = vadd.f32 %v532, %v741
  %v753 = vadd.f32 %v534, %v745
  %v754 = vadd.f32 %v461, %v733
  %v755 = vadd.f32 %v463, %v737
  %v756 = vadd.f32 %v538, %v741
  %v757 = vadd.f32 %v540, %v745
  %s758 = scalar_lea.vmem %s2, 4
  %v759 = vld [vmem:[%s758] ss:$8 sm:$0xf]
  %v761 = vlaneseq
  %v762 = vshrl.u32 %v761, 7
  %v763 = vsub.s32 0, %v762
  %v764 = vrot.slane %v759, %v763
  %v765 = vlaneseq
  %v766 = vshrl.u32 %v765, 7
  %v767 = vsub.s32 1, %v766
  %v768 = vrot.slane %v759, %v767
  %v769 = vlaneseq
  %v770 = vshrl.u32 %v769, 7
  %v771 = vsub.s32 2, %v770
  %v772 = vrot.slane %v759, %v771
  %v773 = vlaneseq
  %v774 = vshrl.u32 %v773, 7
  %v775 = vsub.s32 3, %v774
  %v776 = vrot.slane %v759, %v775
  %v781 = vadd.f32 %v609, %v764
  %v782 = vadd.f32 %v611, %v768
  %v783 = vadd.f32 %v686, %v772
  %v784 = vadd.f32 %v688, %v776
  %v785 = vadd.f32 %v615, %v764
  %v786 = vadd.f32 %v617, %v768
  %v787 = vadd.f32 %v692, %v772
  %v788 = vadd.f32 %v694, %v776
  %789 = vmatprep.subr.mxu0 0.0
  %790 = vmatpush1.xpose.msra.mxu0 %v750
  %791 = vmatprep.subr.mxu0 0.0
  %792 = vmatpush1.xpose.msra.mxu0 0.0
  %793 = vmatprep.subr.mxu0 0.0
  %794 = vmatpush1.xpose.msra.mxu0 0.0
  %795 = vmatprep.subr.mxu0 0.0
  %796 = vmatpush1.xpose.msra.mxu0 0.0
  %797 = vmatprep.subr.mxu0 0.0
  %798 = vmatpush1.xpose.msra.mxu0 0.0
  %799 = vmatprep.subr.mxu0 0.0
  %800 = vmatpush1.xpose.msra.mxu0 0.0
  %801 = vmatprep.subr.mxu0 0.0
  %802 = vmatpush1.xpose.msra.mxu0 0.0
  %803 = vmatprep.subr.mxu0 0.0
  %804 = vmatpush1.xpose.msra.mxu0 0.0
  %805 = vmatprep.subr.mxu0 0.0
  %806 = vmatpush1.xpose.msra.mxu0 0.0
  %807 = vmatprep.subr.mxu0 0.0
  %808 = vmatpush1.xpose.msra.mxu0 0.0
  %809 = vmatprep.subr.mxu0 0.0
  %810 = vmatpush1.xpose.msra.mxu0 0.0
  %811 = vmatprep.subr.mxu0 0.0
  %812 = vmatpush1.xpose.msra.mxu0 0.0
  %813 = vmatprep.subr.mxu0 0.0
  %814 = vmatpush1.xpose.msra.mxu0 0.0
  %815 = vmatprep.subr.mxu0 0.0
  %816 = vmatpush1.xpose.msra.mxu0 0.0
  %817 = vmatprep.subr.mxu0 0.0
  %818 = vmatpush1.xpose.msra.mxu0 0.0
  %819 = vmatprep.subr.mxu0 0.0
  %820 = vmatpush1.xpose.msra.mxu0 0.0
  %821 = vmatprep.subr.mxu0 0.0
  %822 = vmatpush1.xpose.msra.mxu0 0.0
  %823 = vmatprep.subr.mxu0 0.0
  %824 = vmatpush1.xpose.msra.mxu0 0.0
  %825 = vmatprep.subr.mxu0 0.0
  %826 = vmatpush1.xpose.msra.mxu0 0.0
  %827 = vmatprep.subr.mxu0 0.0
  %828 = vmatpush1.xpose.msra.mxu0 0.0
  %829 = vmatprep.subr.mxu0 0.0
  %830 = vmatpush1.xpose.msra.mxu0 0.0
  %831 = vmatprep.subr.mxu0 0.0
  %832 = vmatpush1.xpose.msra.mxu0 0.0
  %833 = vmatprep.subr.mxu0 0.0
  %834 = vmatpush1.xpose.msra.mxu0 0.0
  %835 = vmatprep.subr.mxu0 0.0
  %836 = vmatpush1.xpose.msra.mxu0 0.0
  %837 = vmatprep.subr.mxu0 0.0
  %838 = vmatpush1.xpose.msra.mxu0 0.0
  %839 = vmatprep.subr.mxu0 0.0
  %840 = vmatpush1.xpose.msra.mxu0 0.0
  %841 = vmatprep.subr.mxu0 0.0
  %842 = vmatpush1.xpose.msra.mxu0 0.0
  %843 = vmatprep.subr.mxu0 0.0
  %844 = vmatpush1.xpose.msra.mxu0 0.0
  %845 = vmatprep.subr.mxu0 0.0
  %846 = vmatpush1.xpose.msra.mxu0 0.0
  %847 = vmatprep.subr.mxu0 0.0
  %848 = vmatpush1.xpose.msra.mxu0 0.0
  %849 = vmatprep.subr.mxu0 0.0
  %850 = vmatpush1.xpose.msra.mxu0 0.0
  %851 = vmatprep.subr.mxu0 0.0
  %852 = vmatpush1.xpose.msra.mxu0 0.0
  %853 = vmatprep.mubr.f32.mxu0 0.0
  %854 = vmatmul.mubr.f32.gmra.mrb[0].mxu0 %v719
  %v855 = vpop.f32.mrb[0].mxu0
  %v856 = vadd.f32 0.0, %v855
  %v857 = vpop.f32.mrb[0].mxu0
  %858 = vdwg.mxu0
  %v859 = vmul.f32 %v856, 0.28867513
  %v860 = vadd.f32 %v859, %v69
  %vm861 = vcmask 64512
  %v862 = vsel %vm861, %v860, -inf
  %863 = vmax.xlane.f32.xlu0 %v862
  %v864 = vpop.xlane.xlu0 %863
  %v865 = vsub.f32 %v860, %v864
  %v866 = vmul.f32 %v865, 1.442695
  %v867 = vpow.pop %v866
  %v868 = vsel %vm861, %v867, 0.0
  %869 = vadd.xlane.f32.xlu0 %v868
  %v870 = vpop.xlane.xlu0 %869
  %v871 = vrcp.pop %v870
  %v872 = vmul.f32 %v867, %v871
  %v874 = vsel %vm861, %v872, 0
  %876 = vmatprep.subr.mxu0 0.0
  %877 = vmatpush1.msra.mxu0 %v781
  %878 = vmatprep.subr.mxu0 0.0
  %879 = vmatpush1.msra.mxu0 0.0
  %880 = vmatprep.subr.mxu0 0.0
  %881 = vmatpush1.msra.mxu0 0.0
  %882 = vmatprep.subr.mxu0 0.0
  %883 = vmatpush1.msra.mxu0 0.0
  %884 = vmatprep.subr.mxu0 0.0
  %885 = vmatpush1.msra.mxu0 0.0
  %886 = vmatprep.subr.mxu0 0.0
  %887 = vmatpush1.msra.mxu0 0.0
  %888 = vmatprep.subr.mxu0 0.0
  %889 = vmatpush1.msra.mxu0 0.0
  %890 = vmatprep.subr.mxu0 0.0
  %891 = vmatpush1.msra.mxu0 0.0
  %892 = vmatprep.subr.mxu0 0.0
  %893 = vmatpush1.msra.mxu0 0.0
  %894 = vmatprep.subr.mxu0 0.0
  %895 = vmatpush1.msra.mxu0 0.0
  %896 = vmatprep.subr.mxu0 0.0
  %897 = vmatpush1.msra.mxu0 0.0
  %898 = vmatprep.subr.mxu0 0.0
  %899 = vmatpush1.msra.mxu0 0.0
  %900 = vmatprep.subr.mxu0 0.0
  %901 = vmatpush1.msra.mxu0 0.0
  %902 = vmatprep.subr.mxu0 0.0
  %903 = vmatpush1.msra.mxu0 0.0
  %904 = vmatprep.subr.mxu0 0.0
  %905 = vmatpush1.msra.mxu0 0.0
  %906 = vmatprep.subr.mxu0 0.0
  %907 = vmatpush1.msra.mxu0 0.0
  %908 = vmatprep.subr.mxu0 0.0
  %909 = vmatpush1.msra.mxu0 0.0
  %910 = vmatprep.subr.mxu0 0.0
  %911 = vmatpush1.msra.mxu0 0.0
  %912 = vmatprep.subr.mxu0 0.0
  %913 = vmatpush1.msra.mxu0 0.0
  %914 = vmatprep.subr.mxu0 0.0
  %915 = vmatpush1.msra.mxu0 0.0
  %916 = vmatprep.subr.mxu0 0.0
  %917 = vmatpush1.msra.mxu0 0.0
  %918 = vmatprep.subr.mxu0 0.0
  %919 = vmatpush1.msra.mxu0 0.0
  %920 = vmatprep.subr.mxu0 0.0
  %921 = vmatpush1.msra.mxu0 0.0
  %922 = vmatprep.subr.mxu0 0.0
  %923 = vmatpush1.msra.mxu0 0.0
  %924 = vmatprep.subr.mxu0 0.0
  %925 = vmatpush1.msra.mxu0 0.0
  %926 = vmatprep.subr.mxu0 0.0
  %927 = vmatpush1.msra.mxu0 0.0
  %928 = vmatprep.subr.mxu0 0.0
  %929 = vmatpush1.msra.mxu0 0.0
  %930 = vmatprep.subr.mxu0 0.0
  %931 = vmatpush1.msra.mxu0 0.0
  %932 = vmatprep.subr.mxu0 0.0
  %933 = vmatpush1.msra.mxu0 0.0
  %934 = vmatprep.subr.mxu0 0.0
  %935 = vmatpush1.msra.mxu0 0.0
  %936 = vmatprep.subr.mxu0 0.0
  %937 = vmatpush1.msra.mxu0 0.0
  %938 = vmatprep.subr.mxu0 0.0
  %939 = vmatpush1.msra.mxu0 0.0
  %940 = vmatprep.mubr.f32.mxu0 0.0
  %941 = vmatmul.mubr.f32.gmra.mrb[0].mxu0 %v874
  %v942 = vpop.f32.mrb[0].mxu0
  %v943 = vadd.f32 0.0, %v942
  %v944 = vpop.f32.mrb[0].mxu0
  %945 = vdwg.mxu0
  %946 = vmatprep.subr.mxu0 0.0
  %947 = vmatpush1.xpose.msra.mxu0 %v751
  %948 = vmatprep.subr.mxu0 0.0
  %949 = vmatpush1.xpose.msra.mxu0 0.0
  %950 = vmatprep.subr.mxu0 0.0
  %951 = vmatpush1.xpose.msra.mxu0 0.0
  %952 = vmatprep.subr.mxu0 0.0
  %953 = vmatpush1.xpose.msra.mxu0 0.0
  %954 = vmatprep.subr.mxu0 0.0
  %955 = vmatpush1.xpose.msra.mxu0 0.0
  %956 = vmatprep.subr.mxu0 0.0
  %957 = vmatpush1.xpose.msra.mxu0 0.0
  %958 = vmatprep.subr.mxu0 0.0
  %959 = vmatpush1.xpose.msra.mxu0 0.0
  %960 = vmatprep.subr.mxu0 0.0
  %961 = vmatpush1.xpose.msra.mxu0 0.0
  %962 = vmatprep.subr.mxu0 0.0
  %963 = vmatpush1.xpose.msra.mxu0 0.0
  %964 = vmatprep.subr.mxu0 0.0
  %965 = vmatpush1.xpose.msra.mxu0 0.0
  %966 = vmatprep.subr.mxu0 0.0
  %967 = vmatpush1.xpose.msra.mxu0 0.0
  %968 = vmatprep.subr.mxu0 0.0
  %969 = vmatpush1.xpose.msra.mxu0 0.0
  %970 = vmatprep.subr.mxu0 0.0
  %971 = vmatpush1.xpose.msra.mxu0 0.0
  %972 = vmatprep.subr.mxu0 0.0
  %973 = vmatpush1.xpose.msra.mxu0 0.0
  %974 = vmatprep.subr.mxu0 0.0
  %975 = vmatpush1.xpose.msra.mxu0 0.0
  %976 = vmatprep.subr.mxu0 0.0
  %977 = vmatpush1.xpose.msra.mxu0 0.0
  %978 = vmatprep.subr.mxu0 0.0
  %979 = vmatpush1.xpose.msra.mxu0 0.0
  %980 = vmatprep.subr.mxu0 0.0
  %981 = vmatpush1.xpose.msra.mxu0 0.0
  %982 = vmatprep.subr.mxu0 0.0
  %983 = vmatpush1.xpose.msra.mxu0 0.0
  %984 = vmatprep.subr.mxu0 0.0
  %985 = vmatpush1.xpose.msra.mxu0 0.0
  %986 = vmatprep.subr.mxu0 0.0
  %987 = vmatpush1.xpose.msra.mxu0 0.0
  %988 = vmatprep.subr.mxu0 0.0
  %989 = vmatpush1.xpose.msra.mxu0 0.0
  %990 = vmatprep.subr.mxu0 0.0
  %991 = vmatpush1.xpose.msra.mxu0 0.0
  %992 = vmatprep.subr.mxu0 0.0
  %993 = vmatpush1.xpose.msra.mxu0 0.0
  %994 = vmatprep.subr.mxu0 0.0
  %995 = vmatpush1.xpose.msra.mxu0 0.0
  %996 = vmatprep.subr.mxu0 0.0
  %997 = vmatpush1.xpose.msra.mxu0 0.0
  %998 = vmatprep.subr.mxu0 0.0
  %999 = vmatpush1.xpose.msra.mxu0 0.0
  %1000 = vmatprep.subr.mxu0 0.0
  %1001 = vmatpush1.xpose.msra.mxu0 0.0
  %1002 = vmatprep.subr.mxu0 0.0
  %1003 = vmatpush1.xpose.msra.mxu0 0.0
  %1004 = vmatprep.subr.mxu0 0.0
  %1005 = vmatpush1.xpose.msra.mxu0 0.0
  %1006 = vmatprep.subr.mxu0 0.0
  %1007 = vmatpush1.xpose.msra.mxu0 0.0
  %1008 = vmatprep.subr.mxu0 0.0
  %1009 = vmatpush1.xpose.msra.mxu0 0.0
  %1010 = vmatprep.mubr.f32.mxu0 0.0
  %1011 = vmatmul.mubr.f32.gmra.mrb[0].mxu0 %v720
  %v1012 = vpop.f32.mrb[0].mxu0
  %v1013 = vadd.f32 0.0, %v1012
  %v1014 = vpop.f32.mrb[0].mxu0
  %1015 = vdwg.mxu0
  %v1016 = vmul.f32 %v1013, 0.28867513
  %v1017 = vadd.f32 %v1016, %v69
  %v1018 = vsel %vm861, %v1017, -inf
  %1019 = vmax.xlane.f32.xlu0 %v1018
  %v1020 = vpop.xlane.xlu0 %1019
  %v1021 = vsub.f32 %v1017, %v1020
  %v1022 = vmul.f32 %v1021, 1.442695
  %v1023 = vpow.pop %v1022
  %v1024 = vsel %vm861, %v1023, 0.0
  %1025 = vadd.xlane.f32.xlu0 %v1024
  %v1026 = vpop.xlane.xlu0 %1025
  %v1027 = vrcp.pop %v1026
  %v1028 = vmul.f32 %v1023, %v1027
  %v1030 = vsel %vm861, %v1028, 0
  %1032 = vmatprep.subr.mxu0 0.0
  %1033 = vmatpush1.msra.mxu0 %v782
  %1034 = vmatprep.subr.mxu0 0.0
  %1035 = vmatpush1.msra.mxu0 0.0
  %1036 = vmatprep.subr.mxu0 0.0
  %1037 = vmatpush1.msra.mxu0 0.0
  %1038 = vmatprep.subr.mxu0 0.0
  %1039 = vmatpush1.msra.mxu0 0.0
  %1040 = vmatprep.subr.mxu0 0.0
  %1041 = vmatpush1.msra.mxu0 0.0
  %1042 = vmatprep.subr.mxu0 0.0
  %1043 = vmatpush1.msra.mxu0 0.0
  %1044 = vmatprep.subr.mxu0 0.0
  %1045 = vmatpush1.msra.mxu0 0.0
  %1046 = vmatprep.subr.mxu0 0.0
  %1047 = vmatpush1.msra.mxu0 0.0
  %1048 = vmatprep.subr.mxu0 0.0
  %1049 = vmatpush1.msra.mxu0 0.0
  %1050 = vmatprep.subr.mxu0 0.0
  %1051 = vmatpush1.msra.mxu0 0.0
  %1052 = vmatprep.subr.mxu0 0.0
  %1053 = vmatpush1.msra.mxu0 0.0
  %1054 = vmatprep.subr.mxu0 0.0
  %1055 = vmatpush1.msra.mxu0 0.0
  %1056 = vmatprep.subr.mxu0 0.0
  %1057 = vmatpush1.msra.mxu0 0.0
  %1058 = vmatprep.subr.mxu0 0.0
  %1059 = vmatpush1.msra.mxu0 0.0
  %1060 = vmatprep.subr.mxu0 0.0
  %1061 = vmatpush1.msra.mxu0 0.0
  %1062 = vmatprep.subr.mxu0 0.0
  %1063 = vmatpush1.msra.mxu0 0.0
  %1064 = vmatprep.subr.mxu0 0.0
  %1065 = vmatpush1.msra.mxu0 0.0
  %1066 = vmatprep.subr.mxu0 0.0
  %1067 = vmatpush1.msra.mxu0 0.0
  %1068 = vmatprep.subr.mxu0 0.0
  %1069 = vmatpush1.msra.mxu0 0.0
  %1070 = vmatprep.subr.mxu0 0.0
  %1071 = vmatpush1.msra.mxu0 0.0
  %1072 = vmatprep.subr.mxu0 0.0
  %1073 = vmatpush1.msra.mxu0 0.0
  %1074 = vmatprep.subr.mxu0 0.0
  %1075 = vmatpush1.msra.mxu0 0.0
  %1076 = vmatprep.subr.mxu0 0.0
  %1077 = vmatpush1.msra.mxu0 0.0
  %1078 = vmatprep.subr.mxu0 0.0
  %1079 = vmatpush1.msra.mxu0 0.0
  %1080 = vmatprep.subr.mxu0 0.0
  %1081 = vmatpush1.msra.mxu0 0.0
  %1082 = vmatprep.subr.mxu0 0.0
  %1083 = vmatpush1.msra.mxu0 0.0
  %1084 = vmatprep.subr.mxu0 0.0
  %1085 = vmatpush1.msra.mxu0 0.0
  %1086 = vmatprep.subr.mxu0 0.0
  %1087 = vmatpush1.msra.mxu0 0.0
  %1088 = vmatprep.subr.mxu0 0.0
  %1089 = vmatpush1.msra.mxu0 0.0
  %1090 = vmatprep.subr.mxu0 0.0
  %1091 = vmatpush1.msra.mxu0 0.0
  %1092 = vmatprep.subr.mxu0 0.0
  %1093 = vmatpush1.msra.mxu0 0.0
  %1094 = vmatprep.subr.mxu0 0.0
  %1095 = vmatpush1.msra.mxu0 0.0
  %1096 = vmatprep.mubr.f32.mxu0 0.0
  %1097 = vmatmul.mubr.f32.gmra.mrb[0].mxu0 %v1030
  %v1098 = vpop.f32.mrb[0].mxu0
  %v1099 = vadd.f32 0.0, %v1098
  %v1100 = vpop.f32.mrb[0].mxu0
  %1101 = vdwg.mxu0
  %1102 = vmatprep.subr.mxu0 0.0
  %1103 = vmatpush1.xpose.msra.mxu0 %v752
  %1104 = vmatprep.subr.mxu0 0.0
  %1105 = vmatpush1.xpose.msra.mxu0 0.0
  %1106 = vmatprep.subr.mxu0 0.0
  %1107 = vmatpush1.xpose.msra.mxu0 0.0
  %1108 = vmatprep.subr.mxu0 0.0
  %1109 = vmatpush1.xpose.msra.mxu0 0.0
  %1110 = vmatprep.subr.mxu0 0.0
  %1111 = vmatpush1.xpose.msra.mxu0 0.0
  %1112 = vmatprep.subr.mxu0 0.0
  %1113 = vmatpush1.xpose.msra.mxu0 0.0
  %1114 = vmatprep.subr.mxu0 0.0
  %1115 = vmatpush1.xpose.msra.mxu0 0.0
  %1116 = vmatprep.subr.mxu0 0.0
  %1117 = vmatpush1.xpose.msra.mxu0 0.0
  %1118 = vmatprep.subr.mxu0 0.0
  %1119 = vmatpush1.xpose.msra.mxu0 0.0
  %1120 = vmatprep.subr.mxu0 0.0
  %1121 = vmatpush1.xpose.msra.mxu0 0.0
  %1122 = vmatprep.subr.mxu0 0.0
  %1123 = vmatpush1.xpose.msra.mxu0 0.0
  %1124 = vmatprep.subr.mxu0 0.0
  %1125 = vmatpush1.xpose.msra.mxu0 0.0
  %1126 = vmatprep.subr.mxu0 0.0
  %1127 = vmatpush1.xpose.msra.mxu0 0.0
  %1128 = vmatprep.subr.mxu0 0.0
  %1129 = vmatpush1.xpose.msra.mxu0 0.0
  %1130 = vmatprep.subr.mxu0 0.0
  %1131 = vmatpush1.xpose.msra.mxu0 0.0
  %1132 = vmatprep.subr.mxu0 0.0
  %1133 = vmatpush1.xpose.msra.mxu0 0.0
  %1134 = vmatprep.subr.mxu0 0.0
  %1135 = vmatpush1.xpose.msra.mxu0 0.0
  %1136 = vmatprep.subr.mxu0 0.0
  %1137 = vmatpush1.xpose.msra.mxu0 0.0
  %1138 = vmatprep.subr.mxu0 0.0
  %1139 = vmatpush1.xpose.msra.mxu0 0.0
  %1140 = vmatprep.subr.mxu0 0.0
  %1141 = vmatpush1.xpose.msra.mxu0 0.0
  %1142 = vmatprep.subr.mxu0 0.0
  %1143 = vmatpush1.xpose.msra.mxu0 0.0
  %1144 = vmatprep.subr.mxu0 0.0
  %1145 = vmatpush1.xpose.msra.mxu0 0.0
  %1146 = vmatprep.subr.mxu0 0.0
  %1147 = vmatpush1.xpose.msra.mxu0 0.0
  %1148 = vmatprep.subr.mxu0 0.0
  %1149 = vmatpush1.xpose.msra.mxu0 0.0
  %1150 = vmatprep.subr.mxu0 0.0
  %1151 = vmatpush1.xpose.msra.mxu0 0.0
  %1152 = vmatprep.subr.mxu0 0.0
  %1153 = vmatpush1.xpose.msra.mxu0 0.0
  %1154 = vmatprep.subr.mxu0 0.0
  %1155 = vmatpush1.xpose.msra.mxu0 0.0
  %1156 = vmatprep.subr.mxu0 0.0
  %1157 = vmatpush1.xpose.msra.mxu0 0.0
  %1158 = vmatprep.subr.mxu0 0.0
  %1159 = vmatpush1.xpose.msra.mxu0 0.0
  %1160 = vmatprep.subr.mxu0 0.0
  %1161 = vmatpush1.xpose.msra.mxu0 0.0
  %1162 = vmatprep.subr.mxu0 0.0
  %1163 = vmatpush1.xpose.msra.mxu0 0.0
  %1164 = vmatprep.subr.mxu0 0.0
  %1165 = vmatpush1.xpose.msra.mxu0 0.0
  %1166 = vmatprep.mubr.f32.mxu0 0.0
  %1167 = vmatmul.mubr.f32.gmra.mrb[0].mxu0 %v721
  %v1168 = vpop.f32.mrb[0].mxu0
  %v1169 = vadd.f32 0.0, %v1168
  %v1170 = vpop.f32.mrb[0].mxu0
  %1171 = vdwg.mxu0
  %v1172 = vmul.f32 %v1169, 0.28867513
  %v1173 = vadd.f32 %v1172, %v69
  %v1174 = vsel %vm861, %v1173, -inf
  %1175 = vmax.xlane.f32.xlu0 %v1174
  %v1176 = vpop.xlane.xlu0 %1175
  %v1177 = vsub.f32 %v1173, %v1176
  %v1178 = vmul.f32 %v1177, 1.442695
  %v1179 = vpow.pop %v1178
  %v1180 = vsel %vm861, %v1179, 0.0
  %1181 = vadd.xlane.f32.xlu0 %v1180
  %v1182 = vpop.xlane.xlu0 %1181
  %v1183 = vrcp.pop %v1182
  %v1184 = vmul.f32 %v1179, %v1183
  %v1186 = vsel %vm861, %v1184, 0
  %1188 = vmatprep.subr.mxu0 0.0
  %1189 = vmatpush1.msra.mxu0 %v783
  %1190 = vmatprep.subr.mxu0 0.0
  %1191 = vmatpush1.msra.mxu0 0.0
  %1192 = vmatprep.subr.mxu0 0.0
  %1193 = vmatpush1.msra.mxu0 0.0
  %1194 = vmatprep.subr.mxu0 0.0
  %1195 = vmatpush1.msra.mxu0 0.0
  %1196 = vmatprep.subr.mxu0 0.0
  %1197 = vmatpush1.msra.mxu0 0.0
  %1198 = vmatprep.subr.mxu0 0.0
  %1199 = vmatpush1.msra.mxu0 0.0
  %1200 = vmatprep.subr.mxu0 0.0
  %1201 = vmatpush1.msra.mxu0 0.0
  %1202 = vmatprep.subr.mxu0 0.0
  %1203 = vmatpush1.msra.mxu0 0.0
  %1204 = vmatprep.subr.mxu0 0.0
  %1205 = vmatpush1.msra.mxu0 0.0
  %1206 = vmatprep.subr.mxu0 0.0
  %1207 = vmatpush1.msra.mxu0 0.0
  %1208 = vmatprep.subr.mxu0 0.0
  %1209 = vmatpush1.msra.mxu0 0.0
  %1210 = vmatprep.subr.mxu0 0.0
  %1211 = vmatpush1.msra.mxu0 0.0
  %1212 = vmatprep.subr.mxu0 0.0
  %1213 = vmatpush1.msra.mxu0 0.0
  %1214 = vmatprep.subr.mxu0 0.0
  %1215 = vmatpush1.msra.mxu0 0.0
  %1216 = vmatprep.subr.mxu0 0.0
  %1217 = vmatpush1.msra.mxu0 0.0
  %1218 = vmatprep.subr.mxu0 0.0
  %1219 = vmatpush1.msra.mxu0 0.0
  %1220 = vmatprep.subr.mxu0 0.0
  %1221 = vmatpush1.msra.mxu0 0.0
  %1222 = vmatprep.subr.mxu0 0.0
  %1223 = vmatpush1.msra.mxu0 0.0
  %1224 = vmatprep.subr.mxu0 0.0
  %1225 = vmatpush1.msra.mxu0 0.0
  %1226 = vmatprep.subr.mxu0 0.0
  %1227 = vmatpush1.msra.mxu0 0.0
  %1228 = vmatprep.subr.mxu0 0.0
  %1229 = vmatpush1.msra.mxu0 0.0
  %1230 = vmatprep.subr.mxu0 0.0
  %1231 = vmatpush1.msra.mxu0 0.0
  %1232 = vmatprep.subr.mxu0 0.0
  %1233 = vmatpush1.msra.mxu0 0.0
  %1234 = vmatprep.subr.mxu0 0.0
  %1235 = vmatpush1.msra.mxu0 0.0
  %1236 = vmatprep.subr.mxu0 0.0
  %1237 = vmatpush1.msra.mxu0 0.0
  %1238 = vmatprep.subr.mxu0 0.0
  %1239 = vmatpush1.msra.mxu0 0.0
  %1240 = vmatprep.subr.mxu0 0.0
  %1241 = vmatpush1.msra.mxu0 0.0
  %1242 = vmatprep.subr.mxu0 0.0
  %1243 = vmatpush1.msra.mxu0 0.0
  %1244 = vmatprep.subr.mxu0 0.0
  %1245 = vmatpush1.msra.mxu0 0.0
  %1246 = vmatprep.subr.mxu0 0.0
  %1247 = vmatpush1.msra.mxu0 0.0
  %1248 = vmatprep.subr.mxu0 0.0
  %1249 = vmatpush1.msra.mxu0 0.0
  %1250 = vmatprep.subr.mxu0 0.0
  %1251 = vmatpush1.msra.mxu0 0.0
  %1252 = vmatprep.mubr.f32.mxu0 0.0
  %1253 = vmatmul.mubr.f32.gmra.mrb[0].mxu0 %v1186
  %v1254 = vpop.f32.mrb[0].mxu0
  %v1255 = vadd.f32 0.0, %v1254
  %v1256 = vpop.f32.mrb[0].mxu0
  %1257 = vdwg.mxu0
  %1258 = vmatprep.subr.mxu0 0.0
  %1259 = vmatpush1.xpose.msra.mxu0 %v753
  %1260 = vmatprep.subr.mxu0 0.0
  %1261 = vmatpush1.xpose.msra.mxu0 0.0
  %1262 = vmatprep.subr.mxu0 0.0
  %1263 = vmatpush1.xpose.msra.mxu0 0.0
  %1264 = vmatprep.subr.mxu0 0.0
  %1265 = vmatpush1.xpose.msra.mxu0 0.0
  %1266 = vmatprep.subr.mxu0 0.0
  %1267 = vmatpush1.xpose.msra.mxu0 0.0
  %1268 = vmatprep.subr.mxu0 0.0
  %1269 = vmatpush1.xpose.msra.mxu0 0.0
  %1270 = vmatprep.subr.mxu0 0.0
  %1271 = vmatpush1.xpose.msra.mxu0 0.0
  %1272 = vmatprep.subr.mxu0 0.0
  %1273 = vmatpush1.xpose.msra.mxu0 0.0
  %1274 = vmatprep.subr.mxu0 0.0
  %1275 = vmatpush1.xpose.msra.mxu0 0.0
  %1276 = vmatprep.subr.mxu0 0.0
  %1277 = vmatpush1.xpose.msra.mxu0 0.0
  %1278 = vmatprep.subr.mxu0 0.0
  %1279 = vmatpush1.xpose.msra.mxu0 0.0
  %1280 = vmatprep.subr.mxu0 0.0
  %1281 = vmatpush1.xpose.msra.mxu0 0.0
  %1282 = vmatprep.subr.mxu0 0.0
  %1283 = vmatpush1.xpose.msra.mxu0 0.0
  %1284 = vmatprep.subr.mxu0 0.0
  %1285 = vmatpush1.xpose.msra.mxu0 0.0
  %1286 = vmatprep.subr.mxu0 0.0
  %1287 = vmatpush1.xpose.msra.mxu0 0.0
  %1288 = vmatprep.subr.mxu0 0.0
  %1289 = vmatpush1.xpose.msra.mxu0 0.0
  %1290 = vmatprep.subr.mxu0 0.0
  %1291 = vmatpush1.xpose.msra.mxu0 0.0
  %1292 = vmatprep.subr.mxu0 0.0
  %1293 = vmatpush1.xpose.msra.mxu0 0.0
  %1294 = vmatprep.subr.mxu0 0.0
  %1295 = vmatpush1.xpose.msra.mxu0 0.0
  %1296 = vmatprep.subr.mxu0 0.0
  %1297 = vmatpush1.xpose.msra.mxu0 0.0
  %1298 = vmatprep.subr.mxu0 0.0
  %1299 = vmatpush1.xpose.msra.mxu0 0.0
  %1300 = vmatprep.subr.mxu0 0.0
  %1301 = vmatpush1.xpose.msra.mxu0 0.0
  %1302 = vmatprep.subr.mxu0 0.0
  %1303 = vmatpush1.xpose.msra.mxu0 0.0
  %1304 = vmatprep.subr.mxu0 0.0
  %1305 = vmatpush1.xpose.msra.mxu0 0.0
  %1306 = vmatprep.subr.mxu0 0.0
  %1307 = vmatpush1.xpose.msra.mxu0 0.0
  %1308 = vmatprep.subr.mxu0 0.0
  %1309 = vmatpush1.xpose.msra.mxu0 0.0
  %1310 = vmatprep.subr.mxu0 0.0
  %1311 = vmatpush1.xpose.msra.mxu0 0.0
  %1312 = vmatprep.subr.mxu0 0.0
  %1313 = vmatpush1.xpose.msra.mxu0 0.0
  %1314 = vmatprep.subr.mxu0 0.0
  %1315 = vmatpush1.xpose.msra.mxu0 0.0
  %1316 = vmatprep.subr.mxu0 0.0
  %1317 = vmatpush1.xpose.msra.mxu0 0.0
  %1318 = vmatprep.subr.mxu0 0.0
  %1319 = vmatpush1.xpose.msra.mxu0 0.0
  %1320 = vmatprep.subr.mxu0 0.0
  %1321 = vmatpush1.xpose.msra.mxu0 0.0
  %1322 = vmatprep.mubr.f32.mxu0 0.0
  %1323 = vmatmul.mubr.f32.gmra.mrb[0].mxu0 %v722
  %v1324 = vpop.f32.mrb[0].mxu0
  %v1325 = vadd.f32 0.0, %v1324
  %v1326 = vpop.f32.mrb[0].mxu0
  %1327 = vdwg.mxu0
  %v1328 = vmul.f32 %v1325, 0.28867513
  %v1329 = vadd.f32 %v1328, %v69
  %v1330 = vsel %vm861, %v1329, -inf
  %1331 = vmax.xlane.f32.xlu0 %v1330
  %v1332 = vpop.xlane.xlu0 %1331
  %v1333 = vsub.f32 %v1329, %v1332
  %v1334 = vmul.f32 %v1333, 1.442695
  %v1335 = vpow.pop %v1334
  %v1336 = vsel %vm861, %v1335, 0.0
  %1337 = vadd.xlane.f32.xlu0 %v1336
  %v1338 = vpop.xlane.xlu0 %1337
  %v1339 = vrcp.pop %v1338
  %v1340 = vmul.f32 %v1335, %v1339
  %v1342 = vsel %vm861, %v1340, 0
  %1344 = vmatprep.subr.mxu0 0.0
  %1345 = vmatpush1.msra.mxu0 %v784
  %1346 = vmatprep.subr.mxu0 0.0
  %1347 = vmatpush1.msra.mxu0 0.0
  %1348 = vmatprep.subr.mxu0 0.0
  %1349 = vmatpush1.msra.mxu0 0.0
  %1350 = vmatprep.subr.mxu0 0.0
  %1351 = vmatpush1.msra.mxu0 0.0
  %1352 = vmatprep.subr.mxu0 0.0
  %1353 = vmatpush1.msra.mxu0 0.0
  %1354 = vmatprep.subr.mxu0 0.0
  %1355 = vmatpush1.msra.mxu0 0.0
  %1356 = vmatprep.subr.mxu0 0.0
  %1357 = vmatpush1.msra.mxu0 0.0
  %1358 = vmatprep.subr.mxu0 0.0
  %1359 = vmatpush1.msra.mxu0 0.0
  %1360 = vmatprep.subr.mxu0 0.0
  %1361 = vmatpush1.msra.mxu0 0.0
  %1362 = vmatprep.subr.mxu0 0.0
  %1363 = vmatpush1.msra.mxu0 0.0
  %1364 = vmatprep.subr.mxu0 0.0
  %1365 = vmatpush1.msra.mxu0 0.0
  %1366 = vmatprep.subr.mxu0 0.0
  %1367 = vmatpush1.msra.mxu0 0.0
  %1368 = vmatprep.subr.mxu0 0.0
  %1369 = vmatpush1.msra.mxu0 0.0
  %1370 = vmatprep.subr.mxu0 0.0
  %1371 = vmatpush1.msra.mxu0 0.0
  %1372 = vmatprep.subr.mxu0 0.0
  %1373 = vmatpush1.msra.mxu0 0.0
  %1374 = vmatprep.subr.mxu0 0.0
  %1375 = vmatpush1.msra.mxu0 0.0
  %1376 = vmatprep.subr.mxu0 0.0
  %1377 = vmatpush1.msra.mxu0 0.0
  %1378 = vmatprep.subr.mxu0 0.0
  %1379 = vmatpush1.msra.mxu0 0.0
  %1380 = vmatprep.subr.mxu0 0.0
  %1381 = vmatpush1.msra.mxu0 0.0
  %1382 = vmatprep.subr.mxu0 0.0
  %1383 = vmatpush1.msra.mxu0 0.0
  %1384 = vmatprep.subr.mxu0 0.0
  %1385 = vmatpush1.msra.mxu0 0.0
  %1386 = vmatprep.subr.mxu0 0.0
  %1387 = vmatpush1.msra.mxu0 0.0
  %1388 = vmatprep.subr.mxu0 0.0
  %1389 = vmatpush1.msra.mxu0 0.0
  %1390 = vmatprep.subr.mxu0 0.0
  %1391 = vmatpush1.msra.mxu0 0.0
  %1392 = vmatprep.subr.mxu0 0.0
  %1393 = vmatpush1.msra.mxu0 0.0
  %1394 = vmatprep.subr.mxu0 0.0
  %1395 = vmatpush1.msra.mxu0 0.0
  %1396 = vmatprep.subr.mxu0 0.0
  %1397 = vmatpush1.msra.mxu0 0.0
  %1398 = vmatprep.subr.mxu0 0.0
  %1399 = vmatpush1.msra.mxu0 0.0
  %1400 = vmatprep.subr.mxu0 0.0
  %1401 = vmatpush1.msra.mxu0 0.0
  %1402 = vmatprep.subr.mxu0 0.0
  %1403 = vmatpush1.msra.mxu0 0.0
  %1404 = vmatprep.subr.mxu0 0.0
  %1405 = vmatpush1.msra.mxu0 0.0
  %1406 = vmatprep.subr.mxu0 0.0
  %1407 = vmatpush1.msra.mxu0 0.0
  %1408 = vmatprep.mubr.f32.mxu0 0.0
  %1409 = vmatmul.mubr.f32.gmra.mrb[0].mxu0 %v1342
  %v1410 = vpop.f32.mrb[0].mxu0
  %v1411 = vadd.f32 0.0, %v1410
  %v1412 = vpop.f32.mrb[0].mxu0
  %1413 = vdwg.mxu0
  %1414 = vmatprep.subr.mxu0 0.0
  %1415 = vmatpush1.xpose.msra.mxu0 %v754
  %1416 = vmatprep.subr.mxu0 0.0
  %1417 = vmatpush1.xpose.msra.mxu0 0.0
  %1418 = vmatprep.subr.mxu0 0.0
  %1419 = vmatpush1.xpose.msra.mxu0 0.0
  %1420 = vmatprep.subr.mxu0 0.0
  %1421 = vmatpush1.xpose.msra.mxu0 0.0
  %1422 = vmatprep.subr.mxu0 0.0
  %1423 = vmatpush1.xpose.msra.mxu0 0.0
  %1424 = vmatprep.subr.mxu0 0.0
  %1425 = vmatpush1.xpose.msra.mxu0 0.0
  %1426 = vmatprep.subr.mxu0 0.0
  %1427 = vmatpush1.xpose.msra.mxu0 0.0
  %1428 = vmatprep.subr.mxu0 0.0
  %1429 = vmatpush1.xpose.msra.mxu0 0.0
  %1430 = vmatprep.subr.mxu0 0.0
  %1431 = vmatpush1.xpose.msra.mxu0 0.0
  %1432 = vmatprep.subr.mxu0 0.0
  %1433 = vmatpush1.xpose.msra.mxu0 0.0
  %1434 = vmatprep.subr.mxu0 0.0
  %1435 = vmatpush1.xpose.msra.mxu0 0.0
  %1436 = vmatprep.subr.mxu0 0.0
  %1437 = vmatpush1.xpose.msra.mxu0 0.0
  %1438 = vmatprep.subr.mxu0 0.0
  %1439 = vmatpush1.xpose.msra.mxu0 0.0
  %1440 = vmatprep.subr.mxu0 0.0
  %1441 = vmatpush1.xpose.msra.mxu0 0.0
  %1442 = vmatprep.subr.mxu0 0.0
  %1443 = vmatpush1.xpose.msra.mxu0 0.0
  %1444 = vmatprep.subr.mxu0 0.0
  %1445 = vmatpush1.xpose.msra.mxu0 0.0
  %1446 = vmatprep.subr.mxu0 0.0
  %1447 = vmatpush1.xpose.msra.mxu0 0.0
  %1448 = vmatprep.subr.mxu0 0.0
  %1449 = vmatpush1.xpose.msra.mxu0 0.0
  %1450 = vmatprep.subr.mxu0 0.0
  %1451 = vmatpush1.xpose.msra.mxu0 0.0
  %1452 = vmatprep.subr.mxu0 0.0
  %1453 = vmatpush1.xpose.msra.mxu0 0.0
  %1454 = vmatprep.subr.mxu0 0.0
  %1455 = vmatpush1.xpose.msra.mxu0 0.0
  %1456 = vmatprep.subr.mxu0 0.0
  %1457 = vmatpush1.xpose.msra.mxu0 0.0
  %1458 = vmatprep.subr.mxu0 0.0
  %1459 = vmatpush1.xpose.msra.mxu0 0.0
  %1460 = vmatprep.subr.mxu0 0.0
  %1461 = vmatpush1.xpose.msra.mxu0 0.0
  %1462 = vmatprep.subr.mxu0 0.0
  %1463 = vmatpush1.xpose.msra.mxu0 0.0
  %1464 = vmatprep.subr.mxu0 0.0
  %1465 = vmatpush1.xpose.msra.mxu0 0.0
  %1466 = vmatprep.subr.mxu0 0.0
  %1467 = vmatpush1.xpose.msra.mxu0 0.0
  %1468 = vmatprep.subr.mxu0 0.0
  %1469 = vmatpush1.xpose.msra.mxu0 0.0
  %1470 = vmatprep.subr.mxu0 0.0
  %1471 = vmatpush1.xpose.msra.mxu0 0.0
  %1472 = vmatprep.subr.mxu0 0.0
  %1473 = vmatpush1.xpose.msra.mxu0 0.0
  %1474 = vmatprep.subr.mxu0 0.0
  %1475 = vmatpush1.xpose.msra.mxu0 0.0
  %1476 = vmatprep.subr.mxu0 0.0
  %1477 = vmatpush1.xpose.msra.mxu0 0.0
  %1478 = vmatprep.mubr.f32.mxu0 0.0
  %1479 = vmatmul.mubr.f32.gmra.mrb[0].mxu0 %v723
  %v1480 = vpop.f32.mrb[0].mxu0
  %v1481 = vadd.f32 0.0, %v1480
  %v1482 = vpop.f32.mrb[0].mxu0
  %1483 = vdwg.mxu0
  %v1484 = vmul.f32 %v1481, 0.28867513
  %v1485 = vadd.f32 %v1484, %v73
  %v1486 = vsel %vm861, %v1485, -inf
  %1487 = vmax.xlane.f32.xlu0 %v1486
  %v1488 = vpop.xlane.xlu0 %1487
  %v1489 = vsub.f32 %v1485, %v1488
  %v1490 = vmul.f32 %v1489, 1.442695
  %v1491 = vpow.pop %v1490
  %v1492 = vsel %vm861, %v1491, 0.0
  %1493 = vadd.xlane.f32.xlu0 %v1492
  %v1494 = vpop.xlane.xlu0 %1493
  %v1495 = vrcp.pop %v1494
  %v1496 = vmul.f32 %v1491, %v1495
  %v1498 = vsel %vm861, %v1496, 0
  %1500 = vmatprep.subr.mxu0 0.0
  %1501 = vmatpush1.msra.mxu0 %v785
  %1502 = vmatprep.subr.mxu0 0.0
  %1503 = vmatpush1.msra.mxu0 0.0
  %1504 = vmatprep.subr.mxu0 0.0
  %1505 = vmatpush1.msra.mxu0 0.0
  %1506 = vmatprep.subr.mxu0 0.0
  %1507 = vmatpush1.msra.mxu0 0.0
  %1508 = vmatprep.subr.mxu0 0.0
  %1509 = vmatpush1.msra.mxu0 0.0
  %1510 = vmatprep.subr.mxu0 0.0
  %1511 = vmatpush1.msra.mxu0 0.0
  %1512 = vmatprep.subr.mxu0 0.0
  %1513 = vmatpush1.msra.mxu0 0.0
  %1514 = vmatprep.subr.mxu0 0.0
  %1515 = vmatpush1.msra.mxu0 0.0
  %1516 = vmatprep.subr.mxu0 0.0
  %1517 = vmatpush1.msra.mxu0 0.0
  %1518 = vmatprep.subr.mxu0 0.0
  %1519 = vmatpush1.msra.mxu0 0.0
  %1520 = vmatprep.subr.mxu0 0.0
  %1521 = vmatpush1.msra.mxu0 0.0
  %1522 = vmatprep.subr.mxu0 0.0
  %1523 = vmatpush1.msra.mxu0 0.0
  %1524 = vmatprep.subr.mxu0 0.0
  %1525 = vmatpush1.msra.mxu0 0.0
  %1526 = vmatprep.subr.mxu0 0.0
  %1527 = vmatpush1.msra.mxu0 0.0
  %1528 = vmatprep.subr.mxu0 0.0
  %1529 = vmatpush1.msra.mxu0 0.0
  %1530 = vmatprep.subr.mxu0 0.0
  %1531 = vmatpush1.msra.mxu0 0.0
  %1532 = vmatprep.subr.mxu0 0.0
  %1533 = vmatpush1.msra.mxu0 0.0
  %1534 = vmatprep.subr.mxu0 0.0
  %1535 = vmatpush1.msra.mxu0 0.0
  %1536 = vmatprep.subr.mxu0 0.0
  %1537 = vmatpush1.msra.mxu0 0.0
  %1538 = vmatprep.subr.mxu0 0.0
  %1539 = vmatpush1.msra.mxu0 0.0
  %1540 = vmatprep.subr.mxu0 0.0
  %1541 = vmatpush1.msra.mxu0 0.0
  %1542 = vmatprep.subr.mxu0 0.0
  %1543 = vmatpush1.msra.mxu0 0.0
  %1544 = vmatprep.subr.mxu0 0.0
  %1545 = vmatpush1.msra.mxu0 0.0
  %1546 = vmatprep.subr.mxu0 0.0
  %1547 = vmatpush1.msra.mxu0 0.0
  %1548 = vmatprep.subr.mxu0 0.0
  %1549 = vmatpush1.msra.mxu0 0.0
  %1550 = vmatprep.subr.mxu0 0.0
  %1551 = vmatpush1.msra.mxu0 0.0
  %1552 = vmatprep.subr.mxu0 0.0
  %1553 = vmatpush1.msra.mxu0 0.0
  %1554 = vmatprep.subr.mxu0 0.0
  %1555 = vmatpush1.msra.mxu0 0.0
  %1556 = vmatprep.subr.mxu0 0.0
  %1557 = vmatpush1.msra.mxu0 0.0
  %1558 = vmatprep.subr.mxu0 0.0
  %1559 = vmatpush1.msra.mxu0 0.0
  %1560 = vmatprep.subr.mxu0 0.0
  %1561 = vmatpush1.msra.mxu0 0.0
  %1562 = vmatprep.subr.mxu0 0.0
  %1563 = vmatpush1.msra.mxu0 0.0
  %1564 = vmatprep.mubr.f32.mxu0 0.0
  %1565 = vmatmul.mubr.f32.gmra.mrb[0].mxu0 %v1498
  %v1566 = vpop.f32.mrb[0].mxu0
  %v1567 = vadd.f32 0.0, %v1566
  %v1568 = vpop.f32.mrb[0].mxu0
  %1569 = vdwg.mxu0
  %1570 = vmatprep.subr.mxu0 0.0
  %1571 = vmatpush1.xpose.msra.mxu0 %v755
  %1572 = vmatprep.subr.mxu0 0.0
  %1573 = vmatpush1.xpose.msra.mxu0 0.0
  %1574 = vmatprep.subr.mxu0 0.0
  %1575 = vmatpush1.xpose.msra.mxu0 0.0
  %1576 = vmatprep.subr.mxu0 0.0
  %1577 = vmatpush1.xpose.msra.mxu0 0.0
  %1578 = vmatprep.subr.mxu0 0.0
  %1579 = vmatpush1.xpose.msra.mxu0 0.0
  %1580 = vmatprep.subr.mxu0 0.0
  %1581 = vmatpush1.xpose.msra.mxu0 0.0
  %1582 = vmatprep.subr.mxu0 0.0
  %1583 = vmatpush1.xpose.msra.mxu0 0.0
  %1584 = vmatprep.subr.mxu0 0.0
  %1585 = vmatpush1.xpose.msra.mxu0 0.0
  %1586 = vmatprep.subr.mxu0 0.0
  %1587 = vmatpush1.xpose.msra.mxu0 0.0
  %1588 = vmatprep.subr.mxu0 0.0
  %1589 = vmatpush1.xpose.msra.mxu0 0.0
  %1590 = vmatprep.subr.mxu0 0.0
  %1591 = vmatpush1.xpose.msra.mxu0 0.0
  %1592 = vmatprep.subr.mxu0 0.0
  %1593 = vmatpush1.xpose.msra.mxu0 0.0
  %1594 = vmatprep.subr.mxu0 0.0
  %1595 = vmatpush1.xpose.msra.mxu0 0.0
  %1596 = vmatprep.subr.mxu0 0.0
  %1597 = vmatpush1.xpose.msra.mxu0 0.0
  %1598 = vmatprep.subr.mxu0 0.0
  %1599 = vmatpush1.xpose.msra.mxu0 0.0
  %1600 = vmatprep.subr.mxu0 0.0
  %1601 = vmatpush1.xpose.msra.mxu0 0.0
  %1602 = vmatprep.subr.mxu0 0.0
  %1603 = vmatpush1.xpose.msra.mxu0 0.0
  %1604 = vmatprep.subr.mxu0 0.0
  %1605 = vmatpush1.xpose.msra.mxu0 0.0
  %1606 = vmatprep.subr.mxu0 0.0
  %1607 = vmatpush1.xpose.msra.mxu0 0.0
  %1608 = vmatprep.subr.mxu0 0.0
  %1609 = vmatpush1.xpose.msra.mxu0 0.0
  %1610 = vmatprep.subr.mxu0 0.0
  %1611 = vmatpush1.xpose.msra.mxu0 0.0
  %1612 = vmatprep.subr.mxu0 0.0
  %1613 = vmatpush1.xpose.msra.mxu0 0.0
  %1614 = vmatprep.subr.mxu0 0.0
  %1615 = vmatpush1.xpose.msra.mxu0 0.0
  %1616 = vmatprep.subr.mxu0 0.0
  %1617 = vmatpush1.xpose.msra.mxu0 0.0
  %1618 = vmatprep.subr.mxu0 0.0
  %1619 = vmatpush1.xpose.msra.mxu0 0.0
  %1620 = vmatprep.subr.mxu0 0.0
  %1621 = vmatpush1.xpose.msra.mxu0 0.0
  %1622 = vmatprep.subr.mxu0 0.0
  %1623 = vmatpush1.xpose.msra.mxu0 0.0
  %1624 = vmatprep.subr.mxu0 0.0
  %1625 = vmatpush1.xpose.msra.mxu0 0.0
  %1626 = vmatprep.subr.mxu0 0.0
  %1627 = vmatpush1.xpose.msra.mxu0 0.0
  %1628 = vmatprep.subr.mxu0 0.0
  %1629 = vmatpush1.xpose.msra.mxu0 0.0
  %1630 = vmatprep.subr.mxu0 0.0
  %1631 = vmatpush1.xpose.msra.mxu0 0.0
  %1632 = vmatprep.subr.mxu0 0.0
  %1633 = vmatpush1.xpose.msra.mxu0 0.0
  %1634 = vmatprep.mubr.f32.mxu0 0.0
  %1635 = vmatmul.mubr.f32.gmra.mrb[0].mxu0 %v724
  %v1636 = vpop.f32.mrb[0].mxu0
  %v1637 = vadd.f32 0.0, %v1636
  %v1638 = vpop.f32.mrb[0].mxu0
  %1639 = vdwg.mxu0
  %v1640 = vmul.f32 %v1637, 0.28867513
  %v1641 = vadd.f32 %v1640, %v73
  %v1642 = vsel %vm861, %v1641, -inf
  %1643 = vmax.xlane.f32.xlu0 %v1642
  %v1644 = vpop.xlane.xlu0 %1643
  %v1645 = vsub.f32 %v1641, %v1644
  %v1646 = vmul.f32 %v1645, 1.442695
  %v1647 = vpow.pop %v1646
  %v1648 = vsel %vm861, %v1647, 0.0
  %1649 = vadd.xlane.f32.xlu0 %v1648
  %v1650 = vpop.xlane.xlu0 %1649
  %v1651 = vrcp.pop %v1650
  %v1652 = vmul.f32 %v1647, %v1651
  %v1654 = vsel %vm861, %v1652, 0
  %1656 = vmatprep.subr.mxu0 0.0
  %1657 = vmatpush1.msra.mxu0 %v786
  %1658 = vmatprep.subr.mxu0 0.0
  %1659 = vmatpush1.msra.mxu0 0.0
  %1660 = vmatprep.subr.mxu0 0.0
  %1661 = vmatpush1.msra.mxu0 0.0
  %1662 = vmatprep.subr.mxu0 0.0
  %1663 = vmatpush1.msra.mxu0 0.0
  %1664 = vmatprep.subr.mxu0 0.0
  %1665 = vmatpush1.msra.mxu0 0.0
  %1666 = vmatprep.subr.mxu0 0.0
  %1667 = vmatpush1.msra.mxu0 0.0
  %1668 = vmatprep.subr.mxu0 0.0
  %1669 = vmatpush1.msra.mxu0 0.0
  %1670 = vmatprep.subr.mxu0 0.0
  %1671 = vmatpush1.msra.mxu0 0.0
  %1672 = vmatprep.subr.mxu0 0.0
  %1673 = vmatpush1.msra.mxu0 0.0
  %1674 = vmatprep.subr.mxu0 0.0
  %1675 = vmatpush1.msra.mxu0 0.0
  %1676 = vmatprep.subr.mxu0 0.0
  %1677 = vmatpush1.msra.mxu0 0.0
  %1678 = vmatprep.subr.mxu0 0.0
  %1679 = vmatpush1.msra.mxu0 0.0
  %1680 = vmatprep.subr.mxu0 0.0
  %1681 = vmatpush1.msra.mxu0 0.0
  %1682 = vmatprep.subr.mxu0 0.0
  %1683 = vmatpush1.msra.mxu0 0.0
  %1684 = vmatprep.subr.mxu0 0.0
  %1685 = vmatpush1.msra.mxu0 0.0
  %1686 = vmatprep.subr.mxu0 0.0
  %1687 = vmatpush1.msra.mxu0 0.0
  %1688 = vmatprep.subr.mxu0 0.0
  %1689 = vmatpush1.msra.mxu0 0.0
  %1690 = vmatprep.subr.mxu0 0.0
  %1691 = vmatpush1.msra.mxu0 0.0
  %1692 = vmatprep.subr.mxu0 0.0
  %1693 = vmatpush1.msra.mxu0 0.0
  %1694 = vmatprep.subr.mxu0 0.0
  %1695 = vmatpush1.msra.mxu0 0.0
  %1696 = vmatprep.subr.mxu0 0.0
  %1697 = vmatpush1.msra.mxu0 0.0
  %1698 = vmatprep.subr.mxu0 0.0
  %1699 = vmatpush1.msra.mxu0 0.0
  %1700 = vmatprep.subr.mxu0 0.0
  %1701 = vmatpush1.msra.mxu0 0.0
  %1702 = vmatprep.subr.mxu0 0.0
  %1703 = vmatpush1.msra.mxu0 0.0
  %1704 = vmatprep.subr.mxu0 0.0
  %1705 = vmatpush1.msra.mxu0 0.0
  %1706 = vmatprep.subr.mxu0 0.0
  %1707 = vmatpush1.msra.mxu0 0.0
  %1708 = vmatprep.subr.mxu0 0.0
  %1709 = vmatpush1.msra.mxu0 0.0
  %1710 = vmatprep.subr.mxu0 0.0
  %1711 = vmatpush1.msra.mxu0 0.0
  %1712 = vmatprep.subr.mxu0 0.0
  %1713 = vmatpush1.msra.mxu0 0.0
  %1714 = vmatprep.subr.mxu0 0.0
  %1715 = vmatpush1.msra.mxu0 0.0
  %1716 = vmatprep.subr.mxu0 0.0
  %1717 = vmatpush1.msra.mxu0 0.0
  %1718 = vmatprep.subr.mxu0 0.0
  %1719 = vmatpush1.msra.mxu0 0.0
  %1720 = vmatprep.mubr.f32.mxu0 0.0
  %1721 = vmatmul.mubr.f32.gmra.mrb[0].mxu0 %v1654
  %v1722 = vpop.f32.mrb[0].mxu0
  %v1723 = vadd.f32 0.0, %v1722
  %v1724 = vpop.f32.mrb[0].mxu0
  %1725 = vdwg.mxu0
  %1726 = vmatprep.subr.mxu0 0.0
  %1727 = vmatpush1.xpose.msra.mxu0 %v756
  %1728 = vmatprep.subr.mxu0 0.0
  %1729 = vmatpush1.xpose.msra.mxu0 0.0
  %1730 = vmatprep.subr.mxu0 0.0
  %1731 = vmatpush1.xpose.msra.mxu0 0.0
  %1732 = vmatprep.subr.mxu0 0.0
  %1733 = vmatpush1.xpose.msra.mxu0 0.0
  %1734 = vmatprep.subr.mxu0 0.0
  %1735 = vmatpush1.xpose.msra.mxu0 0.0
  %1736 = vmatprep.subr.mxu0 0.0
  %1737 = vmatpush1.xpose.msra.mxu0 0.0
  %1738 = vmatprep.subr.mxu0 0.0
  %1739 = vmatpush1.xpose.msra.mxu0 0.0
  %1740 = vmatprep.subr.mxu0 0.0
  %1741 = vmatpush1.xpose.msra.mxu0 0.0
  %1742 = vmatprep.subr.mxu0 0.0
  %1743 = vmatpush1.xpose.msra.mxu0 0.0
  %1744 = vmatprep.subr.mxu0 0.0
  %1745 = vmatpush1.xpose.msra.mxu0 0.0
  %1746 = vmatprep.subr.mxu0 0.0
  %1747 = vmatpush1.xpose.msra.mxu0 0.0
  %1748 = vmatprep.subr.mxu0 0.0
  %1749 = vmatpush1.xpose.msra.mxu0 0.0
  %1750 = vmatprep.subr.mxu0 0.0
  %1751 = vmatpush1.xpose.msra.mxu0 0.0
  %1752 = vmatprep.subr.mxu0 0.0
  %1753 = vmatpush1.xpose.msra.mxu0 0.0
  %1754 = vmatprep.subr.mxu0 0.0
  %1755 = vmatpush1.xpose.msra.mxu0 0.0
  %1756 = vmatprep.subr.mxu0 0.0
  %1757 = vmatpush1.xpose.msra.mxu0 0.0
  %1758 = vmatprep.subr.mxu0 0.0
  %1759 = vmatpush1.xpose.msra.mxu0 0.0
  %1760 = vmatprep.subr.mxu0 0.0
  %1761 = vmatpush1.xpose.msra.mxu0 0.0
  %1762 = vmatprep.subr.mxu0 0.0
  %1763 = vmatpush1.xpose.msra.mxu0 0.0
  %1764 = vmatprep.subr.mxu0 0.0
  %1765 = vmatpush1.xpose.msra.mxu0 0.0
  %1766 = vmatprep.subr.mxu0 0.0
  %1767 = vmatpush1.xpose.msra.mxu0 0.0
  %1768 = vmatprep.subr.mxu0 0.0
  %1769 = vmatpush1.xpose.msra.mxu0 0.0
  %1770 = vmatprep.subr.mxu0 0.0
  %1771 = vmatpush1.xpose.msra.mxu0 0.0
  %1772 = vmatprep.subr.mxu0 0.0
  %1773 = vmatpush1.xpose.msra.mxu0 0.0
  %1774 = vmatprep.subr.mxu0 0.0
  %1775 = vmatpush1.xpose.msra.mxu0 0.0
  %1776 = vmatprep.subr.mxu0 0.0
  %1777 = vmatpush1.xpose.msra.mxu0 0.0
  %1778 = vmatprep.subr.mxu0 0.0
  %1779 = vmatpush1.xpose.msra.mxu0 0.0
  %1780 = vmatprep.subr.mxu0 0.0
  %1781 = vmatpush1.xpose.msra.mxu0 0.0
  %1782 = vmatprep.subr.mxu0 0.0
  %1783 = vmatpush1.xpose.msra.mxu0 0.0
  %1784 = vmatprep.subr.mxu0 0.0
  %1785 = vmatpush1.xpose.msra.mxu0 0.0
  %1786 = vmatprep.subr.mxu0 0.0
  %1787 = vmatpush1.xpose.msra.mxu0 0.0
  %1788 = vmatprep.subr.mxu0 0.0
  %1789 = vmatpush1.xpose.msra.mxu0 0.0
  %1790 = vmatprep.mubr.f32.mxu0 0.0
  %1791 = vmatmul.mubr.f32.gmra.mrb[0].mxu0 %v725
  %v1792 = vpop.f32.mrb[0].mxu0
  %v1793 = vadd.f32 0.0, %v1792
  %v1794 = vpop.f32.mrb[0].mxu0
  %1795 = vdwg.mxu0
  %v1796 = vmul.f32 %v1793, 0.28867513
  %v1797 = vadd.f32 %v1796, %v73
  %v1798 = vsel %vm861, %v1797, -inf
  %1799 = vmax.xlane.f32.xlu0 %v1798
  %v1800 = vpop.xlane.xlu0 %1799
  %v1801 = vsub.f32 %v1797, %v1800
  %v1802 = vmul.f32 %v1801, 1.442695
  %v1803 = vpow.pop %v1802
  %v1804 = vsel %vm861, %v1803, 0.0
  %1805 = vadd.xlane.f32.xlu0 %v1804
  %v1806 = vpop.xlane.xlu0 %1805
  %v1807 = vrcp.pop %v1806
  %v1808 = vmul.f32 %v1803, %v1807
  %v1810 = vsel %vm861, %v1808, 0
  %1812 = vmatprep.subr.mxu0 0.0
  %1813 = vmatpush1.msra.mxu0 %v787
  %1814 = vmatprep.subr.mxu0 0.0
  %1815 = vmatpush1.msra.mxu0 0.0
  %1816 = vmatprep.subr.mxu0 0.0
  %1817 = vmatpush1.msra.mxu0 0.0
  %1818 = vmatprep.subr.mxu0 0.0
  %1819 = vmatpush1.msra.mxu0 0.0
  %1820 = vmatprep.subr.mxu0 0.0
  %1821 = vmatpush1.msra.mxu0 0.0
  %1822 = vmatprep.subr.mxu0 0.0
  %1823 = vmatpush1.msra.mxu0 0.0
  %1824 = vmatprep.subr.mxu0 0.0
  %1825 = vmatpush1.msra.mxu0 0.0
  %1826 = vmatprep.subr.mxu0 0.0
  %1827 = vmatpush1.msra.mxu0 0.0
  %1828 = vmatprep.subr.mxu0 0.0
  %1829 = vmatpush1.msra.mxu0 0.0
  %1830 = vmatprep.subr.mxu0 0.0
  %1831 = vmatpush1.msra.mxu0 0.0
  %1832 = vmatprep.subr.mxu0 0.0
  %1833 = vmatpush1.msra.mxu0 0.0
  %1834 = vmatprep.subr.mxu0 0.0
  %1835 = vmatpush1.msra.mxu0 0.0
  %1836 = vmatprep.subr.mxu0 0.0
  %1837 = vmatpush1.msra.mxu0 0.0
  %1838 = vmatprep.subr.mxu0 0.0
  %1839 = vmatpush1.msra.mxu0 0.0
  %1840 = vmatprep.subr.mxu0 0.0
  %1841 = vmatpush1.msra.mxu0 0.0
  %1842 = vmatprep.subr.mxu0 0.0
  %1843 = vmatpush1.msra.mxu0 0.0
  %1844 = vmatprep.subr.mxu0 0.0
  %1845 = vmatpush1.msra.mxu0 0.0
  %1846 = vmatprep.subr.mxu0 0.0
  %1847 = vmatpush1.msra.mxu0 0.0
  %1848 = vmatprep.subr.mxu0 0.0
  %1849 = vmatpush1.msra.mxu0 0.0
  %1850 = vmatprep.subr.mxu0 0.0
  %1851 = vmatpush1.msra.mxu0 0.0
  %1852 = vmatprep.subr.mxu0 0.0
  %1853 = vmatpush1.msra.mxu0 0.0
  %1854 = vmatprep.subr.mxu0 0.0
  %1855 = vmatpush1.msra.mxu0 0.0
  %1856 = vmatprep.subr.mxu0 0.0
  %1857 = vmatpush1.msra.mxu0 0.0
  %1858 = vmatprep.subr.mxu0 0.0
  %1859 = vmatpush1.msra.mxu0 0.0
  %1860 = vmatprep.subr.mxu0 0.0
  %1861 = vmatpush1.msra.mxu0 0.0
  %1862 = vmatprep.subr.mxu0 0.0
  %1863 = vmatpush1.msra.mxu0 0.0
  %1864 = vmatprep.subr.mxu0 0.0
  %1865 = vmatpush1.msra.mxu0 0.0
  %1866 = vmatprep.subr.mxu0 0.0
  %1867 = vmatpush1.msra.mxu0 0.0
  %1868 = vmatprep.subr.mxu0 0.0
  %1869 = vmatpush1.msra.mxu0 0.0
  %1870 = vmatprep.subr.mxu0 0.0
  %1871 = vmatpush1.msra.mxu0 0.0
  %1872 = vmatprep.subr.mxu0 0.0
  %1873 = vmatpush1.msra.mxu0 0.0
  %1874 = vmatprep.subr.mxu0 0.0
  %1875 = vmatpush1.msra.mxu0 0.0
  %1876 = vmatprep.mubr.f32.mxu0 0.0
  %1877 = vmatmul.mubr.f32.gmra.mrb[0].mxu0 %v1810
  %v1878 = vpop.f32.mrb[0].mxu0
  %v1879 = vadd.f32 0.0, %v1878
  %v1880 = vpop.f32.mrb[0].mxu0
  %1881 = vdwg.mxu0
  %1882 = vmatprep.subr.mxu0 0.0
  %1883 = vmatpush1.xpose.msra.mxu0 %v757
  %1884 = vmatprep.subr.mxu0 0.0
  %1885 = vmatpush1.xpose.msra.mxu0 0.0
  %1886 = vmatprep.subr.mxu0 0.0
  %1887 = vmatpush1.xpose.msra.mxu0 0.0
  %1888 = vmatprep.subr.mxu0 0.0
  %1889 = vmatpush1.xpose.msra.mxu0 0.0
  %1890 = vmatprep.subr.mxu0 0.0
  %1891 = vmatpush1.xpose.msra.mxu0 0.0
  %1892 = vmatprep.subr.mxu0 0.0
  %1893 = vmatpush1.xpose.msra.mxu0 0.0
  %1894 = vmatprep.subr.mxu0 0.0
  %1895 = vmatpush1.xpose.msra.mxu0 0.0
  %1896 = vmatprep.subr.mxu0 0.0
  %1897 = vmatpush1.xpose.msra.mxu0 0.0
  %1898 = vmatprep.subr.mxu0 0.0
  %1899 = vmatpush1.xpose.msra.mxu0 0.0
  %1900 = vmatprep.subr.mxu0 0.0
  %1901 = vmatpush1.xpose.msra.mxu0 0.0
  %1902 = vmatprep.subr.mxu0 0.0
  %1903 = vmatpush1.xpose.msra.mxu0 0.0
  %1904 = vmatprep.subr.mxu0 0.0
  %1905 = vmatpush1.xpose.msra.mxu0 0.0
  %1906 = vmatprep.subr.mxu0 0.0
  %1907 = vmatpush1.xpose.msra.mxu0 0.0
  %1908 = vmatprep.subr.mxu0 0.0
  %1909 = vmatpush1.xpose.msra.mxu0 0.0
  %1910 = vmatprep.subr.mxu0 0.0
  %1911 = vmatpush1.xpose.msra.mxu0 0.0
  %1912 = vmatprep.subr.mxu0 0.0
  %1913 = vmatpush1.xpose.msra.mxu0 0.0
  %1914 = vmatprep.subr.mxu0 0.0
  %1915 = vmatpush1.xpose.msra.mxu0 0.0
  %1916 = vmatprep.subr.mxu0 0.0
  %1917 = vmatpush1.xpose.msra.mxu0 0.0
  %1918 = vmatprep.subr.mxu0 0.0
  %1919 = vmatpush1.xpose.msra.mxu0 0.0
  %1920 = vmatprep.subr.mxu0 0.0
  %1921 = vmatpush1.xpose.msra.mxu0 0.0
  %1922 = vmatprep.subr.mxu0 0.0
  %1923 = vmatpush1.xpose.msra.mxu0 0.0
  %1924 = vmatprep.subr.mxu0 0.0
  %1925 = vmatpush1.xpose.msra.mxu0 0.0
  %1926 = vmatprep.subr.mxu0 0.0
  %1927 = vmatpush1.xpose.msra.mxu0 0.0
  %1928 = vmatprep.subr.mxu0 0.0
  %1929 = vmatpush1.xpose.msra.mxu0 0.0
  %1930 = vmatprep.subr.mxu0 0.0
  %1931 = vmatpush1.xpose.msra.mxu0 0.0
  %1932 = vmatprep.subr.mxu0 0.0
  %1933 = vmatpush1.xpose.msra.mxu0 0.0
  %1934 = vmatprep.subr.mxu0 0.0
  %1935 = vmatpush1.xpose.msra.mxu0 0.0
  %1936 = vmatprep.subr.mxu0 0.0
  %1937 = vmatpush1.xpose.msra.mxu0 0.0
  %1938 = vmatprep.subr.mxu0 0.0
  %1939 = vmatpush1.xpose.msra.mxu0 0.0
  %1940 = vmatprep.subr.mxu0 0.0
  %1941 = vmatpush1.xpose.msra.mxu0 0.0
  %1942 = vmatprep.subr.mxu0 0.0
  %1943 = vmatpush1.xpose.msra.mxu0 0.0
  %1944 = vmatprep.subr.mxu0 0.0
  %1945 = vmatpush1.xpose.msra.mxu0 0.0
  %1946 = vmatprep.mubr.f32.mxu0 0.0
  %1947 = vmatmul.mubr.f32.gmra.mrb[0].mxu0 %v726
  %v1948 = vpop.f32.mrb[0].mxu0
  %v1949 = vadd.f32 0.0, %v1948
  %v1950 = vpop.f32.mrb[0].mxu0
  %1951 = vdwg.mxu0
  %v1952 = vmul.f32 %v1949, 0.28867513
  %v1953 = vadd.f32 %v1952, %v73
  %v1954 = vsel %vm861, %v1953, -inf
  %1955 = vmax.xlane.f32.xlu0 %v1954
  %v1956 = vpop.xlane.xlu0 %1955
  %v1957 = vsub.f32 %v1953, %v1956
  %v1958 = vmul.f32 %v1957, 1.442695
  %v1959 = vpow.pop %v1958
  %v1960 = vsel %vm861, %v1959, 0.0
  %1961 = vadd.xlane.f32.xlu0 %v1960
  %v1962 = vpop.xlane.xlu0 %1961
  %v1963 = vrcp.pop %v1962
  %v1964 = vmul.f32 %v1959, %v1963
  %v1966 = vsel %vm861, %v1964, 0
  %1968 = vmatprep.subr.mxu0 0.0
  %1969 = vmatpush1.msra.mxu0 %v788
  %1970 = vmatprep.subr.mxu0 0.0
  %1971 = vmatpush1.msra.mxu0 0.0
  %1972 = vmatprep.subr.mxu0 0.0
  %1973 = vmatpush1.msra.mxu0 0.0
  %1974 = vmatprep.subr.mxu0 0.0
  %1975 = vmatpush1.msra.mxu0 0.0
  %1976 = vmatprep.subr.mxu0 0.0
  %1977 = vmatpush1.msra.mxu0 0.0
  %1978 = vmatprep.subr.mxu0 0.0
  %1979 = vmatpush1.msra.mxu0 0.0
  %1980 = vmatprep.subr.mxu0 0.0
  %1981 = vmatpush1.msra.mxu0 0.0
  %1982 = vmatprep.subr.mxu0 0.0
  %1983 = vmatpush1.msra.mxu0 0.0
  %1984 = vmatprep.subr.mxu0 0.0
  %1985 = vmatpush1.msra.mxu0 0.0
  %1986 = vmatprep.subr.mxu0 0.0
  %1987 = vmatpush1.msra.mxu0 0.0
  %1988 = vmatprep.subr.mxu0 0.0
  %1989 = vmatpush1.msra.mxu0 0.0
  %1990 = vmatprep.subr.mxu0 0.0
  %1991 = vmatpush1.msra.mxu0 0.0
  %1992 = vmatprep.subr.mxu0 0.0
  %1993 = vmatpush1.msra.mxu0 0.0
  %1994 = vmatprep.subr.mxu0 0.0
  %1995 = vmatpush1.msra.mxu0 0.0
  %1996 = vmatprep.subr.mxu0 0.0
  %1997 = vmatpush1.msra.mxu0 0.0
  %1998 = vmatprep.subr.mxu0 0.0
  %1999 = vmatpush1.msra.mxu0 0.0
  %2000 = vmatprep.subr.mxu0 0.0
  %2001 = vmatpush1.msra.mxu0 0.0
  %2002 = vmatprep.subr.mxu0 0.0
  %2003 = vmatpush1.msra.mxu0 0.0
  %2004 = vmatprep.subr.mxu0 0.0
  %2005 = vmatpush1.msra.mxu0 0.0
  %2006 = vmatprep.subr.mxu0 0.0
  %2007 = vmatpush1.msra.mxu0 0.0
  %2008 = vmatprep.subr.mxu0 0.0
  %2009 = vmatpush1.msra.mxu0 0.0
  %2010 = vmatprep.subr.mxu0 0.0
  %2011 = vmatpush1.msra.mxu0 0.0
  %2012 = vmatprep.subr.mxu0 0.0
  %2013 = vmatpush1.msra.mxu0 0.0
  %2014 = vmatprep.subr.mxu0 0.0
  %2015 = vmatpush1.msra.mxu0 0.0
  %2016 = vmatprep.subr.mxu0 0.0
  %2017 = vmatpush1.msra.mxu0 0.0
  %2018 = vmatprep.subr.mxu0 0.0
  %2019 = vmatpush1.msra.mxu0 0.0
  %2020 = vmatprep.subr.mxu0 0.0
  %2021 = vmatpush1.msra.mxu0 0.0
  %2022 = vmatprep.subr.mxu0 0.0
  %2023 = vmatpush1.msra.mxu0 0.0
  %2024 = vmatprep.subr.mxu0 0.0
  %2025 = vmatpush1.msra.mxu0 0.0
  %2026 = vmatprep.subr.mxu0 0.0
  %2027 = vmatpush1.msra.mxu0 0.0
  %2028 = vmatprep.subr.mxu0 0.0
  %2029 = vmatpush1.msra.mxu0 0.0
  %2030 = vmatprep.subr.mxu0 0.0
  %2031 = vmatpush1.msra.mxu0 0.0
  %2032 = vmatprep.mubr.f32.mxu0 0.0
  %2033 = vmatmul.mubr.f32.gmra.mrb[0].mxu0 %v1966
  %v2034 = vpop.f32.mrb[0].mxu0
  %v2035 = vadd.f32 0.0, %v2034
  %v2036 = vpop.f32.mrb[0].mxu0
  %2037 = vdwg.mxu0
  %v2038 = vld [vmem:[%s2 + $0x5] ss:$0 sm:$0xff]
  %2039 = vmatprep.subr.mxu0 0.0
  %2040 = vmatpush1.msra.mxu0 %v146
  %2041 = vmatprep.subr.mxu0 0.0
  %2042 = vmatpush1.msra.mxu0 %v147
  %2043 = vmatprep.subr.mxu0 0.0
  %2044 = vmatpush1.msra.mxu0 %v148
  %2045 = vmatprep.subr.mxu0 0.0
  %2046 = vmatpush1.msra.mxu0 %v149
  %2047 = vmatprep.subr.mxu0 0.0
  %2048 = vmatpush1.msra.mxu0 %v150
  %2049 = vmatprep.subr.mxu0 0.0
  %2050 = vmatpush1.msra.mxu0 %v151
  %2051 = vmatprep.subr.mxu0 0.0
  %2052 = vmatpush1.msra.mxu0 %v152
  %2053 = vmatprep.subr.mxu0 0.0
  %2054 = vmatpush1.msra.mxu0 %v153
  %2055 = vmatprep.subr.mxu0 0.0
  %2056 = vmatpush1.msra.mxu0 %v154
  %2057 = vmatprep.subr.mxu0 0.0
  %2058 = vmatpush1.msra.mxu0 %v155
  %2059 = vmatprep.subr.mxu0 0.0
  %2060 = vmatpush1.msra.mxu0 %v156
  %2061 = vmatprep.subr.mxu0 0.0
  %2062 = vmatpush1.msra.mxu0 %v157
  %2063 = vmatprep.subr.mxu0 0.0
  %2064 = vmatpush1.msra.mxu0 %v158
  %2065 = vmatprep.subr.mxu0 0.0
  %2066 = vmatpush1.msra.mxu0 %v159
  %2067 = vmatprep.subr.mxu0 0.0
  %2068 = vmatpush1.msra.mxu0 %v160
  %2069 = vmatprep.subr.mxu0 0.0
  %2070 = vmatpush1.msra.mxu0 %v161
  %2071 = vmatprep.subr.mxu0 0.0
  %2072 = vmatpush1.msra.mxu0 %v162
  %2073 = vmatprep.subr.mxu0 0.0
  %2074 = vmatpush1.msra.mxu0 %v163
  %2075 = vmatprep.subr.mxu0 0.0
  %2076 = vmatpush1.msra.mxu0 %v164
  %2077 = vmatprep.subr.mxu0 0.0
  %2078 = vmatpush1.msra.mxu0 %v165
  %2079 = vmatprep.subr.mxu0 0.0
  %2080 = vmatpush1.msra.mxu0 %v166
  %2081 = vmatprep.subr.mxu0 0.0
  %2082 = vmatpush1.msra.mxu0 %v167
  %2083 = vmatprep.subr.mxu0 0.0
  %2084 = vmatpush1.msra.mxu0 %v168
  %2085 = vmatprep.subr.mxu0 0.0
  %2086 = vmatpush1.msra.mxu0 %v169
  %2087 = vmatprep.subr.mxu0 0.0
  %2088 = vmatpush1.msra.mxu0 %v170
  %2089 = vmatprep.subr.mxu0 0.0
  %2090 = vmatpush1.msra.mxu0 %v171
  %2091 = vmatprep.subr.mxu0 0.0
  %2092 = vmatpush1.msra.mxu0 %v172
  %2093 = vmatprep.subr.mxu0 0.0
  %2094 = vmatpush1.msra.mxu0 %v173
  %2095 = vmatprep.subr.mxu0 0.0
  %2096 = vmatpush1.msra.mxu0 %v174
  %2097 = vmatprep.subr.mxu0 0.0
  %2098 = vmatpush1.msra.mxu0 %v175
  %2099 = vmatprep.subr.mxu0 0.0
  %2100 = vmatpush1.msra.mxu0 %v176
  %2101 = vmatprep.subr.mxu0 0.0
  %2102 = vmatpush1.msra.mxu0 %v177
  %2103 = vmatprep.mubr.f32.mxu0 %v1099
  %2104 = vmatmul.mubr.f32.gmra.mrb[0].mxu0 %v943
  %v2105 = vpop.f32.mrb[0].mxu0
  %v2106 = vadd.f32 %v2038, %v2105
  %v2107 = vpop.f32.mrb[0].mxu0
  %2108 = vmatprep.mubr.f32.mxu0 %v1723
  %2109 = vmatmul.mubr.f32.gmra.mrb[0].mxu0 %v1567
  %v2110 = vpop.f32.mrb[0].mxu0
  %v2111 = vadd.f32 %v2038, %v2110
  %v2112 = vpop.f32.mrb[0].mxu0
  %2113 = vdwg.mxu0
  %2114 = vmatprep.subr.mxu0 0.0
  %2115 = vmatpush1.msra.mxu0 %v178
  %2116 = vmatprep.subr.mxu0 0.0
  %2117 = vmatpush1.msra.mxu0 %v179
  %2118 = vmatprep.subr.mxu0 0.0
  %2119 = vmatpush1.msra.mxu0 %v180
  %2120 = vmatprep.subr.mxu0 0.0
  %2121 = vmatpush1.msra.mxu0 %v181
  %2122 = vmatprep.subr.mxu0 0.0
  %2123 = vmatpush1.msra.mxu0 %v182
  %2124 = vmatprep.subr.mxu0 0.0
  %2125 = vmatpush1.msra.mxu0 %v183
  %2126 = vmatprep.subr.mxu0 0.0
  %2127 = vmatpush1.msra.mxu0 %v184
  %2128 = vmatprep.subr.mxu0 0.0
  %2129 = vmatpush1.msra.mxu0 %v185
  %2130 = vmatprep.subr.mxu0 0.0
  %2131 = vmatpush1.msra.mxu0 %v186
  %2132 = vmatprep.subr.mxu0 0.0
  %2133 = vmatpush1.msra.mxu0 %v187
  %2134 = vmatprep.subr.mxu0 0.0
  %2135 = vmatpush1.msra.mxu0 %v188
  %2136 = vmatprep.subr.mxu0 0.0
  %2137 = vmatpush1.msra.mxu0 %v189
  %2138 = vmatprep.subr.mxu0 0.0
  %2139 = vmatpush1.msra.mxu0 %v190
  %2140 = vmatprep.subr.mxu0 0.0
  %2141 = vmatpush1.msra.mxu0 %v191
  %2142 = vmatprep.subr.mxu0 0.0
  %2143 = vmatpush1.msra.mxu0 %v192
  %2144 = vmatprep.subr.mxu0 0.0
  %2145 = vmatpush1.msra.mxu0 %v193
  %2146 = vmatprep.subr.mxu0 0.0
  %2147 = vmatpush1.msra.mxu0 %v194
  %2148 = vmatprep.subr.mxu0 0.0
  %2149 = vmatpush1.msra.mxu0 %v195
  %2150 = vmatprep.subr.mxu0 0.0
  %2151 = vmatpush1.msra.mxu0 %v196
  %2152 = vmatprep.subr.mxu0 0.0
  %2153 = vmatpush1.msra.mxu0 %v197
  %2154 = vmatprep.subr.mxu0 0.0
  %2155 = vmatpush1.msra.mxu0 %v198
  %2156 = vmatprep.subr.mxu0 0.0
  %2157 = vmatpush1.msra.mxu0 %v199
  %2158 = vmatprep.subr.mxu0 0.0
  %2159 = vmatpush1.msra.mxu0 %v200
  %2160 = vmatprep.subr.mxu0 0.0
  %2161 = vmatpush1.msra.mxu0 %v201
  %2162 = vmatprep.subr.mxu0 0.0
  %2163 = vmatpush1.msra.mxu0 %v202
  %2164 = vmatprep.subr.mxu0 0.0
  %2165 = vmatpush1.msra.mxu0 %v203
  %2166 = vmatprep.subr.mxu0 0.0
  %2167 = vmatpush1.msra.mxu0 %v204
  %2168 = vmatprep.subr.mxu0 0.0
  %2169 = vmatpush1.msra.mxu0 %v205
  %2170 = vmatprep.subr.mxu0 0.0
  %2171 = vmatpush1.msra.mxu0 %v206
  %2172 = vmatprep.subr.mxu0 0.0
  %2173 = vmatpush1.msra.mxu0 %v207
  %2174 = vmatprep.subr.mxu0 0.0
  %2175 = vmatpush1.msra.mxu0 %v208
  %2176 = vmatprep.subr.mxu0 0.0
  %2177 = vmatpush1.msra.mxu0 %v209
  %2178 = vmatprep.mubr.f32.mxu0 %v1411
  %2179 = vmatmul.mubr.f32.gmra.mrb[0].mxu0 %v1255
  %v2180 = vpop.f32.mrb[0].mxu0
  %v2181 = vadd.f32 %v2106, %v2180
  %v2182 = vpop.f32.mrb[0].mxu0
  %2183 = vmatprep.mubr.f32.mxu0 %v2035
  %2184 = vmatmul.mubr.f32.gmra.mrb[0].mxu0 %v1879
  %v2185 = vpop.f32.mrb[0].mxu0
  %v2186 = vadd.f32 %v2111, %v2185
  %v2187 = vpop.f32.mrb[0].mxu0
  %2188 = vdwg.mxu0
  %v2189 = vadd.f32 %v63, %v2181
  %v2190 = vadd.f32 %v64, %v2186
  %v2191 = vld [vmem:[%s2 + $0x6] ss:$0 sm:$0xff]
  %v2192 = vld [vmem:[%s2 + $0x7] ss:$0 sm:$0xff]
  %v2193 = vsel %vm33, %v2189, 0.0
  %2194 = vadd.xlane.f32.xlu0 %v2193
  %v2195 = vpop.xlane.xlu0 %2194
  %v2196 = vsel %vm33, %v2190, 0.0
  %2197 = vadd.xlane.f32.xlu0 %v2196
  %v2198 = vpop.xlane.xlu0 %2197
  %v2199 = vmul.f32 %v2195, %v40
  %v2200 = vmul.f32 %v2198, %v40
  %v2201 = vsub.f32 %v2189, %v2199
  %v2202 = vsub.f32 %v2190, %v2200
  %v2203 = vmul.f32 %v2201, %v2201
  %v2204 = vmul.f32 %v2202, %v2202
  %v2205 = vsel %vm33, %v2203, 0.0
  %2206 = vadd.xlane.f32.xlu0 %v2205
  %v2207 = vpop.xlane.xlu0 %2206
  %v2208 = vsel %vm33, %v2204, 0.0
  %2209 = vadd.xlane.f32.xlu0 %v2208
  %v2210 = vpop.xlane.xlu0 %2209
  %v2211 = vmul.f32 %v2207, %v40
  %v2212 = vmul.f32 %v2210, %v40
  %v2213 = vadd.f32 %v2211, 1e-12
  %v2214 = vadd.f32 %v2212, 1e-12
  %v2215 = vrsqrt.pop %v2213
  %v2216 = vrsqrt.pop %v2214
  %v2217 = vmul.f32 %v2201, %v2215
  %v2218 = vmul.f32 %v2202, %v2216
  %v2219 = vmul.f32 %v2217, %v2191
  %v2220 = vmul.f32 %v2218, %v2191
  %v2221 = vadd.f32 %v2219, %v2192
  %v2222 = vadd.f32 %v2220, %v2192
  %v2223 = vld [vmem:[%s2 + $0x20] ss:$0 sm:$0xff]
  %v2225 = vsel %vm33, %v2221, 0
  %v2228 = vsel %vm33, %v2222, 0
  %2230 = vmatprep.subr.mxu0 0.0
  %2231 = vmatpush1.msra.mxu0 %v210
  %2232 = vmatprep.subr.mxu0 0.0
  %2233 = vmatpush1.msra.mxu0 %v211
  %2234 = vmatprep.subr.mxu0 0.0
  %2235 = vmatpush1.msra.mxu0 %v212
  %2236 = vmatprep.subr.mxu0 0.0
  %2237 = vmatpush1.msra.mxu0 %v213
  %2238 = vmatprep.subr.mxu0 0.0
  %2239 = vmatpush1.msra.mxu0 %v214
  %2240 = vmatprep.subr.mxu0 0.0
  %2241 = vmatpush1.msra.mxu0 %v215
  %2242 = vmatprep.subr.mxu0 0.0
  %2243 = vmatpush1.msra.mxu0 0.0
  %2244 = vmatprep.subr.mxu0 0.0
  %2245 = vmatpush1.msra.mxu0 0.0
  %2246 = vmatprep.subr.mxu0 0.0
  %2247 = vmatpush1.msra.mxu0 0.0
  %2248 = vmatprep.subr.mxu0 0.0
  %2249 = vmatpush1.msra.mxu0 0.0
  %2250 = vmatprep.subr.mxu0 0.0
  %2251 = vmatpush1.msra.mxu0 0.0
  %2252 = vmatprep.subr.mxu0 0.0
  %2253 = vmatpush1.msra.mxu0 0.0
  %2254 = vmatprep.subr.mxu0 0.0
  %2255 = vmatpush1.msra.mxu0 0.0
  %2256 = vmatprep.subr.mxu0 0.0
  %2257 = vmatpush1.msra.mxu0 0.0
  %2258 = vmatprep.subr.mxu0 0.0
  %2259 = vmatpush1.msra.mxu0 0.0
  %2260 = vmatprep.subr.mxu0 0.0
  %2261 = vmatpush1.msra.mxu0 0.0
  %2262 = vmatprep.subr.mxu0 0.0
  %2263 = vmatpush1.msra.mxu0 0.0
  %2264 = vmatprep.subr.mxu0 0.0
  %2265 = vmatpush1.msra.mxu0 0.0
  %2266 = vmatprep.subr.mxu0 0.0
  %2267 = vmatpush1.msra.mxu0 0.0
  %2268 = vmatprep.subr.mxu0 0.0
  %2269 = vmatpush1.msra.mxu0 0.0
  %2270 = vmatprep.subr.mxu0 0.0
  %2271 = vmatpush1.msra.mxu0 0.0
  %2272 = vmatprep.subr.mxu0 0.0
  %2273 = vmatpush1.msra.mxu0 0.0
  %2274 = vmatprep.subr.mxu0 0.0
  %2275 = vmatpush1.msra.mxu0 0.0
  %2276 = vmatprep.subr.mxu0 0.0
  %2277 = vmatpush1.msra.mxu0 0.0
  %2278 = vmatprep.subr.mxu0 0.0
  %2279 = vmatpush1.msra.mxu0 0.0
  %2280 = vmatprep.subr.mxu0 0.0
  %2281 = vmatpush1.msra.mxu0 0.0
  %2282 = vmatprep.subr.mxu0 0.0
  %2283 = vmatpush1.msra.mxu0 0.0
  %2284 = vmatprep.subr.mxu0 0.0
  %2285 = vmatpush1.msra.mxu0 0.0
  %2286 = vmatprep.subr.mxu0 0.0
  %2287 = vmatpush1.msra.mxu0 0.0
  %2288 = vmatprep.subr.mxu0 0.0
  %2289 = vmatpush1.msra.mxu0 0.0
  %2290 = vmatprep.subr.mxu0 0.0
  %2291 = vmatpush1.msra.mxu0 0.0
  %2292 = vmatprep.subr.mxu0 0.0
  %2293 = vmatpush1.msra.mxu0 0.0
  %2294 = vmatprep.mubr.f32.mxu0 0.0
  %2295 = vmatmul.mubr.f32.gmra.mrb[0].mxu0 %v2225
  %v2296 = vpop.f32.mrb[0].mxu0
  %v2297 = vadd.f32 %v2223, %v2296
  %v2298 = vpop.f32.mrb[0].mxu0
  %2299 = vmatprep.mubr.f32.mxu0 0.0
  %2300 = vmatmul.mubr.f32.gmra.mrb[0].mxu0 %v2228
  %v2301 = vpop.f32.mrb[0].mxu0
  %v2302 = vadd.f32 %v2223, %v2301
  %v2303 = vpop.f32.mrb[0].mxu0
  %2304 = vdwg.mxu0
  %v2305 = vmul.f32 %v2297, %v2297
  %v2306 = vmul.f32 %v2302, %v2302
  %v2307 = vmul.f32 %v2297, %v2305
  %v2308 = vmul.f32 %v2302, %v2306
  %v2309 = vmul.f32 %v2307, 0.044715
  %v2310 = vmul.f32 %v2308, 0.044715
  %v2311 = vadd.f32 %v2297, %v2309
  %v2312 = vadd.f32 %v2302, %v2310
  %v2313 = vmul.f32 %v2311, 0.7978846
  %v2314 = vmul.f32 %v2312, 0.7978846
  %v2315 = vtanh.pop %v2313
  %v2316 = vtanh.pop %v2314
  %v2317 = vadd.f32 %v2315, 1.0
  %v2318 = vadd.f32 %v2316, 1.0
  %v2319 = vmul.f32 %v2317, 0.5
  %v2320 = vmul.f32 %v2318, 0.5
  %v2321 = vmul.f32 %v2297, %v2319
  %v2322 = vmul.f32 %v2302, %v2320
  %v2323 = vld [vmem:[%s2 + $0x21] ss:$0 sm:$0xff]
  %vm2324 = vcmask 785408
  %v2326 = vsel %vm2324, %v2321, 0
  %v2329 = vsel %vm2324, %v2322, 0
  %2331 = vmatprep.subr.mxu0 0.0
  %2332 = vmatpush1.msra.mxu0 %v216
  %2333 = vmatprep.subr.mxu0 0.0
  %2334 = vmatpush1.msra.mxu0 %v217
  %2335 = vmatprep.subr.mxu0 0.0
  %2336 = vmatpush1.msra.mxu0 %v218
  %2337 = vmatprep.subr.mxu0 0.0
  %2338 = vmatpush1.msra.mxu0 %v219
  %2339 = vmatprep.subr.mxu0 0.0
  %2340 = vmatpush1.msra.mxu0 %v220
  %2341 = vmatprep.subr.mxu0 0.0
  %2342 = vmatpush1.msra.mxu0 %v221
  %2343 = vmatprep.subr.mxu0 0.0
  %2344 = vmatpush1.msra.mxu0 %v222
  %2345 = vmatprep.subr.mxu0 0.0
  %2346 = vmatpush1.msra.mxu0 %v223
  %2347 = vmatprep.subr.mxu0 0.0
  %2348 = vmatpush1.msra.mxu0 %v224
  %2349 = vmatprep.subr.mxu0 0.0
  %2350 = vmatpush1.msra.mxu0 %v225
  %2351 = vmatprep.subr.mxu0 0.0
  %2352 = vmatpush1.msra.mxu0 %v226
  %2353 = vmatprep.subr.mxu0 0.0
  %2354 = vmatpush1.msra.mxu0 %v227
  %2355 = vmatprep.subr.mxu0 0.0
  %2356 = vmatpush1.msra.mxu0 0.0
  %2357 = vmatprep.subr.mxu0 0.0
  %2358 = vmatpush1.msra.mxu0 0.0
  %2359 = vmatprep.subr.mxu0 0.0
  %2360 = vmatpush1.msra.mxu0 0.0
  %2361 = vmatprep.subr.mxu0 0.0
  %2362 = vmatpush1.msra.mxu0 0.0
  %2363 = vmatprep.subr.mxu0 0.0
  %2364 = vmatpush1.msra.mxu0 0.0
  %2365 = vmatprep.subr.mxu0 0.0
  %2366 = vmatpush1.msra.mxu0 0.0
  %2367 = vmatprep.subr.mxu0 0.0
  %2368 = vmatpush1.msra.mxu0 0.0
  %2369 = vmatprep.subr.mxu0 0.0
  %2370 = vmatpush1.msra.mxu0 0.0
  %2371 = vmatprep.subr.mxu0 0.0
  %2372 = vmatpush1.msra.mxu0 0.0
  %2373 = vmatprep.subr.mxu0 0.0
  %2374 = vmatpush1.msra.mxu0 0.0
  %2375 = vmatprep.subr.mxu0 0.0
  %2376 = vmatpush1.msra.mxu0 0.0
  %2377 = vmatprep.subr.mxu0 0.0
  %2378 = vmatpush1.msra.mxu0 0.0
  %2379 = vmatprep.subr.mxu0 0.0
  %2380 = vmatpush1.msra.mxu0 0.0
  %2381 = vmatprep.subr.mxu0 0.0
  %2382 = vmatpush1.msra.mxu0 0.0
  %2383 = vmatprep.subr.mxu0 0.0
  %2384 = vmatpush1.msra.mxu0 0.0
  %2385 = vmatprep.subr.mxu0 0.0
  %2386 = vmatpush1.msra.mxu0 0.0
  %2387 = vmatprep.subr.mxu0 0.0
  %2388 = vmatpush1.msra.mxu0 0.0
  %2389 = vmatprep.subr.mxu0 0.0
  %2390 = vmatpush1.msra.mxu0 0.0
  %2391 = vmatprep.subr.mxu0 0.0
  %2392 = vmatpush1.msra.mxu0 0.0
  %2393 = vmatprep.subr.mxu0 0.0
  %2394 = vmatpush1.msra.mxu0 0.0
  %2395 = vmatprep.mubr.f32.mxu0 0.0
  %2396 = vmatmul.mubr.f32.gmra.mrb[0].mxu0 %v2326
  %v2397 = vpop.f32.mrb[0].mxu0
  %v2398 = vadd.f32 %v2323, %v2397
  %v2399 = vpop.f32.mrb[0].mxu0
  %2400 = vmatprep.mubr.f32.mxu0 0.0
  %2401 = vmatmul.mubr.f32.gmra.mrb[0].mxu0 %v2329
  %v2402 = vpop.f32.mrb[0].mxu0
  %v2403 = vadd.f32 %v2323, %v2402
  %v2404 = vpop.f32.mrb[0].mxu0
  %2405 = vdwg.mxu0
  %v2406 = vadd.f32 %v2221, %v2398
  %v2407 = vadd.f32 %v2222, %v2403
  %v2408 = vld [vmem:[%s2 + $0x22] ss:$0 sm:$0xff]
  %v2409 = vld [vmem:[%s2 + $0x23] ss:$0 sm:$0xff]
  %v2410 = vsel %vm33, %v2406, 0.0
  %2411 = vadd.xlane.f32.xlu0 %v2410
  %v2412 = vpop.xlane.xlu0 %2411
  %v2413 = vsel %vm33, %v2407, 0.0
  %2414 = vadd.xlane.f32.xlu0 %v2413
  %v2415 = vpop.xlane.xlu0 %2414
  %v2416 = vmul.f32 %v2412, %v40
  %v2417 = vmul.f32 %v2415, %v40
  %v2418 = vsub.f32 %v2406, %v2416
  %v2419 = vsub.f32 %v2407, %v2417
  %v2420 = vmul.f32 %v2418, %v2418
  %v2421 = vmul.f32 %v2419, %v2419
  %v2422 = vsel %vm33, %v2420, 0.0
  %2423 = vadd.xlane.f32.xlu0 %v2422
  %v2424 = vpop.xlane.xlu0 %2423
  %v2425 = vsel %vm33, %v2421, 0.0
  %2426 = vadd.xlane.f32.xlu0 %v2425
  %v2427 = vpop.xlane.xlu0 %2426
  %v2428 = vmul.f32 %v2424, %v40
  %v2429 = vmul.f32 %v2427, %v40
  %v2430 = vadd.f32 %v2428, 1e-12
  %v2431 = vadd.f32 %v2429, 1e-12
  %v2432 = vrsqrt.pop %v2430
  %v2433 = vrsqrt.pop %v2431
  %v2434 = vmul.f32 %v2418, %v2432
  %v2435 = vmul.f32 %v2419, %v2433
  %v2436 = vmul.f32 %v2434, %v2408
  %v2437 = vmul.f32 %v2435, %v2408
  %v2438 = vadd.f32 %v2436, %v2409
  %v2439 = vadd.f32 %v2437, %v2409
  %s2440 = scalar_lea.vmem %s3, 576
  %v2441 = vld [vmem:[%s2440] sm:$0xff]
  %v2442 = vld [vmem:[%s2440 + $0x8] sm:$0xff]
  %v2443 = vld [vmem:[%s2440 + $0x10] sm:$0xff]
  %v2444 = vld [vmem:[%s2440 + $0x18] sm:$0xff]
  %v2445 = vld [vmem:[%s2440 + $0x20] sm:$0xff]
  %v2446 = vld [vmem:[%s2440 + $0x28] sm:$0xff]
  %v2447 = vld [vmem:[%s2440 + $0x30] sm:$0xff]
  %v2448 = vld [vmem:[%s2440 + $0x38] sm:$0xff]
  %v2449 = vld [vmem:[%s2440 + $0x40] sm:$0xff]
  %v2450 = vld [vmem:[%s2440 + $0x48] sm:$0xff]
  %v2451 = vld [vmem:[%s2440 + $0x50] sm:$0xff]
  %v2452 = vld [vmem:[%s2440 + $0x58] sm:$0xff]
  %v2453 = vld [vmem:[%s2440 + $0x60] sm:$0xff]
  %v2454 = vld [vmem:[%s2440 + $0x68] sm:$0xff]
  %v2455 = vld [vmem:[%s2440 + $0x70] sm:$0xff]
  %v2456 = vld [vmem:[%s2440 + $0x78] sm:$0xff]
  %v2457 = vld [vmem:[%s2440 + $0x80] sm:$0xff]
  %v2458 = vld [vmem:[%s2440 + $0x88] sm:$0xff]
  %v2459 = vld [vmem:[%s2440 + $0x90] sm:$0xff]
  %v2460 = vld [vmem:[%s2440 + $0x98] sm:$0xff]
  %v2461 = vld [vmem:[%s2440 + $0xa0] sm:$0xff]
  %v2462 = vld [vmem:[%s2440 + $0xa8] sm:$0xff]
  %v2463 = vld [vmem:[%s2440 + $0xb0] sm:$0xff]
  %v2464 = vld [vmem:[%s2440 + $0xb8] sm:$0xff]
  %v2465 = vld [vmem:[%s2440 + $0xc0] sm:$0xff]
  %v2466 = vld [vmem:[%s2440 + $0xc8] sm:$0xff]
  %v2467 = vld [vmem:[%s2440 + $0xd0] sm:$0xff]
  %v2468 = vld [vmem:[%s2440 + $0xd8] sm:$0xff]
  %v2469 = vld [vmem:[%s2440 + $0xe0] sm:$0xff]
  %v2470 = vld [vmem:[%s2440 + $0xe8] sm:$0xff]
  %v2471 = vld [vmem:[%s2440 + $0xf0] sm:$0xff]
  %v2472 = vld [vmem:[%s2440 + $0xf8] sm:$0xff]
  %v2473 = vld [vmem:[%s2440 + $0x100] sm:$0xff]
  %v2474 = vld [vmem:[%s2440 + $0x108] sm:$0xff]
  %v2475 = vld [vmem:[%s2440 + $0x110] sm:$0xff]
  %v2476 = vld [vmem:[%s2440 + $0x118] sm:$0xff]
  %v2477 = vld [vmem:[%s2440 + $0x120] sm:$0xff]
  %v2478 = vld [vmem:[%s2440 + $0x128] sm:$0xff]
  %v2479 = vld [vmem:[%s2440 + $0x130] sm:$0xff]
  %v2480 = vld [vmem:[%s2440 + $0x138] sm:$0xff]
  %v2481 = vld [vmem:[%s2440 + $0x140] sm:$0xff]
  %v2482 = vld [vmem:[%s2440 + $0x148] sm:$0xff]
  %v2483 = vld [vmem:[%s2440 + $0x150] sm:$0xff]
  %v2484 = vld [vmem:[%s2440 + $0x158] sm:$0xff]
  %v2485 = vld [vmem:[%s2440 + $0x160] sm:$0xff]
  %v2486 = vld [vmem:[%s2440 + $0x168] sm:$0xff]
  %v2487 = vld [vmem:[%s2440 + $0x170] sm:$0xff]
  %v2488 = vld [vmem:[%s2440 + $0x178] sm:$0xff]
  %v2489 = vld [vmem:[%s2440 + $0x180] sm:$0xff]
  %v2490 = vld [vmem:[%s2440 + $0x188] sm:$0xff]
  %v2491 = vld [vmem:[%s2440 + $0x190] sm:$0xff]
  %v2492 = vld [vmem:[%s2440 + $0x198] sm:$0xff]
  %v2493 = vld [vmem:[%s2440 + $0x1a0] sm:$0xff]
  %v2494 = vld [vmem:[%s2440 + $0x1a8] sm:$0xff]
  %v2495 = vld [vmem:[%s2440 + $0x1b0] sm:$0xff]
  %v2496 = vld [vmem:[%s2440 + $0x1b8] sm:$0xff]
  %v2497 = vld [vmem:[%s2440 + $0x1c0] sm:$0xff]
  %v2498 = vld [vmem:[%s2440 + $0x1c8] sm:$0xff]
  %v2499 = vld [vmem:[%s2440 + $0x1d0] sm:$0xff]
  %v2500 = vld [vmem:[%s2440 + $0x1d8] sm:$0xff]
  %v2501 = vld [vmem:[%s2440 + $0x1e0] sm:$0xff]
  %v2502 = vld [vmem:[%s2440 + $0x1e8] sm:$0xff]
  %v2503 = vld [vmem:[%s2440 + $0x1f0] sm:$0xff]
  %v2504 = vld [vmem:[%s2440 + $0x1f8] sm:$0xff]
  %v2505 = vld [vmem:[%s2440 + $0x200] sm:$0xff]
  %v2506 = vld [vmem:[%s2440 + $0x208] sm:$0xff]
  %v2507 = vld [vmem:[%s2440 + $0x210] sm:$0xff]
  %v2508 = vld [vmem:[%s2440 + $0x218] sm:$0xff]
  %v2509 = vld [vmem:[%s2440 + $0x220] sm:$0xff]
  %v2510 = vld [vmem:[%s2440 + $0x228] sm:$0xff]
  %v2511 = vld [vmem:[%s2440 + $0x230] sm:$0xff]
  %v2512 = vld [vmem:[%s2440 + $0x238] sm:$0xff]
  %s2513 = scalar_lea.vmem %s4, 512
  %v2514 = vld [vmem:[%s2513] sm:$0xff]
  %v2515 = vld [vmem:[%s2513 + $0x8] sm:$0xff]
  %v2516 = vld [vmem:[%s2513 + $0x10] sm:$0xff]
  %v2517 = vld [vmem:[%s2513 + $0x18] sm:$0xff]
  %v2518 = vld [vmem:[%s2513 + $0x20] sm:$0xff]
  %v2519 = vld [vmem:[%s2513 + $0x28] sm:$0xff]
  %v2520 = vld [vmem:[%s2513 + $0x30] sm:$0xff]
  %v2521 = vld [vmem:[%s2513 + $0x38] sm:$0xff]
  %v2522 = vld [vmem:[%s2513 + $0x40] sm:$0xff]
  %v2523 = vld [vmem:[%s2513 + $0x48] sm:$0xff]
  %v2524 = vld [vmem:[%s2513 + $0x50] sm:$0xff]
  %v2525 = vld [vmem:[%s2513 + $0x58] sm:$0xff]
  %v2526 = vld [vmem:[%s2513 + $0x60] sm:$0xff]
  %v2527 = vld [vmem:[%s2513 + $0x68] sm:$0xff]
  %v2528 = vld [vmem:[%s2513 + $0x70] sm:$0xff]
  %v2529 = vld [vmem:[%s2513 + $0x78] sm:$0xff]
  %v2530 = vld [vmem:[%s2513 + $0x80] sm:$0xff]
  %v2531 = vld [vmem:[%s2513 + $0x88] sm:$0xff]
  %v2532 = vld [vmem:[%s2513 + $0x90] sm:$0xff]
  %v2533 = vld [vmem:[%s2513 + $0x98] sm:$0xff]
  %v2534 = vld [vmem:[%s2513 + $0xa0] sm:$0xff]
  %v2535 = vld [vmem:[%s2513 + $0xa8] sm:$0xff]
  %v2536 = vld [vmem:[%s2513 + $0xb0] sm:$0xff]
  %v2537 = vld [vmem:[%s2513 + $0xb8] sm:$0xff]
  %v2538 = vld [vmem:[%s2513 + $0xc0] sm:$0xff]
  %v2539 = vld [vmem:[%s2513 + $0xc8] sm:$0xff]
  %v2540 = vld [vmem:[%s2513 + $0xd0] sm:$0xff]
  %v2541 = vld [vmem:[%s2513 + $0xd8] sm:$0xff]
  %v2542 = vld [vmem:[%s2513 + $0xe0] sm:$0xff]
  %v2543 = vld [vmem:[%s2513 + $0xe8] sm:$0xff]
  %v2544 = vld [vmem:[%s2513 + $0xf0] sm:$0xff]
  %v2545 = vld [vmem:[%s2513 + $0xf8] sm:$0xff]
  %v2546 = vld [vmem:[%s2513 + $0x100] sm:$0xff]
  %v2547 = vld [vmem:[%s2513 + $0x108] sm:$0xff]
  %v2548 = vld [vmem:[%s2513 + $0x110] sm:$0xff]
  %v2549 = vld [vmem:[%s2513 + $0x118] sm:$0xff]
  %v2550 = vld [vmem:[%s2513 + $0x120] sm:$0xff]
  %v2551 = vld [vmem:[%s2513 + $0x128] sm:$0xff]
  %v2552 = vld [vmem:[%s2513 + $0x130] sm:$0xff]
  %v2553 = vld [vmem:[%s2513 + $0x138] sm:$0xff]
  %v2554 = vld [vmem:[%s2513 + $0x140] sm:$0xff]
  %v2555 = vld [vmem:[%s2513 + $0x148] sm:$0xff]
  %v2556 = vld [vmem:[%s2513 + $0x150] sm:$0xff]
  %v2557 = vld [vmem:[%s2513 + $0x158] sm:$0xff]
  %v2558 = vld [vmem:[%s2513 + $0x160] sm:$0xff]
  %v2559 = vld [vmem:[%s2513 + $0x168] sm:$0xff]
  %v2560 = vld [vmem:[%s2513 + $0x170] sm:$0xff]
  %v2561 = vld [vmem:[%s2513 + $0x178] sm:$0xff]
  %v2562 = vld [vmem:[%s2513 + $0x180] sm:$0xff]
  %v2563 = vld [vmem:[%s2513 + $0x188] sm:$0xff]
  %v2564 = vld [vmem:[%s2513 + $0x190] sm:$0xff]
  %v2565 = vld [vmem:[%s2513 + $0x198] sm:$0xff]
  %v2566 = vld [vmem:[%s2513 + $0x1a0] sm:$0xff]
  %v2567 = vld [vmem:[%s2513 + $0x1a8] sm:$0xff]
  %v2568 = vld [vmem:[%s2513 + $0x1b0] sm:$0xff]
  %v2569 = vld [vmem:[%s2513 + $0x1b8] sm:$0xff]
  %v2570 = vld [vmem:[%s2513 + $0x1c0] sm:$0xff]
  %v2571 = vld [vmem:[%s2513 + $0x1c8] sm:$0xff]
  %v2572 = vld [vmem:[%s2513 + $0x1d0] sm:$0xff]
  %v2573 = vld [vmem:[%s2513 + $0x1d8] sm:$0xff]
  %v2574 = vld [vmem:[%s2513 + $0x1e0] sm:$0xff]
  %v2575 = vld [vmem:[%s2513 + $0x1e8] sm:$0xff]
  %v2576 = vld [vmem:[%s2513 + $0x1f0] sm:$0xff]
  %v2577 = vld [vmem:[%s2513 + $0x1f8] sm:$0xff]
  %s2578 = scalar_lea.vmem %s5, 48
  %v2579 = vld [vmem:[%s2578] sm:$0xff]
  %v2580 = vld [vmem:[%s2578 + $0x8] sm:$0xff]
  %v2581 = vld [vmem:[%s2578 + $0x10] sm:$0xff]
  %v2582 = vld [vmem:[%s2578 + $0x18] sm:$0xff]
  %v2583 = vld [vmem:[%s2578 + $0x20] sm:$0xff]
  %v2584 = vld [vmem:[%s2578 + $0x28] sm:$0xff]
  %s2585 = scalar_lea.vmem %s6, 96
  %v2586 = vld [vmem:[%s2585] sm:$0xff]
  %v2587 = vld [vmem:[%s2585 + $0x8] sm:$0xff]
  %v2588 = vld [vmem:[%s2585 + $0x10] sm:$0xff]
  %v2589 = vld [vmem:[%s2585 + $0x18] sm:$0xff]
  %v2590 = vld [vmem:[%s2585 + $0x20] sm:$0xff]
  %v2591 = vld [vmem:[%s2585 + $0x28] sm:$0xff]
  %v2592 = vld [vmem:[%s2585 + $0x30] sm:$0xff]
  %v2593 = vld [vmem:[%s2585 + $0x38] sm:$0xff]
  %v2594 = vld [vmem:[%s2585 + $0x40] sm:$0xff]
  %v2595 = vld [vmem:[%s2585 + $0x48] sm:$0xff]
  %v2596 = vld [vmem:[%s2585 + $0x50] sm:$0xff]
  %v2597 = vld [vmem:[%s2585 + $0x58] sm:$0xff]
  %v2599 = vsel %vm33, %v2438, 0
  %v2602 = vsel %vm33, %v2439, 0
  %2604 = vmatprep.subr.mxu0 %v2442
  %2605 = vmatpush1.msra.mxu0 %v2441
  %2606 = vmatprep.subr.mxu0 %v2454
  %2607 = vmatpush1.msra.mxu0 %v2453
  %2608 = vmatprep.subr.mxu0 %v2466
  %2609 = vmatpush1.msra.mxu0 %v2465
  %2610 = vmatprep.subr.mxu0 %v2478
  %2611 = vmatpush1.msra.mxu0 %v2477
  %2612 = vmatprep.subr.mxu0 %v2490
  %2613 = vmatpush1.msra.mxu0 %v2489
  %2614 = vmatprep.subr.mxu0 %v2502
  %2615 = vmatpush1.msra.mxu0 %v2501
  %2616 = vmatprep.subr.mxu0 0.0
  %2617 = vmatpush1.msra.mxu0 0.0
  %2618 = vmatprep.subr.mxu0 0.0
  %2619 = vmatpush1.msra.mxu0 0.0
  %2620 = vmatprep.subr.mxu0 0.0
  %2621 = vmatpush1.msra.mxu0 0.0
  %2622 = vmatprep.subr.mxu0 0.0
  %2623 = vmatpush1.msra.mxu0 0.0
  %2624 = vmatprep.subr.mxu0 0.0
  %2625 = vmatpush1.msra.mxu0 0.0
  %2626 = vmatprep.subr.mxu0 0.0
  %2627 = vmatpush1.msra.mxu0 0.0
  %2628 = vmatprep.subr.mxu0 0.0
  %2629 = vmatpush1.msra.mxu0 0.0
  %2630 = vmatprep.subr.mxu0 0.0
  %2631 = vmatpush1.msra.mxu0 0.0
  %2632 = vmatprep.subr.mxu0 0.0
  %2633 = vmatpush1.msra.mxu0 0.0
  %2634 = vmatprep.subr.mxu0 0.0
  %2635 = vmatpush1.msra.mxu0 0.0
  %2636 = vmatprep.subr.mxu0 0.0
  %2637 = vmatpush1.msra.mxu0 0.0
  %2638 = vmatprep.subr.mxu0 0.0
  %2639 = vmatpush1.msra.mxu0 0.0
  %2640 = vmatprep.subr.mxu0 0.0
  %2641 = vmatpush1.msra.mxu0 0.0
  %2642 = vmatprep.subr.mxu0 0.0
  %2643 = vmatpush1.msra.mxu0 0.0
  %2644 = vmatprep.subr.mxu0 0.0
  %2645 = vmatpush1.msra.mxu0 0.0
  %2646 = vmatprep.subr.mxu0 0.0
  %2647 = vmatpush1.msra.mxu0 0.0
  %2648 = vmatprep.subr.mxu0 0.0
  %2649 = vmatpush1.msra.mxu0 0.0
  %2650 = vmatprep.subr.mxu0 0.0
  %2651 = vmatpush1.msra.mxu0 0.0
  %2652 = vmatprep.subr.mxu0 0.0
  %2653 = vmatpush1.msra.mxu0 0.0
  %2654 = vmatprep.subr.mxu0 0.0
  %2655 = vmatpush1.msra.mxu0 0.0
  %2656 = vmatprep.subr.mxu0 0.0
  %2657 = vmatpush1.msra.mxu0 0.0
  %2658 = vmatprep.subr.mxu0 0.0
  %2659 = vmatpush1.msra.mxu0 0.0
  %2660 = vmatprep.subr.mxu0 0.0
  %2661 = vmatpush1.msra.mxu0 0.0
  %2662 = vmatprep.subr.mxu0 0.0
  %2663 = vmatpush1.msra.mxu0 0.0
  %2664 = vmatprep.subr.mxu0 0.0
  %2665 = vmatpush1.msra.mxu0 0.0
  %2666 = vmatprep.subr.mxu0 0.0
  %2667 = vmatpush1.msra.mxu0 0.0
  %2668 = vmatprep.mubr.f32.mxu0 0.0
  %2669 = vmatmul.mubr.f32.gmra.mrb[0].mxu0 %v2599
  %v2670 = vpop.f32.mrb[0].mxu0
  %v2671 = vadd.f32 0.0, %v2670
  %v2672 = vpop.f32.mrb[0].mxu0
  %v2673 = vadd.f32 0.0, %v2672
  %2674 = vmatprep.mubr.f32.mxu0 0.0
  %2675 = vmatmul.mubr.f32.gmra.mrb[0].mxu0 %v2602
  %v2676 = vpop.f32.mrb[0].mxu0
  %v2677 = vadd.f32 0.0, %v2676
  %v2678 = vpop.f32.mrb[0].mxu0
  %v2679 = vadd.f32 0.0, %v2678
  %2680 = vdwg.mxu0
  %2681 = vmatprep.subr.mxu0 %v2444
  %2682 = vmatpush1.msra.mxu0 %v2443
  %2683 = vmatprep.subr.mxu0 %v2456
  %2684 = vmatpush1.msra.mxu0 %v2455
  %2685 = vmatprep.subr.mxu0 %v2468
  %2686 = vmatpush1.msra.mxu0 %v2467
  %2687 = vmatprep.subr.mxu0 %v2480
  %2688 = vmatpush1.msra.mxu0 %v2479
  %2689 = vmatprep.subr.mxu0 %v2492
  %2690 = vmatpush1.msra.mxu0 %v2491
  %2691 = vmatprep.subr.mxu0 %v2504
  %2692 = vmatpush1.msra.mxu0 %v2503
  %2693 = vmatprep.subr.mxu0 0.0
  %2694 = vmatpush1.msra.mxu0 0.0
  %2695 = vmatprep.subr.mxu0 0.0
  %2696 = vmatpush1.msra.mxu0 0.0
  %2697 = vmatprep.subr.mxu0 0.0
  %2698 = vmatpush1.msra.mxu0 0.0
  %2699 = vmatprep.subr.mxu0 0.0
  %2700 = vmatpush1.msra.mxu0 0.0
  %2701 = vmatprep.subr.mxu0 0.0
  %2702 = vmatpush1.msra.mxu0 0.0
  %2703 = vmatprep.subr.mxu0 0.0
  %2704 = vmatpush1.msra.mxu0 0.0
  %2705 = vmatprep.subr.mxu0 0.0
  %2706 = vmatpush1.msra.mxu0 0.0
  %2707 = vmatprep.subr.mxu0 0.0
  %2708 = vmatpush1.msra.mxu0 0.0
  %2709 = vmatprep.subr.mxu0 0.0
  %2710 = vmatpush1.msra.mxu0 0.0
  %2711 = vmatprep.subr.mxu0 0.0
  %2712 = vmatpush1.msra.mxu0 0.0
  %2713 = vmatprep.subr.mxu0 0.0
  %2714 = vmatpush1.msra.mxu0 0.0
  %2715 = vmatprep.subr.mxu0 0.0
  %2716 = vmatpush1.msra.mxu0 0.0
  %2717 = vmatprep.subr.mxu0 0.0
  %2718 = vmatpush1.msra.mxu0 0.0
  %2719 = vmatprep.subr.mxu0 0.0
  %2720 = vmatpush1.msra.mxu0 0.0
  %2721 = vmatprep.subr.mxu0 0.0
  %2722 = vmatpush1.msra.mxu0 0.0
  %2723 = vmatprep.subr.mxu0 0.0
  %2724 = vmatpush1.msra.mxu0 0.0
  %2725 = vmatprep.subr.mxu0 0.0
  %2726 = vmatpush1.msra.mxu0 0.0
  %2727 = vmatprep.subr.mxu0 0.0
  %2728 = vmatpush1.msra.mxu0 0.0
  %2729 = vmatprep.subr.mxu0 0.0
  %2730 = vmatpush1.msra.mxu0 0.0
  %2731 = vmatprep.subr.mxu0 0.0
  %2732 = vmatpush1.msra.mxu0 0.0
  %2733 = vmatprep.subr.mxu0 0.0
  %2734 = vmatpush1.msra.mxu0 0.0
  %2735 = vmatprep.subr.mxu0 0.0
  %2736 = vmatpush1.msra.mxu0 0.0
  %2737 = vmatprep.subr.mxu0 0.0
  %2738 = vmatpush1.msra.mxu0 0.0
  %2739 = vmatprep.subr.mxu0 0.0
  %2740 = vmatpush1.msra.mxu0 0.0
  %2741 = vmatprep.subr.mxu0 0.0
  %2742 = vmatpush1.msra.mxu0 0.0
  %2743 = vmatprep.subr.mxu0 0.0
  %2744 = vmatpush1.msra.mxu0 0.0
  %2745 = vmatprep.mubr.f32.mxu0 0.0
  %2746 = vmatmul.mubr.f32.gmra.mrb[0].mxu0 %v2599
  %v2747 = vpop.f32.mrb[0].mxu0
  %v2748 = vadd.f32 0.0, %v2747
  %v2749 = vpop.f32.mrb[0].mxu0
  %v2750 = vadd.f32 0.0, %v2749
  %2751 = vmatprep.mubr.f32.mxu0 0.0
  %2752 = vmatmul.mubr.f32.gmra.mrb[0].mxu0 %v2602
  %v2753 = vpop.f32.mrb[0].mxu0
  %v2754 = vadd.f32 0.0, %v2753
  %v2755 = vpop.f32.mrb[0].mxu0
  %v2756 = vadd.f32 0.0, %v2755
  %2757 = vdwg.mxu0
  %2758 = vmatprep.subr.mxu0 %v2446
  %2759 = vmatpush1.msra.mxu0 %v2445
  %2760 = vmatprep.subr.mxu0 %v2458
  %2761 = vmatpush1.msra.mxu0 %v2457
  %2762 = vmatprep.subr.mxu0 %v2470
  %2763 = vmatpush1.msra.mxu0 %v2469
  %2764 = vmatprep.subr.mxu0 %v2482
  %2765 = vmatpush1.msra.mxu0 %v2481
  %2766 = vmatprep.subr.mxu0 %v2494
  %2767 = vmatpush1.msra.mxu0 %v2493
  %2768 = vmatprep.subr.mxu0 %v2506
  %2769 = vmatpush1.msra.mxu0 %v2505
  %2770 = vmatprep.subr.mxu0 0.0
  %2771 = vmatpush1.msra.mxu0 0.0
  %2772 = vmatprep.subr.mxu0 0.0
  %2773 = vmatpush1.msra.mxu0 0.0
  %2774 = vmatprep.subr.mxu0 0.0
  %2775 = vmatpush1.msra.mxu0 0.0
  %2776 = vmatprep.subr.mxu0 0.0
  %2777 = vmatpush1.msra.mxu0 0.0
  %2778 = vmatprep.subr.mxu0 0.0
  %2779 = vmatpush1.msra.mxu0 0.0
  %2780 = vmatprep.subr.mxu0 0.0
  %2781 = vmatpush1.msra.mxu0 0.0
  %2782 = vmatprep.subr.mxu0 0.0
  %2783 = vmatpush1.msra.mxu0 0.0
  %2784 = vmatprep.subr.mxu0 0.0
  %2785 = vmatpush1.msra.mxu0 0.0
  %2786 = vmatprep.subr.mxu0 0.0
  %2787 = vmatpush1.msra.mxu0 0.0
  %2788 = vmatprep.subr.mxu0 0.0
  %2789 = vmatpush1.msra.mxu0 0.0
  %2790 = vmatprep.subr.mxu0 0.0
  %2791 = vmatpush1.msra.mxu0 0.0
  %2792 = vmatprep.subr.mxu0 0.0
  %2793 = vmatpush1.msra.mxu0 0.0
  %2794 = vmatprep.subr.mxu0 0.0
  %2795 = vmatpush1.msra.mxu0 0.0
  %2796 = vmatprep.subr.mxu0 0.0
  %2797 = vmatpush1.msra.mxu0 0.0
  %2798 = vmatprep.subr.mxu0 0.0
  %2799 = vmatpush1.msra.mxu0 0.0
  %2800 = vmatprep.subr.mxu0 0.0
  %2801 = vmatpush1.msra.mxu0 0.0
  %2802 = vmatprep.subr.mxu0 0.0
  %2803 = vmatpush1.msra.mxu0 0.0
  %2804 = vmatprep.subr.mxu0 0.0
  %2805 = vmatpush1.msra.mxu0 0.0
  %2806 = vmatprep.subr.mxu0 0.0
  %2807 = vmatpush1.msra.mxu0 0.0
  %2808 = vmatprep.subr.mxu0 0.0
  %2809 = vmatpush1.msra.mxu0 0.0
  %2810 = vmatprep.subr.mxu0 0.0
  %2811 = vmatpush1.msra.mxu0 0.0
  %2812 = vmatprep.subr.mxu0 0.0
  %2813 = vmatpush1.msra.mxu0 0.0
  %2814 = vmatprep.subr.mxu0 0.0
  %2815 = vmatpush1.msra.mxu0 0.0
  %2816 = vmatprep.subr.mxu0 0.0
  %2817 = vmatpush1.msra.mxu0 0.0
  %2818 = vmatprep.subr.mxu0 0.0
  %2819 = vmatpush1.msra.mxu0 0.0
  %2820 = vmatprep.subr.mxu0 0.0
  %2821 = vmatpush1.msra.mxu0 0.0
  %2822 = vmatprep.mubr.f32.mxu0 0.0
  %2823 = vmatmul.mubr.f32.gmra.mrb[0].mxu0 %v2599
  %v2824 = vpop.f32.mrb[0].mxu0
  %v2825 = vadd.f32 0.0, %v2824
  %v2826 = vpop.f32.mrb[0].mxu0
  %v2827 = vadd.f32 0.0, %v2826
  %2828 = vmatprep.mubr.f32.mxu0 0.0
  %2829 = vmatmul.mubr.f32.gmra.mrb[0].mxu0 %v2602
  %v2830 = vpop.f32.mrb[0].mxu0
  %v2831 = vadd.f32 0.0, %v2830
  %v2832 = vpop.f32.mrb[0].mxu0
  %v2833 = vadd.f32 0.0, %v2832
  %2834 = vdwg.mxu0
  %2835 = vmatprep.subr.mxu0 %v2448
  %2836 = vmatpush1.msra.mxu0 %v2447
  %2837 = vmatprep.subr.mxu0 %v2460
  %2838 = vmatpush1.msra.mxu0 %v2459
  %2839 = vmatprep.subr.mxu0 %v2472
  %2840 = vmatpush1.msra.mxu0 %v2471
  %2841 = vmatprep.subr.mxu0 %v2484
  %2842 = vmatpush1.msra.mxu0 %v2483
  %2843 = vmatprep.subr.mxu0 %v2496
  %2844 = vmatpush1.msra.mxu0 %v2495
  %2845 = vmatprep.subr.mxu0 %v2508
  %2846 = vmatpush1.msra.mxu0 %v2507
  %2847 = vmatprep.subr.mxu0 0.0
  %2848 = vmatpush1.msra.mxu0 0.0
  %2849 = vmatprep.subr.mxu0 0.0
  %2850 = vmatpush1.msra.mxu0 0.0
  %2851 = vmatprep.subr.mxu0 0.0
  %2852 = vmatpush1.msra.mxu0 0.0
  %2853 = vmatprep.subr.mxu0 0.0
  %2854 = vmatpush1.msra.mxu0 0.0
  %2855 = vmatprep.subr.mxu0 0.0
  %2856 = vmatpush1.msra.mxu0 0.0
  %2857 = vmatprep.subr.mxu0 0.0
  %2858 = vmatpush1.msra.mxu0 0.0
  %2859 = vmatprep.subr.mxu0 0.0
  %2860 = vmatpush1.msra.mxu0 0.0
  %2861 = vmatprep.subr.mxu0 0.0
  %2862 = vmatpush1.msra.mxu0 0.0
  %2863 = vmatprep.subr.mxu0 0.0
  %2864 = vmatpush1.msra.mxu0 0.0
  %2865 = vmatprep.subr.mxu0 0.0
  %2866 = vmatpush1.msra.mxu0 0.0
  %2867 = vmatprep.subr.mxu0 0.0
  %2868 = vmatpush1.msra.mxu0 0.0
  %2869 = vmatprep.subr.mxu0 0.0
  %2870 = vmatpush1.msra.mxu0 0.0
  %2871 = vmatprep.subr.mxu0 0.0
  %2872 = vmatpush1.msra.mxu0 0.0
  %2873 = vmatprep.subr.mxu0 0.0
  %2874 = vmatpush1.msra.mxu0 0.0
  %2875 = vmatprep.subr.mxu0 0.0
  %2876 = vmatpush1.msra.mxu0 0.0
  %2877 = vmatprep.subr.mxu0 0.0
  %2878 = vmatpush1.msra.mxu0 0.0
  %2879 = vmatprep.subr.mxu0 0.0
  %2880 = vmatpush1.msra.mxu0 0.0
  %2881 = vmatprep.subr.mxu0 0.0
  %2882 = vmatpush1.msra.mxu0 0.0
  %2883 = vmatprep.subr.mxu0 0.0
  %2884 = vmatpush1.msra.mxu0 0.0
  %2885 = vmatprep.subr.mxu0 0.0
  %2886 = vmatpush1.msra.mxu0 0.0
  %2887 = vmatprep.subr.mxu0 0.0
  %2888 = vmatpush1.msra.mxu0 0.0
  %2889 = vmatprep.subr.mxu0 0.0
  %2890 = vmatpush1.msra.mxu0 0.0
  %2891 = vmatprep.subr.mxu0 0.0
  %2892 = vmatpush1.msra.mxu0 0.0
  %2893 = vmatprep.subr.mxu0 0.0
  %2894 = vmatpush1.msra.mxu0 0.0
  %2895 = vmatprep.subr.mxu0 0.0
  %2896 = vmatpush1.msra.mxu0 0.0
  %2897 = vmatprep.subr.mxu0 0.0
  %2898 = vmatpush1.msra.mxu0 0.0
  %2899 = vmatprep.mubr.f32.mxu0 0.0
  %2900 = vmatmul.mubr.f32.gmra.mrb[0].mxu0 %v2599
  %v2901 = vpop.f32.mrb[0].mxu0
  %v2902 = vadd.f32 0.0, %v2901
  %v2903 = vpop.f32.mrb[0].mxu0
  %v2904 = vadd.f32 0.0, %v2903
  %2905 = vmatprep.mubr.f32.mxu0 0.0
  %2906 = vmatmul.mubr.f32.gmra.mrb[0].mxu0 %v2602
  %v2907 = vpop.f32.mrb[0].mxu0
  %v2908 = vadd.f32 0.0, %v2907
  %v2909 = vpop.f32.mrb[0].mxu0
  %v2910 = vadd.f32 0.0, %v2909
  %2911 = vdwg.mxu0
  %2912 = vmatprep.subr.mxu0 %v2450
  %2913 = vmatpush1.msra.mxu0 %v2449
  %2914 = vmatprep.subr.mxu0 %v2462
  %2915 = vmatpush1.msra.mxu0 %v2461
  %2916 = vmatprep.subr.mxu0 %v2474
  %2917 = vmatpush1.msra.mxu0 %v2473
  %2918 = vmatprep.subr.mxu0 %v2486
  %2919 = vmatpush1.msra.mxu0 %v2485
  %2920 = vmatprep.subr.mxu0 %v2498
  %2921 = vmatpush1.msra.mxu0 %v2497
  %2922 = vmatprep.subr.mxu0 %v2510
  %2923 = vmatpush1.msra.mxu0 %v2509
  %2924 = vmatprep.subr.mxu0 0.0
  %2925 = vmatpush1.msra.mxu0 0.0
  %2926 = vmatprep.subr.mxu0 0.0
  %2927 = vmatpush1.msra.mxu0 0.0
  %2928 = vmatprep.subr.mxu0 0.0
  %2929 = vmatpush1.msra.mxu0 0.0
  %2930 = vmatprep.subr.mxu0 0.0
  %2931 = vmatpush1.msra.mxu0 0.0
  %2932 = vmatprep.subr.mxu0 0.0
  %2933 = vmatpush1.msra.mxu0 0.0
  %2934 = vmatprep.subr.mxu0 0.0
  %2935 = vmatpush1.msra.mxu0 0.0
  %2936 = vmatprep.subr.mxu0 0.0
  %2937 = vmatpush1.msra.mxu0 0.0
  %2938 = vmatprep.subr.mxu0 0.0
  %2939 = vmatpush1.msra.mxu0 0.0
  %2940 = vmatprep.subr.mxu0 0.0
  %2941 = vmatpush1.msra.mxu0 0.0
  %2942 = vmatprep.subr.mxu0 0.0
  %2943 = vmatpush1.msra.mxu0 0.0
  %2944 = vmatprep.subr.mxu0 0.0
  %2945 = vmatpush1.msra.mxu0 0.0
  %2946 = vmatprep.subr.mxu0 0.0
  %2947 = vmatpush1.msra.mxu0 0.0
  %2948 = vmatprep.subr.mxu0 0.0
  %2949 = vmatpush1.msra.mxu0 0.0
  %2950 = vmatprep.subr.mxu0 0.0
  %2951 = vmatpush1.msra.mxu0 0.0
  %2952 = vmatprep.subr.mxu0 0.0
  %2953 = vmatpush1.msra.mxu0 0.0
  %2954 = vmatprep.subr.mxu0 0.0
  %2955 = vmatpush1.msra.mxu0 0.0
  %2956 = vmatprep.subr.mxu0 0.0
  %2957 = vmatpush1.msra.mxu0 0.0
  %2958 = vmatprep.subr.mxu0 0.0
  %2959 = vmatpush1.msra.mxu0 0.0
  %2960 = vmatprep.subr.mxu0 0.0
  %2961 = vmatpush1.msra.mxu0 0.0
  %2962 = vmatprep.subr.mxu0 0.0
  %2963 = vmatpush1.msra.mxu0 0.0
  %2964 = vmatprep.subr.mxu0 0.0
  %2965 = vmatpush1.msra.mxu0 0.0
  %2966 = vmatprep.subr.mxu0 0.0
  %2967 = vmatpush1.msra.mxu0 0.0
  %2968 = vmatprep.subr.mxu0 0.0
  %2969 = vmatpush1.msra.mxu0 0.0
  %2970 = vmatprep.subr.mxu0 0.0
  %2971 = vmatpush1.msra.mxu0 0.0
  %2972 = vmatprep.subr.mxu0 0.0
  %2973 = vmatpush1.msra.mxu0 0.0
  %2974 = vmatprep.subr.mxu0 0.0
  %2975 = vmatpush1.msra.mxu0 0.0
  %2976 = vmatprep.mubr.f32.mxu0 0.0
  %2977 = vmatmul.mubr.f32.gmra.mrb[0].mxu0 %v2599
  %v2978 = vpop.f32.mrb[0].mxu0
  %v2979 = vadd.f32 0.0, %v2978
  %v2980 = vpop.f32.mrb[0].mxu0
  %v2981 = vadd.f32 0.0, %v2980
  %2982 = vmatprep.mubr.f32.mxu0 0.0
  %2983 = vmatmul.mubr.f32.gmra.mrb[0].mxu0 %v2602
  %v2984 = vpop.f32.mrb[0].mxu0
  %v2985 = vadd.f32 0.0, %v2984
  %v2986 = vpop.f32.mrb[0].mxu0
  %v2987 = vadd.f32 0.0, %v2986
  %2988 = vdwg.mxu0
  %2989 = vmatprep.subr.mxu0 %v2452
  %2990 = vmatpush1.msra.mxu0 %v2451
  %2991 = vmatprep.subr.mxu0 %v2464
  %2992 = vmatpush1.msra.mxu0 %v2463
  %2993 = vmatprep.subr.mxu0 %v2476
  %2994 = vmatpush1.msra.mxu0 %v2475
  %2995 = vmatprep.subr.mxu0 %v2488
  %2996 = vmatpush1.msra.mxu0 %v2487
  %2997 = vmatprep.subr.mxu0 %v2500
  %2998 = vmatpush1.msra.mxu0 %v2499
  %2999 = vmatprep.subr.mxu0 %v2512
  %3000 = vmatpush1.msra.mxu0 %v2511
  %3001 = vmatprep.subr.mxu0 0.0
  %3002 = vmatpush1.msra.mxu0 0.0
  %3003 = vmatprep.subr.mxu0 0.0
  %3004 = vmatpush1.msra.mxu0 0.0
  %3005 = vmatprep.subr.mxu0 0.0
  %3006 = vmatpush1.msra.mxu0 0.0
  %3007 = vmatprep.subr.mxu0 0.0
  %3008 = vmatpush1.msra.mxu0 0.0
  %3009 = vmatprep.subr.mxu0 0.0
  %3010 = vmatpush1.msra.mxu0 0.0
  %3011 = vmatprep.subr.mxu0 0.0
  %3012 = vmatpush1.msra.mxu0 0.0
  %3013 = vmatprep.subr.mxu0 0.0
  %3014 = vmatpush1.msra.mxu0 0.0
  %3015 = vmatprep.subr.mxu0 0.0
  %3016 = vmatpush1.msra.mxu0 0.0
  %3017 = vmatprep.subr.mxu0 0.0
  %3018 = vmatpush1.msra.mxu0 0.0
  %3019 = vmatprep.subr.mxu0 0.0
  %3020 = vmatpush1.msra.mxu0 0.0
  %3021 = vmatprep.subr.mxu0 0.0
  %3022 = vmatpush1.msra.mxu0 0.0
  %3023 = vmatprep.subr.mxu0 0.0
  %3024 = vmatpush1.msra.mxu0 0.0
  %3025 = vmatprep.subr.mxu0 0.0
  %3026 = vmatpush1.msra.mxu0 0.0
  %3027 = vmatprep.subr.mxu0 0.0
  %3028 = vmatpush1.msra.mxu0 0.0
  %3029 = vmatprep.subr.mxu0 0.0
  %3030 = vmatpush1.msra.mxu0 0.0
  %3031 = vmatprep.subr.mxu0 0.0
  %3032 = vmatpush1.msra.mxu0 0.0
  %3033 = vmatprep.subr.mxu0 0.0
  %3034 = vmatpush1.msra.mxu0 0.0
  %3035 = vmatprep.subr.mxu0 0.0
  %3036 = vmatpush1.msra.mxu0 0.0
  %3037 = vmatprep.subr.mxu0 0.0
  %3038 = vmatpush1.msra.mxu0 0.0
  %3039 = vmatprep.subr.mxu0 0.0
  %3040 = vmatpush1.msra.mxu0 0.0
  %3041 = vmatprep.subr.mxu0 0.0
  %3042 = vmatpush1.msra.mxu0 0.0
  %3043 = vmatprep.subr.mxu0 0.0
  %3044 = vmatpush1.msra.mxu0 0.0
  %3045 = vmatprep.subr.mxu0 0.0
  %3046 = vmatpush1.msra.mxu0 0.0
  %3047 = vmatprep.subr.mxu0 0.0
  %3048 = vmatpush1.msra.mxu0 0.0
  %3049 = vmatprep.subr.mxu0 0.0
  %3050 = vmatpush1.msra.mxu0 0.0
  %3051 = vmatprep.subr.mxu0 0.0
  %3052 = vmatpush1.msra.mxu0 0.0
  %3053 = vmatprep.mubr.f32.mxu0 0.0
  %3054 = vmatmul.mubr.f32.gmra.mrb[0].mxu0 %v2599
  %v3055 = vpop.f32.mrb[0].mxu0
  %v3056 = vadd.f32 0.0, %v3055
  %v3057 = vpop.f32.mrb[0].mxu0
  %v3058 = vadd.f32 0.0, %v3057
  %3059 = vmatprep.mubr.f32.mxu0 0.0
  %3060 = vmatmul.mubr.f32.gmra.mrb[0].mxu0 %v2602
  %v3061 = vpop.f32.mrb[0].mxu0
  %v3062 = vadd.f32 0.0, %v3061
  %v3063 = vpop.f32.mrb[0].mxu0
  %v3064 = vadd.f32 0.0, %v3063
  %3065 = vdwg.mxu0
  %s3066 = scalar_lea.vmem %s2, 36
  %v3067 = vld [vmem:[%s3066] ss:$8 sm:$0xf]
  %v3069 = vlaneseq
  %v3070 = vshrl.u32 %v3069, 7
  %v3071 = vsub.s32 0, %v3070
  %v3072 = vrot.slane %v3067, %v3071
  %v3073 = vlaneseq
  %v3074 = vshrl.u32 %v3073, 7
  %v3075 = vsub.s32 1, %v3074
  %v3076 = vrot.slane %v3067, %v3075
  %v3077 = vlaneseq
  %v3078 = vshrl.u32 %v3077, 7
  %v3079 = vsub.s32 2, %v3078
  %v3080 = vrot.slane %v3067, %v3079
  %v3081 = vlaneseq
  %v3082 = vshrl.u32 %v3081, 7
  %v3083 = vsub.s32 3, %v3082
  %v3084 = vrot.slane %v3067, %v3083
  %v3089 = vadd.f32 %v2671, %v3072
  %v3090 = vadd.f32 %v2673, %v3076
  %v3091 = vadd.f32 %v2748, %v3080
  %v3092 = vadd.f32 %v2750, %v3084
  %v3093 = vadd.f32 %v2677, %v3072
  %v3094 = vadd.f32 %v2679, %v3076
  %v3095 = vadd.f32 %v2754, %v3080
  %v3096 = vadd.f32 %v2756, %v3084
  %s3097 = scalar_lea.vmem %s2, 37
  %v3098 = vld [vmem:[%s3097] ss:$8 sm:$0xf]
  %v3100 = vlaneseq
  %v3101 = vshrl.u32 %v3100, 7
  %v3102 = vsub.s32 0, %v3101
  %v3103 = vrot.slane %v3098, %v3102
  %v3104 = vlaneseq
  %v3105 = vshrl.u32 %v3104, 7
  %v3106 = vsub.s32 1, %v3105
  %v3107 = vrot.slane %v3098, %v3106
  %v3108 = vlaneseq
  %v3109 = vshrl.u32 %v3108, 7
  %v3110 = vsub.s32 2, %v3109
  %v3111 = vrot.slane %v3098, %v3110
  %v3112 = vlaneseq
  %v3113 = vshrl.u32 %v3112, 7
  %v3114 = vsub.s32 3, %v3113
  %v3115 = vrot.slane %v3098, %v3114
  %v3120 = vadd.f32 %v2825, %v3103
  %v3121 = vadd.f32 %v2827, %v3107
  %v3122 = vadd.f32 %v2902, %v3111
  %v3123 = vadd.f32 %v2904, %v3115
  %v3124 = vadd.f32 %v2831, %v3103
  %v3125 = vadd.f32 %v2833, %v3107
  %v3126 = vadd.f32 %v2908, %v3111
  %v3127 = vadd.f32 %v2910, %v3115
  %s3128 = scalar_lea.vmem %s2, 38
  %v3129 = vld [vmem:[%s3128] ss:$8 sm:$0xf]
  %v3131 = vlaneseq
  %v3132 = vshrl.u32 %v3131, 7
  %v3133 = vsub.s32 0, %v3132
  %v3134 = vrot.slane %v3129, %v3133
  %v3135 = vlaneseq
  %v3136 = vshrl.u32 %v3135, 7
  %v3137 = vsub.s32 1, %v3136
  %v3138 = vrot.slane %v3129, %v3137
  %v3139 = vlaneseq
  %v3140 = vshrl.u32 %v3139, 7
  %v3141 = vsub.s32 2, %v3140
  %v3142 = vrot.slane %v3129, %v3141
  %v3143 = vlaneseq
  %v3144 = vshrl.u32 %v3143, 7
  %v3145 = vsub.s32 3, %v3144
  %v3146 = vrot.slane %v3129, %v3145
  %v3151 = vadd.f32 %v2979, %v3134
  %v3152 = vadd.f32 %v2981, %v3138
  %v3153 = vadd.f32 %v3056, %v3142
  %v3154 = vadd.f32 %v3058, %v3146
  %v3155 = vadd.f32 %v2985, %v3134
  %v3156 = vadd.f32 %v2987, %v3138
  %v3157 = vadd.f32 %v3062, %v3142
  %v3158 = vadd.f32 %v3064, %v3146
  %3159 = vmatprep.subr.mxu0 0.0
  %3160 = vmatpush1.xpose.msra.mxu0 %v3120
  %3161 = vmatprep.subr.mxu0 0.0
  %3162 = vmatpush1.xpose.msra.mxu0 0.0
  %3163 = vmatprep.subr.mxu0 0.0
  %3164 = vmatpush1.xpose.msra.mxu0 0.0
  %3165 = vmatprep.subr.mxu0 0.0
  %3166 = vmatpush1.xpose.msra.mxu0 0.0
  %3167 = vmatprep.subr.mxu0 0.0
  %3168 = vmatpush1.xpose.msra.mxu0 0.0
  %3169 = vmatprep.subr.mxu0 0.0
  %3170 = vmatpush1.xpose.msra.mxu0 0.0
  %3171 = vmatprep.subr.mxu0 0.0
  %3172 = vmatpush1.xpose.msra.mxu0 0.0
  %3173 = vmatprep.subr.mxu0 0.0
  %3174 = vmatpush1.xpose.msra.mxu0 0.0
  %3175 = vmatprep.subr.mxu0 0.0
  %3176 = vmatpush1.xpose.msra.mxu0 0.0
  %3177 = vmatprep.subr.mxu0 0.0
  %3178 = vmatpush1.xpose.msra.mxu0 0.0
  %3179 = vmatprep.subr.mxu0 0.0
  %3180 = vmatpush1.xpose.msra.mxu0 0.0
  %3181 = vmatprep.subr.mxu0 0.0
  %3182 = vmatpush1.xpose.msra.mxu0 0.0
  %3183 = vmatprep.subr.mxu0 0.0
  %3184 = vmatpush1.xpose.msra.mxu0 0.0
  %3185 = vmatprep.subr.mxu0 0.0
  %3186 = vmatpush1.xpose.msra.mxu0 0.0
  %3187 = vmatprep.subr.mxu0 0.0
  %3188 = vmatpush1.xpose.msra.mxu0 0.0
  %3189 = vmatprep.subr.mxu0 0.0
  %3190 = vmatpush1.xpose.msra.mxu0 0.0
  %3191 = vmatprep.subr.mxu0 0.0
  %3192 = vmatpush1.xpose.msra.mxu0 0.0
  %3193 = vmatprep.subr.mxu0 0.0
  %3194 = vmatpush1.xpose.msra.mxu0 0.0
  %3195 = vmatprep.subr.mxu0 0.0
  %3196 = vmatpush1.xpose.msra.mxu0 0.0
  %3197 = vmatprep.subr.mxu0 0.0
  %3198 = vmatpush1.xpose.msra.mxu0 0.0
  %3199 = vmatprep.subr.mxu0 0.0
  %3200 = vmatpush1.xpose.msra.mxu0 0.0
  %3201 = vmatprep.subr.mxu0 0.0
  %3202 = vmatpush1.xpose.msra.mxu0 0.0
  %3203 = vmatprep.subr.mxu0 0.0
  %3204 = vmatpush1.xpose.msra.mxu0 0.0
  %3205 = vmatprep.subr.mxu0 0.0
  %3206 = vmatpush1.xpose.msra.mxu0 0.0
  %3207 = vmatprep.subr.mxu0 0.0
  %3208 = vmatpush1.xpose.msra.mxu0 0.0
  %3209 = vmatprep.subr.mxu0 0.0
  %3210 = vmatpush1.xpose.msra.mxu0 0.0
  %3211 = vmatprep.subr.mxu0 0.0
  %3212 = vmatpush1.xpose.msra.mxu0 0.0
  %3213 = vmatprep.subr.mxu0 0.0
  %3214 = vmatpush1.xpose.msra.mxu0 0.0
  %3215 = vmatprep.subr.mxu0 0.0
  %3216 = vmatpush1.xpose.msra.mxu0 0.0
  %3217 = vmatprep.subr.mxu0 0.0
  %3218 = vmatpush1.xpose.msra.mxu0 0.0
  %3219 = vmatprep.subr.mxu0 0.0
  %3220 = vmatpush1.xpose.msra.mxu0 0.0
  %3221 = vmatprep.subr.mxu0 0.0
  %3222 = vmatpush1.xpose.msra.mxu0 0.0
  %3223 = vmatprep.mubr.f32.mxu0 0.0
  %3224 = vmatmul.mubr.f32.gmra.mrb[0].mxu0 %v3089
  %v3225 = vpop.f32.mrb[0].mxu0
  %v3226 = vadd.f32 0.0, %v3225
  %v3227 = vpop.f32.mrb[0].mxu0
  %3228 = vdwg.mxu0
  %v3229 = vmul.f32 %v3226, 0.28867513
  %v3230 = vadd.f32 %v3229, %v69
  %v3231 = vsel %vm861, %v3230, -inf
  %3232 = vmax.xlane.f32.xlu0 %v3231
  %v3233 = vpop.xlane.xlu0 %3232
  %v3234 = vsub.f32 %v3230, %v3233
  %v3235 = vmul.f32 %v3234, 1.442695
  %v3236 = vpow.pop %v3235
  %v3237 = vsel %vm861, %v3236, 0.0
  %3238 = vadd.xlane.f32.xlu0 %v3237
  %v3239 = vpop.xlane.xlu0 %3238
  %v3240 = vrcp.pop %v3239
  %v3241 = vmul.f32 %v3236, %v3240
  %v3243 = vsel %vm861, %v3241, 0
  %3245 = vmatprep.subr.mxu0 0.0
  %3246 = vmatpush1.msra.mxu0 %v3151
  %3247 = vmatprep.subr.mxu0 0.0
  %3248 = vmatpush1.msra.mxu0 0.0
  %3249 = vmatprep.subr.mxu0 0.0
  %3250 = vmatpush1.msra.mxu0 0.0
  %3251 = vmatprep.subr.mxu0 0.0
  %3252 = vmatpush1.msra.mxu0 0.0
  %3253 = vmatprep.subr.mxu0 0.0
  %3254 = vmatpush1.msra.mxu0 0.0
  %3255 = vmatprep.subr.mxu0 0.0
  %3256 = vmatpush1.msra.mxu0 0.0
  %3257 = vmatprep.subr.mxu0 0.0
  %3258 = vmatpush1.msra.mxu0 0.0
  %3259 = vmatprep.subr.mxu0 0.0
  %3260 = vmatpush1.msra.mxu0 0.0
  %3261 = vmatprep.subr.mxu0 0.0
  %3262 = vmatpush1.msra.mxu0 0.0
  %3263 = vmatprep.subr.mxu0 0.0
  %3264 = vmatpush1.msra.mxu0 0.0
  %3265 = vmatprep.subr.mxu0 0.0
  %3266 = vmatpush1.msra.mxu0 0.0
  %3267 = vmatprep.subr.mxu0 0.0
  %3268 = vmatpush1.msra.mxu0 0.0
  %3269 = vmatprep.subr.mxu0 0.0
  %3270 = vmatpush1.msra.mxu0 0.0
  %3271 = vmatprep.subr.mxu0 0.0
  %3272 = vmatpush1.msra.mxu0 0.0
  %3273 = vmatprep.subr.mxu0 0.0
  %3274 = vmatpush1.msra.mxu0 0.0
  %3275 = vmatprep.subr.mxu0 0.0
  %3276 = vmatpush1.msra.mxu0 0.0
  %3277 = vmatprep.subr.mxu0 0.0
  %3278 = vmatpush1.msra.mxu0 0.0
  %3279 = vmatprep.subr.mxu0 0.0
  %3280 = vmatpush1.msra.mxu0 0.0
  %3281 = vmatprep.subr.mxu0 0.0
  %3282 = vmatpush1.msra.mxu0 0.0
  %3283 = vmatprep.subr.mxu0 0.0
  %3284 = vmatpush1.msra.mxu0 0.0
  %3285 = vmatprep.subr.mxu0 0.0
  %3286 = vmatpush1.msra.mxu0 0.0
  %3287 = vmatprep.subr.mxu0 0.0
  %3288 = vmatpush1.msra.mxu0 0.0
  %3289 = vmatprep.subr.mxu0 0.0
  %3290 = vmatpush1.msra.mxu0 0.0
  %3291 = vmatprep.subr.mxu0 0.0
  %3292 = vmatpush1.msra.mxu0 0.0
  %3293 = vmatprep.subr.mxu0 0.0
  %3294 = vmatpush1.msra.mxu0 0.0
  %3295 = vmatprep.subr.mxu0 0.0
  %3296 = vmatpush1.msra.mxu0 0.0
  %3297 = vmatprep.subr.mxu0 0.0
  %3298 = vmatpush1.msra.mxu0 0.0
  %3299 = vmatprep.subr.mxu0 0.0
  %3300 = vmatpush1.msra.mxu0 0.0
  %3301 = vmatprep.subr.mxu0 0.0
  %3302 = vmatpush1.msra.mxu0 0.0
  %3303 = vmatprep.subr.mxu0 0.0
  %3304 = vmatpush1.msra.mxu0 0.0
  %3305 = vmatprep.subr.mxu0 0.0
  %3306 = vmatpush1.msra.mxu0 0.0
  %3307 = vmatprep.subr.mxu0 0.0
  %3308 = vmatpush1.msra.mxu0 0.0
  %3309 = vmatprep.mubr.f32.mxu0 0.0
  %3310 = vmatmul.mubr.f32.gmra.mrb[0].mxu0 %v3243
  %v3311 = vpop.f32.mrb[0].mxu0
  %v3312 = vadd.f32 0.0, %v3311
  %v3313 = vpop.f32.mrb[0].mxu0
  %3314 = vdwg.mxu0
  %3315 = vmatprep.subr.mxu0 0.0
  %3316 = vmatpush1.xpose.msra.mxu0 %v3121
  %3317 = vmatprep.subr.mxu0 0.0
  %3318 = vmatpush1.xpose.msra.mxu0 0.0
  %3319 = vmatprep.subr.mxu0 0.0
  %3320 = vmatpush1.xpose.msra.mxu0 0.0
  %3321 = vmatprep.subr.mxu0 0.0
  %3322 = vmatpush1.xpose.msra.mxu0 0.0
  %3323 = vmatprep.subr.mxu0 0.0
  %3324 = vmatpush1.xpose.msra.mxu0 0.0
  %3325 = vmatprep.subr.mxu0 0.0
  %3326 = vmatpush1.xpose.msra.mxu0 0.0
  %3327 = vmatprep.subr.mxu0 0.0
  %3328 = vmatpush1.xpose.msra.mxu0 0.0
  %3329 = vmatprep.subr.mxu0 0.0
  %3330 = vmatpush1.xpose.msra.mxu0 0.0
  %3331 = vmatprep.subr.mxu0 0.0
  %3332 = vmatpush1.xpose.msra.mxu0 0.0
  %3333 = vmatprep.subr.mxu0 0.0
  %3334 = vmatpush1.xpose.msra.mxu0 0.0
  %3335 = vmatprep.subr.mxu0 0.0
  %3336 = vmatpush1.xpose.msra.mxu0 0.0
  %3337 = vmatprep.subr.mxu0 0.0
  %3338 = vmatpush1.xpose.msra.mxu0 0.0
  %3339 = vmatprep.subr.mxu0 0.0
  %3340 = vmatpush1.xpose.msra.mxu0 0.0
  %3341 = vmatprep.subr.mxu0 0.0
  %3342 = vmatpush1.xpose.msra.mxu0 0.0
  %3343 = vmatprep.subr.mxu0 0.0
  %3344 = vmatpush1.xpose.msra.mxu0 0.0
  %3345 = vmatprep.subr.mxu0 0.0
  %3346 = vmatpush1.xpose.msra.mxu0 0.0
  %3347 = vmatprep.subr.mxu0 0.0
  %3348 = vmatpush1.xpose.msra.mxu0 0.0
  %3349 = vmatprep.subr.mxu0 0.0
  %3350 = vmatpush1.xpose.msra.mxu0 0.0
  %3351 = vmatprep.subr.mxu0 0.0
  %3352 = vmatpush1.xpose.msra.mxu0 0.0
  %3353 = vmatprep.subr.mxu0 0.0
  %3354 = vmatpush1.xpose.msra.mxu0 0.0
  %3355 = vmatprep.subr.mxu0 0.0
  %3356 = vmatpush1.xpose.msra.mxu0 0.0
  %3357 = vmatprep.subr.mxu0 0.0
  %3358 = vmatpush1.xpose.msra.mxu0 0.0
  %3359 = vmatprep.subr.mxu0 0.0
  %3360 = vmatpush1.xpose.msra.mxu0 0.0
  %3361 = vmatprep.subr.mxu0 0.0
  %3362 = vmatpush1.xpose.msra.mxu0 0.0
  %3363 = vmatprep.subr.mxu0 0.0
  %3364 = vmatpush1.xpose.msra.mxu0 0.0
  %3365 = vmatprep.subr.mxu0 0.0
  %3366 = vmatpush1.xpose.msra.mxu0 0.0
  %3367 = vmatprep.subr.mxu0 0.0
  %3368 = vmatpush1.xpose.msra.mxu0 0.0
  %3369 = vmatprep.subr.mxu0 0.0
  %3370 = vmatpush1.xpose.msra.mxu0 0.0
  %3371 = vmatprep.subr.mxu0 0.0
  %3372 = vmatpush1.xpose.msra.mxu0 0.0
  %3373 = vmatprep.subr.mxu0 0.0
  %3374 = vmatpush1.xpose.msra.mxu0 0.0
  %3375 = vmatprep.subr.mxu0 0.0
  %3376 = vmatpush1.xpose.msra.mxu0 0.0
  %3377 = vmatprep.subr.mxu0 0.0
  %3378 = vmatpush1.xpose.msra.mxu0 0.0
  %3379 = vmatprep.mubr.f32.mxu0 0.0
  %3380 = vmatmul.mubr.f32.gmra.mrb[0].mxu0 %v3090
  %v3381 = vpop.f32.mrb[0].mxu0
  %v3382 = vadd.f32 0.0, %v3381
  %v3383 = vpop.f32.mrb[0].mxu0
  %3384 = vdwg.mxu0
  %v3385 = vmul.f32 %v3382, 0.28867513
  %v3386 = vadd.f32 %v3385, %v69
  %v3387 = vsel %vm861, %v3386, -inf
  %3388 = vmax.xlane.f32.xlu0 %v3387
  %v3389 = vpop.xlane.xlu0 %3388
  %v3390 = vsub.f32 %v3386, %v3389
  %v3391 = vmul.f32 %v3390, 1.442695
  %v3392 = vpow.pop %v3391
  %v3393 = vsel %vm861, %v3392, 0.0
  %3394 = vadd.xlane.f32.xlu0 %v3393
  %v3395 = vpop.xlane.xlu0 %3394
  %v3396 = vrcp.pop %v3395
  %v3397 = vmul.f32 %v3392, %v3396
  %v3399 = vsel %vm861, %v3397, 0
  %3401 = vmatprep.subr.mxu0 0.0
  %3402 = vmatpush1.msra.mxu0 %v3152
  %3403 = vmatprep.subr.mxu0 0.0
  %3404 = vmatpush1.msra.mxu0 0.0
  %3405 = vmatprep.subr.mxu0 0.0
  %3406 = vmatpush1.msra.mxu0 0.0
  %3407 = vmatprep.subr.mxu0 0.0
  %3408 = vmatpush1.msra.mxu0 0.0
  %3409 = vmatprep.subr.mxu0 0.0
  %3410 = vmatpush1.msra.mxu0 0.0
  %3411 = vmatprep.subr.mxu0 0.0
  %3412 = vmatpush1.msra.mxu0 0.0
  %3413 = vmatprep.subr.mxu0 0.0
  %3414 = vmatpush1.msra.mxu0 0.0
  %3415 = vmatprep.subr.mxu0 0.0
  %3416 = vmatpush1.msra.mxu0 0.0
  %3417 = vmatprep.subr.mxu0 0.0
  %3418 = vmatpush1.msra.mxu0 0.0
  %3419 = vmatprep.subr.mxu0 0.0
  %3420 = vmatpush1.msra.mxu0 0.0
  %3421 = vmatprep.subr.mxu0 0.0
  %3422 = vmatpush1.msra.mxu0 0.0
  %3423 = vmatprep.subr.mxu0 0.0
  %3424 = vmatpush1.msra.mxu0 0.0
  %3425 = vmatprep.subr.mxu0 0.0
  %3426 = vmatpush1.msra.mxu0 0.0
  %3427 = vmatprep.subr.mxu0 0.0
  %3428 = vmatpush1.msra.mxu0 0.0
  %3429 = vmatprep.subr.mxu0 0.0
  %3430 = vmatpush1.msra.mxu0 0.0
  %3431 = vmatprep.subr.mxu0 0.0
  %3432 = vmatpush1.msra.mxu0 0.0
  %3433 = vmatprep.subr.mxu0 0.0
  %3434 = vmatpush1.msra.mxu0 0.0
  %3435 = vmatprep.subr.mxu0 0.0
  %3436 = vmatpush1.msra.mxu0 0.0
  %3437 = vmatprep.subr.mxu0 0.0
  %3438 = vmatpush1.msra.mxu0 0.0
  %3439 = vmatprep.subr.mxu0 0.0
  %3440 = vmatpush1.msra.mxu0 0.0
  %3441 = vmatprep.subr.mxu0 0.0
  %3442 = vmatpush1.msra.mxu0 0.0
  %3443 = vmatprep.subr.mxu0 0.0
  %3444 = vmatpush1.msra.mxu0 0.0
  %3445 = vmatprep.subr.mxu0 0.0
  %3446 = vmatpush1.msra.mxu0 0.0
  %3447 = vmatprep.subr.mxu0 0.0
  %3448 = vmatpush1.msra.mxu0 0.0
  %3449 = vmatprep.subr.mxu0 0.0
  %3450 = vmatpush1.msra.mxu0 0.0
  %3451 = vmatprep.subr.mxu0 0.0
  %3452 = vmatpush1.msra.mxu0 0.0
  %3453 = vmatprep.subr.mxu0 0.0
  %3454 = vmatpush1.msra.mxu0 0.0
  %3455 = vmatprep.subr.mxu0 0.0
  %3456 = vmatpush1.msra.mxu0 0.0
  %3457 = vmatprep.subr.mxu0 0.0
  %3458 = vmatpush1.msra.mxu0 0.0
  %3459 = vmatprep.subr.mxu0 0.0
  %3460 = vmatpush1.msra.mxu0 0.0
  %3461 = vmatprep.subr.mxu0 0.0
  %3462 = vmatpush1.msra.mxu0 0.0
  %3463 = vmatprep.subr.mxu0 0.0
  %3464 = vmatpush1.msra.mxu0 0.0
  %3465 = vmatprep.mubr.f32.mxu0 0.0
  %3466 = vmatmul.mubr.f32.gmra.mrb[0].mxu0 %v3399
  %v3467 = vpop.f32.mrb[0].mxu0
  %v3468 = vadd.f32 0.0, %v3467
  %v3469 = vpop.f32.mrb[0].mxu0
  %3470 = vdwg.mxu0
  %3471 = vmatprep.subr.mxu0 0.0
  %3472 = vmatpush1.xpose.msra.mxu0 %v3122
  %3473 = vmatprep.subr.mxu0 0.0
  %3474 = vmatpush1.xpose.msra.mxu0 0.0
  %3475 = vmatprep.subr.mxu0 0.0
  %3476 = vmatpush1.xpose.msra.mxu0 0.0
  %3477 = vmatprep.subr.mxu0 0.0
  %3478 = vmatpush1.xpose.msra.mxu0 0.0
  %3479 = vmatprep.subr.mxu0 0.0
  %3480 = vmatpush1.xpose.msra.mxu0 0.0
  %3481 = vmatprep.subr.mxu0 0.0
  %3482 = vmatpush1.xpose.msra.mxu0 0.0
  %3483 = vmatprep.subr.mxu0 0.0
  %3484 = vmatpush1.xpose.msra.mxu0 0.0
  %3485 = vmatprep.subr.mxu0 0.0
  %3486 = vmatpush1.xpose.msra.mxu0 0.0
  %3487 = vmatprep.subr.mxu0 0.0
  %3488 = vmatpush1.xpose.msra.mxu0 0.0
  %3489 = vmatprep.subr.mxu0 0.0
  %3490 = vmatpush1.xpose.msra.mxu0 0.0
  %3491 = vmatprep.subr.mxu0 0.0
  %3492 = vmatpush1.xpose.msra.mxu0 0.0
  %3493 = vmatprep.subr.mxu0 0.0
  %3494 = vmatpush1.xpose.msra.mxu0 0.0
  %3495 = vmatprep.subr.mxu0 0.0
  %3496 = vmatpush1.xpose.msra.mxu0 0.0
  %3497 = vmatprep.subr.mxu0 0.0
  %3498 = vmatpush1.xpose.msra.mxu0 0.0
  %3499 = vmatprep.subr.mxu0 0.0
  %3500 = vmatpush1.xpose.msra.mxu0 0.0
  %3501 = vmatprep.subr.mxu0 0.0
  %3502 = vmatpush1.xpose.msra.mxu0 0.0
  %3503 = vmatprep.subr.mxu0 0.0
  %3504 = vmatpush1.xpose.msra.mxu0 0.0
  %3505 = vmatprep.subr.mxu0 0.0
  %3506 = vmatpush1.xpose.msra.mxu0 0.0
  %3507 = vmatprep.subr.mxu0 0.0
  %3508 = vmatpush1.xpose.msra.mxu0 0.0
  %3509 = vmatprep.subr.mxu0 0.0
  %3510 = vmatpush1.xpose.msra.mxu0 0.0
  %3511 = vmatprep.subr.mxu0 0.0
  %3512 = vmatpush1.xpose.msra.mxu0 0.0
  %3513 = vmatprep.subr.mxu0 0.0
  %3514 = vmatpush1.xpose.msra.mxu0 0.0
  %3515 = vmatprep.subr.mxu0 0.0
  %3516 = vmatpush1.xpose.msra.mxu0 0.0
  %3517 = vmatprep.subr.mxu0 0.0
  %3518 = vmatpush1.xpose.msra.mxu0 0.0
  %3519 = vmatprep.subr.mxu0 0.0
  %3520 = vmatpush1.xpose.msra.mxu0 0.0
  %3521 = vmatprep.subr.mxu0 0.0
  %3522 = vmatpush1.xpose.msra.mxu0 0.0
  %3523 = vmatprep.subr.mxu0 0.0
  %3524 = vmatpush1.xpose.msra.mxu0 0.0
  %3525 = vmatprep.subr.mxu0 0.0
  %3526 = vmatpush1.xpose.msra.mxu0 0.0
  %3527 = vmatprep.subr.mxu0 0.0
  %3528 = vmatpush1.xpose.msra.mxu0 0.0
  %3529 = vmatprep.subr.mxu0 0.0
  %3530 = vmatpush1.xpose.msra.mxu0 0.0
  %3531 = vmatprep.subr.mxu0 0.0
  %3532 = vmatpush1.xpose.msra.mxu0 0.0
  %3533 = vmatprep.subr.mxu0 0.0
  %3534 = vmatpush1.xpose.msra.mxu0 0.0
  %3535 = vmatprep.mubr.f32.mxu0 0.0
  %3536 = vmatmul.mubr.f32.gmra.mrb[0].mxu0 %v3091
  %v3537 = vpop.f32.mrb[0].mxu0
  %v3538 = vadd.f32 0.0, %v3537
  %v3539 = vpop.f32.mrb[0].mxu0
  %3540 = vdwg.mxu0
  %v3541 = vmul.f32 %v3538, 0.28867513
  %v3542 = vadd.f32 %v3541, %v69
  %v3543 = vsel %vm861, %v3542, -inf
  %3544 = vmax.xlane.f32.xlu0 %v3543
  %v3545 = vpop.xlane.xlu0 %3544
  %v3546 = vsub.f32 %v3542, %v3545
  %v3547 = vmul.f32 %v3546, 1.442695
  %v3548 = vpow.pop %v3547
  %v3549 = vsel %vm861, %v3548, 0.0
  %3550 = vadd.xlane.f32.xlu0 %v3549
  %v3551 = vpop.xlane.xlu0 %3550
  %v3552 = vrcp.pop %v3551
  %v3553 = vmul.f32 %v3548, %v3552
  %v3555 = vsel %vm861, %v3553, 0
  %3557 = vmatprep.subr.mxu0 0.0
  %3558 = vmatpush1.msra.mxu0 %v3153
  %3559 = vmatprep.subr.mxu0 0.0
  %3560 = vmatpush1.msra.mxu0 0.0
  %3561 = vmatprep.subr.mxu0 0.0
  %3562 = vmatpush1.msra.mxu0 0.0
  %3563 = vmatprep.subr.mxu0 0.0
  %3564 = vmatpush1.msra.mxu0 0.0
  %3565 = vmatprep.subr.mxu0 0.0
  %3566 = vmatpush1.msra.mxu0 0.0
  %3567 = vmatprep.subr.mxu0 0.0
  %3568 = vmatpush1.msra.mxu0 0.0
  %3569 = vmatprep.subr.mxu0 0.0
  %3570 = vmatpush1.msra.mxu0 0.0
  %3571 = vmatprep.subr.mxu0 0.0
  %3572 = vmatpush1.msra.mxu0 0.0
  %3573 = vmatprep.subr.mxu0 0.0
  %3574 = vmatpush1.msra.mxu0 0.0
  %3575 = vmatprep.subr.mxu0 0.0
  %3576 = vmatpush1.msra.mxu0 0.0
  %3577 = vmatprep.subr.mxu0 0.0
  %3578 = vmatpush1.msra.mxu0 0.0
  %3579 = vmatprep.subr.mxu0 0.0
  %3580 = vmatpush1.msra.mxu0 0.0
  %3581 = vmatprep.subr.mxu0 0.0
  %3582 = vmatpush1.msra.mxu0 0.0
  %3583 = vmatprep.subr.mxu0 0.0
  %3584 = vmatpush1.msra.mxu0 0.0
  %3585 = vmatprep.subr.mxu0 0.0
  %3586 = vmatpush1.msra.mxu0 0.0
  %3587 = vmatprep.subr.mxu0 0.0
  %3588 = vmatpush1.msra.mxu0 0.0
  %3589 = vmatprep.subr.mxu0 0.0
  %3590 = vmatpush1.msra.mxu0 0.0
  %3591 = vmatprep.subr.mxu0 0.0
  %3592 = vmatpush1.msra.mxu0 0.0
  %3593 = vmatprep.subr.mxu0 0.0
  %3594 = vmatpush1.msra.mxu0 0.0
  %3595 = vmatprep.subr.mxu0 0.0
  %3596 = vmatpush1.msra.mxu0 0.0
  %3597 = vmatprep.subr.mxu0 0.0
  %3598 = vmatpush1.msra.mxu0 0.0
  %3599 = vmatprep.subr.mxu0 0.0
  %3600 = vmatpush1.msra.mxu0 0.0
  %3601 = vmatprep.subr.mxu0 0.0
  %3602 = vmatpush1.msra.mxu0 0.0
  %3603 = vmatprep.subr.mxu0 0.0
  %3604 = vmatpush1.msra.mxu0 0.0
  %3605 = vmatprep.subr.mxu0 0.0
  %3606 = vmatpush1.msra.mxu0 0.0
  %3607 = vmatprep.subr.mxu0 0.0
  %3608 = vmatpush1.msra.mxu0 0.0
  %3609 = vmatprep.subr.mxu0 0.0
  %3610 = vmatpush1.msra.mxu0 0.0
  %3611 = vmatprep.subr.mxu0 0.0
  %3612 = vmatpush1.msra.mxu0 0.0
  %3613 = vmatprep.subr.mxu0 0.0
  %3614 = vmatpush1.msra.mxu0 0.0
  %3615 = vmatprep.subr.mxu0 0.0
  %3616 = vmatpush1.msra.mxu0 0.0
  %3617 = vmatprep.subr.mxu0 0.0
  %3618 = vmatpush1.msra.mxu0 0.0
  %3619 = vmatprep.subr.mxu0 0.0
  %3620 = vmatpush1.msra.mxu0 0.0
  %3621 = vmatprep.mubr.f32.mxu0 0.0
  %3622 = vmatmul.mubr.f32.gmra.mrb[0].mxu0 %v3555
  %v3623 = vpop.f32.mrb[0].mxu0
  %v3624 = vadd.f32 0.0, %v3623
  %v3625 = vpop.f32.mrb[0].mxu0
  %3626 = vdwg.mxu0
  %3627 = vmatprep.subr.mxu0 0.0
  %3628 = vmatpush1.xpose.msra.mxu0 %v3123
  %3629 = vmatprep.subr.mxu0 0.0
  %3630 = vmatpush1.xpose.msra.mxu0 0.0
  %3631 = vmatprep.subr.mxu0 0.0
  %3632 = vmatpush1.xpose.msra.mxu0 0.0
  %3633 = vmatprep.subr.mxu0 0.0
  %3634 = vmatpush1.xpose.msra.mxu0 0.0
  %3635 = vmatprep.subr.mxu0 0.0
  %3636 = vmatpush1.xpose.msra.mxu0 0.0
  %3637 = vmatprep.subr.mxu0 0.0
  %3638 = vmatpush1.xpose.msra.mxu0 0.0
  %3639 = vmatprep.subr.mxu0 0.0
  %3640 = vmatpush1.xpose.msra.mxu0 0.0
  %3641 = vmatprep.subr.mxu0 0.0
  %3642 = vmatpush1.xpose.msra.mxu0 0.0
  %3643 = vmatprep.subr.mxu0 0.0
  %3644 = vmatpush1.xpose.msra.mxu0 0.0
  %3645 = vmatprep.subr.mxu0 0.0
  %3646 = vmatpush1.xpose.msra.mxu0 0.0
  %3647 = vmatprep.subr.mxu0 0.0
  %3648 = vmatpush1.xpose.msra.mxu0 0.0
  %3649 = vmatprep.subr.mxu0 0.0
  %3650 = vmatpush1.xpose.msra.mxu0 0.0
  %3651 = vmatprep.subr.mxu0 0.0
  %3652 = vmatpush1.xpose.msra.mxu0 0.0
  %3653 = vmatprep.subr.mxu0 0.0
  %3654 = vmatpush1.xpose.msra.mxu0 0.0
  %3655 = vmatprep.subr.mxu0 0.0
  %3656 = vmatpush1.xpose.msra.mxu0 0.0
  %3657 = vmatprep.subr.mxu0 0.0
  %3658 = vmatpush1.xpose.msra.mxu0 0.0
  %3659 = vmatprep.subr.mxu0 0.0
  %3660 = vmatpush1.xpose.msra.mxu0 0.0
  %3661 = vmatprep.subr.mxu0 0.0
  %3662 = vmatpush1.xpose.msra.mxu0 0.0
  %3663 = vmatprep.subr.mxu0 0.0
  %3664 = vmatpush1.xpose.msra.mxu0 0.0
  %3665 = vmatprep.subr.mxu0 0.0
  %3666 = vmatpush1.xpose.msra.mxu0 0.0
  %3667 = vmatprep.subr.mxu0 0.0
  %3668 = vmatpush1.xpose.msra.mxu0 0.0
  %3669 = vmatprep.subr.mxu0 0.0
  %3670 = vmatpush1.xpose.msra.mxu0 0.0
  %3671 = vmatprep.subr.mxu0 0.0
  %3672 = vmatpush1.xpose.msra.mxu0 0.0
  %3673 = vmatprep.subr.mxu0 0.0
  %3674 = vmatpush1.xpose.msra.mxu0 0.0
  %3675 = vmatprep.subr.mxu0 0.0
  %3676 = vmatpush1.xpose.msra.mxu0 0.0
  %3677 = vmatprep.subr.mxu0 0.0
  %3678 = vmatpush1.xpose.msra.mxu0 0.0
  %3679 = vmatprep.subr.mxu0 0.0
  %3680 = vmatpush1.xpose.msra.mxu0 0.0
  %3681 = vmatprep.subr.mxu0 0.0
  %3682 = vmatpush1.xpose.msra.mxu0 0.0
  %3683 = vmatprep.subr.mxu0 0.0
  %3684 = vmatpush1.xpose.msra.mxu0 0.0
  %3685 = vmatprep.subr.mxu0 0.0
  %3686 = vmatpush1.xpose.msra.mxu0 0.0
  %3687 = vmatprep.subr.mxu0 0.0
  %3688 = vmatpush1.xpose.msra.mxu0 0.0
  %3689 = vmatprep.subr.mxu0 0.0
  %3690 = vmatpush1.xpose.msra.mxu0 0.0
  %3691 = vmatprep.mubr.f32.mxu0 0.0
  %3692 = vmatmul.mubr.f32.gmra.mrb[0].mxu0 %v3092
  %v3693 = vpop.f32.mrb[0].mxu0
  %v3694 = vadd.f32 0.0, %v3693
  %v3695 = vpop.f32.mrb[0].mxu0
  %3696 = vdwg.mxu0
  %v3697 = vmul.f32 %v3694, 0.28867513
  %v3698 = vadd.f32 %v3697, %v69
  %v3699 = vsel %vm861, %v3698, -inf
  %3700 = vmax.xlane.f32.xlu0 %v3699
  %v3701 = vpop.xlane.xlu0 %3700
  %v3702 = vsub.f32 %v3698, %v3701
  %v3703 = vmul.f32 %v3702, 1.442695
  %v3704 = vpow.pop %v3703
  %v3705 = vsel %vm861, %v3704, 0.0
  %3706 = vadd.xlane.f32.xlu0 %v3705
  %v3707 = vpop.xlane.xlu0 %3706
  %v3708 = vrcp.pop %v3707
  %v3709 = vmul.f32 %v3704, %v3708
  %v3711 = vsel %vm861, %v3709, 0
  %3713 = vmatprep.subr.mxu0 0.0
  %3714 = vmatpush1.msra.mxu0 %v3154
  %3715 = vmatprep.subr.mxu0 0.0
  %3716 = vmatpush1.msra.mxu0 0.0
  %3717 = vmatprep.subr.mxu0 0.0
  %3718 = vmatpush1.msra.mxu0 0.0
  %3719 = vmatprep.subr.mxu0 0.0
  %3720 = vmatpush1.msra.mxu0 0.0
  %3721 = vmatprep.subr.mxu0 0.0
  %3722 = vmatpush1.msra.mxu0 0.0
  %3723 = vmatprep.subr.mxu0 0.0
  %3724 = vmatpush1.msra.mxu0 0.0
  %3725 = vmatprep.subr.mxu0 0.0
  %3726 = vmatpush1.msra.mxu0 0.0
  %3727 = vmatprep.subr.mxu0 0.0
  %3728 = vmatpush1.msra.mxu0 0.0
  %3729 = vmatprep.subr.mxu0 0.0
  %3730 = vmatpush1.msra.mxu0 0.0
  %3731 = vmatprep.subr.mxu0 0.0
  %3732 = vmatpush1.msra.mxu0 0.0
  %3733 = vmatprep.subr.mxu0 0.0
  %3734 = vmatpush1.msra.mxu0 0.0
  %3735 = vmatprep.subr.mxu0 0.0
  %3736 = vmatpush1.msra.mxu0 0.0
  %3737 = vmatprep.subr.mxu0 0.0
  %3738 = vmatpush1.msra.mxu0 0.0
  %3739 = vmatprep.subr.mxu0 0.0
  %3740 = vmatpush1.msra.mxu0 0.0
  %3741 = vmatprep.subr.mxu0 0.0
  %3742 = vmatpush1.msra.mxu0 0.0
  %3743 = vmatprep.subr.mxu0 0.0
  %3744 = vmatpush1.msra.mxu0 0.0
  %3745 = vmatprep.subr.mxu0 0.0
  %3746 = vmatpush1.msra.mxu0 0.0
  %3747 = vmatprep.subr.mxu0 0.0
  %3748 = vmatpush1.msra.mxu0 0.0
  %3749 = vmatprep.subr.mxu0 0.0
  %3750 = vmatpush1.msra.mxu0 0.0
  %3751 = vmatprep.subr.mxu0 0.0
  %3752 = vmatpush1.msra.mxu0 0.0
  %3753 = vmatprep.subr.mxu0 0.0
  %3754 = vmatpush1.msra.mxu0 0.0
  %3755 = vmatprep.subr.mxu0 0.0
  %3756 = vmatpush1.msra.mxu0 0.0
  %3757 = vmatprep.subr.mxu0 0.0
  %3758 = vmatpush1.msra.mxu0 0.0
  %3759 = vmatprep.subr.mxu0 0.0
  %3760 = vmatpush1.msra.mxu0 0.0
  %3761 = vmatprep.subr.mxu0 0.0
  %3762 = vmatpush1.msra.mxu0 0.0
  %3763 = vmatprep.subr.mxu0 0.0
  %3764 = vmatpush1.msra.mxu0 0.0
  %3765 = vmatprep.subr.mxu0 0.0
  %3766 = vmatpush1.msra.mxu0 0.0
  %3767 = vmatprep.subr.mxu0 0.0
  %3768 = vmatpush1.msra.mxu0 0.0
  %3769 = vmatprep.subr.mxu0 0.0
  %3770 = vmatpush1.msra.mxu0 0.0
  %3771 = vmatprep.subr.mxu0 0.0
  %3772 = vmatpush1.msra.mxu0 0.0
  %3773 = vmatprep.subr.mxu0 0.0
  %3774 = vmatpush1.msra.mxu0 0.0
  %3775 = vmatprep.subr.mxu0 0.0
  %3776 = vmatpush1.msra.mxu0 0.0
  %3777 = vmatprep.mubr.f32.mxu0 0.0
  %3778 = vmatmul.mubr.f32.gmra.mrb[0].mxu0 %v3711
  %v3779 = vpop.f32.mrb[0].mxu0
  %v3780 = vadd.f32 0.0, %v3779
  %v3781 = vpop.f32.mrb[0].mxu0
  %3782 = vdwg.mxu0
  %3783 = vmatprep.subr.mxu0 0.0
  %3784 = vmatpush1.xpose.msra.mxu0 %v3124
  %3785 = vmatprep.subr.mxu0 0.0
  %3786 = vmatpush1.xpose.msra.mxu0 0.0
  %3787 = vmatprep.subr.mxu0 0.0
  %3788 = vmatpush1.xpose.msra.mxu0 0.0
  %3789 = vmatprep.subr.mxu0 0.0
  %3790 = vmatpush1.xpose.msra.mxu0 0.0
  %3791 = vmatprep.subr.mxu0 0.0
  %3792 = vmatpush1.xpose.msra.mxu0 0.0
  %3793 = vmatprep.subr.mxu0 0.0
  %3794 = vmatpush1.xpose.msra.mxu0 0.0
  %3795 = vmatprep.subr.mxu0 0.0
  %3796 = vmatpush1.xpose.msra.mxu0 0.0
  %3797 = vmatprep.subr.mxu0 0.0
  %3798 = vmatpush1.xpose.msra.mxu0 0.0
  %3799 = vmatprep.subr.mxu0 0.0
  %3800 = vmatpush1.xpose.msra.mxu0 0.0
  %3801 = vmatprep.subr.mxu0 0.0
  %3802 = vmatpush1.xpose.msra.mxu0 0.0
  %3803 = vmatprep.subr.mxu0 0.0
  %3804 = vmatpush1.xpose.msra.mxu0 0.0
  %3805 = vmatprep.subr.mxu0 0.0
  %3806 = vmatpush1.xpose.msra.mxu0 0.0
  %3807 = vmatprep.subr.mxu0 0.0
  %3808 = vmatpush1.xpose.msra.mxu0 0.0
  %3809 = vmatprep.subr.mxu0 0.0
  %3810 = vmatpush1.xpose.msra.mxu0 0.0
  %3811 = vmatprep.subr.mxu0 0.0
  %3812 = vmatpush1.xpose.msra.mxu0 0.0
  %3813 = vmatprep.subr.mxu0 0.0
  %3814 = vmatpush1.xpose.msra.mxu0 0.0
  %3815 = vmatprep.subr.mxu0 0.0
  %3816 = vmatpush1.xpose.msra.mxu0 0.0
  %3817 = vmatprep.subr.mxu0 0.0
  %3818 = vmatpush1.xpose.msra.mxu0 0.0
  %3819 = vmatprep.subr.mxu0 0.0
  %3820 = vmatpush1.xpose.msra.mxu0 0.0
  %3821 = vmatprep.subr.mxu0 0.0
  %3822 = vmatpush1.xpose.msra.mxu0 0.0
  %3823 = vmatprep.subr.mxu0 0.0
  %3824 = vmatpush1.xpose.msra.mxu0 0.0
  %3825 = vmatprep.subr.mxu0 0.0
  %3826 = vmatpush1.xpose.msra.mxu0 0.0
  %3827 = vmatprep.subr.mxu0 0.0
  %3828 = vmatpush1.xpose.msra.mxu0 0.0
  %3829 = vmatprep.subr.mxu0 0.0
  %3830 = vmatpush1.xpose.msra.mxu0 0.0
  %3831 = vmatprep.subr.mxu0 0.0
  %3832 = vmatpush1.xpose.msra.mxu0 0.0
  %3833 = vmatprep.subr.mxu0 0.0
  %3834 = vmatpush1.xpose.msra.mxu0 0.0
  %3835 = vmatprep.subr.mxu0 0.0
  %3836 = vmatpush1.xpose.msra.mxu0 0.0
  %3837 = vmatprep.subr.mxu0 0.0
  %3838 = vmatpush1.xpose.msra.mxu0 0.0
  %3839 = vmatprep.subr.mxu0 0.0
  %3840 = vmatpush1.xpose.msra.mxu0 0.0
  %3841 = vmatprep.subr.mxu0 0.0
  %3842 = vmatpush1.xpose.msra.mxu0 0.0
  %3843 = vmatprep.subr.mxu0 0.0
  %3844 = vmatpush1.xpose.msra.mxu0 0.0
  %3845 = vmatprep.subr.mxu0 0.0
  %3846 = vmatpush1.xpose.msra.mxu0 0.0
  %3847 = vmatprep.mubr.f32.mxu0 0.0
  %3848 = vmatmul.mubr.f32.gmra.mrb[0].mxu0 %v3093
  %v3849 = vpop.f32.mrb[0].mxu0
  %v3850 = vadd.f32 0.0, %v3849
  %v3851 = vpop.f32.mrb[0].mxu0
  %3852 = vdwg.mxu0
  %v3853 = vmul.f32 %v3850, 0.28867513
  %v3854 = vadd.f32 %v3853, %v73
  %v3855 = vsel %vm861, %v3854, -inf
  %3856 = vmax.xlane.f32.xlu0 %v3855
  %v3857 = vpop.xlane.xlu0 %3856
  %v3858 = vsub.f32 %v3854, %v3857
  %v3859 = vmul.f32 %v3858, 1.442695
  %v3860 = vpow.pop %v3859
  %v3861 = vsel %vm861, %v3860, 0.0
  %3862 = vadd.xlane.f32.xlu0 %v3861
  %v3863 = vpop.xlane.xlu0 %3862
  %v3864 = vrcp.pop %v3863
  %v3865 = vmul.f32 %v3860, %v3864
  %v3867 = vsel %vm861, %v3865, 0
  %3869 = vmatprep.subr.mxu0 0.0
  %3870 = vmatpush1.msra.mxu0 %v3155
  %3871 = vmatprep.subr.mxu0 0.0
  %3872 = vmatpush1.msra.mxu0 0.0
  %3873 = vmatprep.subr.mxu0 0.0
  %3874 = vmatpush1.msra.mxu0 0.0
  %3875 = vmatprep.subr.mxu0 0.0
  %3876 = vmatpush1.msra.mxu0 0.0
  %3877 = vmatprep.subr.mxu0 0.0
  %3878 = vmatpush1.msra.mxu0 0.0
  %3879 = vmatprep.subr.mxu0 0.0
  %3880 = vmatpush1.msra.mxu0 0.0
  %3881 = vmatprep.subr.mxu0 0.0
  %3882 = vmatpush1.msra.mxu0 0.0
  %3883 = vmatprep.subr.mxu0 0.0
  %3884 = vmatpush1.msra.mxu0 0.0
  %3885 = vmatprep.subr.mxu0 0.0
  %3886 = vmatpush1.msra.mxu0 0.0
  %3887 = vmatprep.subr.mxu0 0.0
  %3888 = vmatpush1.msra.mxu0 0.0
  %3889 = vmatprep.subr.mxu0 0.0
  %3890 = vmatpush1.msra.mxu0 0.0
  %3891 = vmatprep.subr.mxu0 0.0
  %3892 = vmatpush1.msra.mxu0 0.0
  %3893 = vmatprep.subr.mxu0 0.0
  %3894 = vmatpush1.msra.mxu0 0.0
  %3895 = vmatprep.subr.mxu0 0.0
  %3896 = vmatpush1.msra.mxu0 0.0
  %3897 = vmatprep.subr.mxu0 0.0
  %3898 = vmatpush1.msra.mxu0 0.0
  %3899 = vmatprep.subr.mxu0 0.0
  %3900 = vmatpush1.msra.mxu0 0.0
  %3901 = vmatprep.subr.mxu0 0.0
  %3902 = vmatpush1.msra.mxu0 0.0
  %3903 = vmatprep.subr.mxu0 0.0
  %3904 = vmatpush1.msra.mxu0 0.0
  %3905 = vmatprep.subr.mxu0 0.0
  %3906 = vmatpush1.msra.mxu0 0.0
  %3907 = vmatprep.subr.mxu0 0.0
  %3908 = vmatpush1.msra.mxu0 0.0
  %3909 = vmatprep.subr.mxu0 0.0
  %3910 = vmatpush1.msra.mxu0 0.0
  %3911 = vmatprep.subr.mxu0 0.0
  %3912 = vmatpush1.msra.mxu0 0.0
  %3913 = vmatprep.subr.mxu0 0.0
  %3914 = vmatpush1.msra.mxu0 0.0
  %3915 = vmatprep.subr.mxu0 0.0
  %3916 = vmatpush1.msra.mxu0 0.0
  %3917 = vmatprep.subr.mxu0 0.0
  %3918 = vmatpush1.msra.mxu0 0.0
  %3919 = vmatprep.subr.mxu0 0.0
  %3920 = vmatpush1.msra.mxu0 0.0
  %3921 = vmatprep.subr.mxu0 0.0
  %3922 = vmatpush1.msra.mxu0 0.0
  %3923 = vmatprep.subr.mxu0 0.0
  %3924 = vmatpush1.msra.mxu0 0.0
  %3925 = vmatprep.subr.mxu0 0.0
  %3926 = vmatpush1.msra.mxu0 0.0
  %3927 = vmatprep.subr.mxu0 0.0
  %3928 = vmatpush1.msra.mxu0 0.0
  %3929 = vmatprep.subr.mxu0 0.0
  %3930 = vmatpush1.msra.mxu0 0.0
  %3931 = vmatprep.subr.mxu0 0.0
  %3932 = vmatpush1.msra.mxu0 0.0
  %3933 = vmatprep.mubr.f32.mxu0 0.0
  %3934 = vmatmul.mubr.f32.gmra.mrb[0].mxu0 %v3867
  %v3935 = vpop.f32.mrb[0].mxu0
  %v3936 = vadd.f32 0.0, %v3935
  %v3937 = vpop.f32.mrb[0].mxu0
  %3938 = vdwg.mxu0
  %3939 = vmatprep.subr.mxu0 0.0
  %3940 = vmatpush1.xpose.msra.mxu0 %v3125
  %3941 = vmatprep.subr.mxu0 0.0
  %3942 = vmatpush1.xpose.msra.mxu0 0.0
  %3943 = vmatprep.subr.mxu0 0.0
  %3944 = vmatpush1.xpose.msra.mxu0 0.0
  %3945 = vmatprep.subr.mxu0 0.0
  %3946 = vmatpush1.xpose.msra.mxu0 0.0
  %3947 = vmatprep.subr.mxu0 0.0
  %3948 = vmatpush1.xpose.msra.mxu0 0.0
  %3949 = vmatprep.subr.mxu0 0.0
  %3950 = vmatpush1.xpose.msra.mxu0 0.0
  %3951 = vmatprep.subr.mxu0 0.0
  %3952 = vmatpush1.xpose.msra.mxu0 0.0
  %3953 = vmatprep.subr.mxu0 0.0
  %3954 = vmatpush1.xpose.msra.mxu0 0.0
  %3955 = vmatprep.subr.mxu0 0.0
  %3956 = vmatpush1.xpose.msra.mxu0 0.0
  %3957 = vmatprep.subr.mxu0 0.0
  %3958 = vmatpush1.xpose.msra.mxu0 0.0
  %3959 = vmatprep.subr.mxu0 0.0
  %3960 = vmatpush1.xpose.msra.mxu0 0.0
  %3961 = vmatprep.subr.mxu0 0.0
  %3962 = vmatpush1.xpose.msra.mxu0 0.0
  %3963 = vmatprep.subr.mxu0 0.0
  %3964 = vmatpush1.xpose.msra.mxu0 0.0
  %3965 = vmatprep.subr.mxu0 0.0
  %3966 = vmatpush1.xpose.msra.mxu0 0.0
  %3967 = vmatprep.subr.mxu0 0.0
  %3968 = vmatpush1.xpose.msra.mxu0 0.0
  %3969 = vmatprep.subr.mxu0 0.0
  %3970 = vmatpush1.xpose.msra.mxu0 0.0
  %3971 = vmatprep.subr.mxu0 0.0
  %3972 = vmatpush1.xpose.msra.mxu0 0.0
  %3973 = vmatprep.subr.mxu0 0.0
  %3974 = vmatpush1.xpose.msra.mxu0 0.0
  %3975 = vmatprep.subr.mxu0 0.0
  %3976 = vmatpush1.xpose.msra.mxu0 0.0
  %3977 = vmatprep.subr.mxu0 0.0
  %3978 = vmatpush1.xpose.msra.mxu0 0.0
  %3979 = vmatprep.subr.mxu0 0.0
  %3980 = vmatpush1.xpose.msra.mxu0 0.0
  %3981 = vmatprep.subr.mxu0 0.0
  %3982 = vmatpush1.xpose.msra.mxu0 0.0
  %3983 = vmatprep.subr.mxu0 0.0
  %3984 = vmatpush1.xpose.msra.mxu0 0.0
  %3985 = vmatprep.subr.mxu0 0.0
  %3986 = vmatpush1.xpose.msra.mxu0 0.0
  %3987 = vmatprep.subr.mxu0 0.0
  %3988 = vmatpush1.xpose.msra.mxu0 0.0
  %3989 = vmatprep.subr.mxu0 0.0
  %3990 = vmatpush1.xpose.msra.mxu0 0.0
  %3991 = vmatprep.subr.mxu0 0.0
  %3992 = vmatpush1.xpose.msra.mxu0 0.0
  %3993 = vmatprep.subr.mxu0 0.0
  %3994 = vmatpush1.xpose.msra.mxu0 0.0
  %3995 = vmatprep.subr.mxu0 0.0
  %3996 = vmatpush1.xpose.msra.mxu0 0.0
  %3997 = vmatprep.subr.mxu0 0.0
  %3998 = vmatpush1.xpose.msra.mxu0 0.0
  %3999 = vmatprep.subr.mxu0 0.0
  %4000 = vmatpush1.xpose.msra.mxu0 0.0
  %4001 = vmatprep.subr.mxu0 0.0
  %4002 = vmatpush1.xpose.msra.mxu0 0.0
  %4003 = vmatprep.mubr.f32.mxu0 0.0
  %4004 = vmatmul.mubr.f32.gmra.mrb[0].mxu0 %v3094
  %v4005 = vpop.f32.mrb[0].mxu0
  %v4006 = vadd.f32 0.0, %v4005
  %v4007 = vpop.f32.mrb[0].mxu0
  %4008 = vdwg.mxu0
  %v4009 = vmul.f32 %v4006, 0.28867513
  %v4010 = vadd.f32 %v4009, %v73
  %v4011 = vsel %vm861, %v4010, -inf
  %4012 = vmax.xlane.f32.xlu0 %v4011
  %v4013 = vpop.xlane.xlu0 %4012
  %v4014 = vsub.f32 %v4010, %v4013
  %v4015 = vmul.f32 %v4014, 1.442695
  %v4016 = vpow.pop %v4015
  %v4017 = vsel %vm861, %v4016, 0.0
  %4018 = vadd.xlane.f32.xlu0 %v4017
  %v4019 = vpop.xlane.xlu0 %4018
  %v4020 = vrcp.pop %v4019
  %v4021 = vmul.f32 %v4016, %v4020
  %v4023 = vsel %vm861, %v4021, 0
  %4025 = vmatprep.subr.mxu0 0.0
  %4026 = vmatpush1.msra.mxu0 %v3156
  %4027 = vmatprep.subr.mxu0 0.0
  %4028 = vmatpush1.msra.mxu0 0.0
  %4029 = vmatprep.subr.mxu0 0.0
  %4030 = vmatpush1.msra.mxu0 0.0
  %4031 = vmatprep.subr.mxu0 0.0
  %4032 = vmatpush1.msra.mxu0 0.0
  %4033 = vmatprep.subr.mxu0 0.0
  %4034 = vmatpush1.msra.mxu0 0.0
  %4035 = vmatprep.subr.mxu0 0.0
  %4036 = vmatpush1.msra.mxu0 0.0
  %4037 = vmatprep.subr.mxu0 0.0
  %4038 = vmatpush1.msra.mxu0 0.0
  %4039 = vmatprep.subr.mxu0 0.0
  %4040 = vmatpush1.msra.mxu0 0.0
  %4041 = vmatprep.subr.mxu0 0.0
  %4042 = vmatpush1.msra.mxu0 0.0
  %4043 = vmatprep.subr.mxu0 0.0
  %4044 = vmatpush1.msra.mxu0 0.0
  %4045 = vmatprep.subr.mxu0 0.0
  %4046 = vmatpush1.msra.mxu0 0.0
  %4047 = vmatprep.subr.mxu0 0.0
  %4048 = vmatpush1.msra.mxu0 0.0
  %4049 = vmatprep.subr.mxu0 0.0
  %4050 = vmatpush1.msra.mxu0 0.0
  %4051 = vmatprep.subr.mxu0 0.0
  %4052 = vmatpush1.msra.mxu0 0.0
  %4053 = vmatprep.subr.mxu0 0.0
  %4054 = vmatpush1.msra.mxu0 0.0
  %4055 = vmatprep.subr.mxu0 0.0
  %4056 = vmatpush1.msra.mxu0 0.0
  %4057 = vmatprep.subr.mxu0 0.0
  %4058 = vmatpush1.msra.mxu0 0.0
  %4059 = vmatprep.subr.mxu0 0.0
  %4060 = vmatpush1.msra.mxu0 0.0
  %4061 = vmatprep.subr.mxu0 0.0
  %4062 = vmatpush1.msra.mxu0 0.0
  %4063 = vmatprep.subr.mxu0 0.0
  %4064 = vmatpush1.msra.mxu0 0.0
  %4065 = vmatprep.subr.mxu0 0.0
  %4066 = vmatpush1.msra.mxu0 0.0
  %4067 = vmatprep.subr.mxu0 0.0
  %4068 = vmatpush1.msra.mxu0 0.0
  %4069 = vmatprep.subr.mxu0 0.0
  %4070 = vmatpush1.msra.mxu0 0.0
  %4071 = vmatprep.subr.mxu0 0.0
  %4072 = vmatpush1.msra.mxu0 0.0
  %4073 = vmatprep.subr.mxu0 0.0
  %4074 = vmatpush1.msra.mxu0 0.0
  %4075 = vmatprep.subr.mxu0 0.0
  %4076 = vmatpush1.msra.mxu0 0.0
  %4077 = vmatprep.subr.mxu0 0.0
  %4078 = vmatpush1.msra.mxu0 0.0
  %4079 = vmatprep.subr.mxu0 0.0
  %4080 = vmatpush1.msra.mxu0 0.0
  %4081 = vmatprep.subr.mxu0 0.0
  %4082 = vmatpush1.msra.mxu0 0.0
  %4083 = vmatprep.subr.mxu0 0.0
  %4084 = vmatpush1.msra.mxu0 0.0
  %4085 = vmatprep.subr.mxu0 0.0
  %4086 = vmatpush1.msra.mxu0 0.0
  %4087 = vmatprep.subr.mxu0 0.0
  %4088 = vmatpush1.msra.mxu0 0.0
  %4089 = vmatprep.mubr.f32.mxu0 0.0
  %4090 = vmatmul.mubr.f32.gmra.mrb[0].mxu0 %v4023
  %v4091 = vpop.f32.mrb[0].mxu0
  %v4092 = vadd.f32 0.0, %v4091
  %v4093 = vpop.f32.mrb[0].mxu0
  %4094 = vdwg.mxu0
  %4095 = vmatprep.subr.mxu0 0.0
  %4096 = vmatpush1.xpose.msra.mxu0 %v3126
  %4097 = vmatprep.subr.mxu0 0.0
  %4098 = vmatpush1.xpose.msra.mxu0 0.0
  %4099 = vmatprep.subr.mxu0 0.0
  %4100 = vmatpush1.xpose.msra.mxu0 0.0
  %4101 = vmatprep.subr.mxu0 0.0
  %4102 = vmatpush1.xpose.msra.mxu0 0.0
  %4103 = vmatprep.subr.mxu0 0.0
  %4104 = vmatpush1.xpose.msra.mxu0 0.0
  %4105 = vmatprep.subr.mxu0 0.0
  %4106 = vmatpush1.xpose.msra.mxu0 0.0
  %4107 = vmatprep.subr.mxu0 0.0
  %4108 = vmatpush1.xpose.msra.mxu0 0.0
  %4109 = vmatprep.subr.mxu0 0.0
  %4110 = vmatpush1.xpose.msra.mxu0 0.0
  %4111 = vmatprep.subr.mxu0 0.0
  %4112 = vmatpush1.xpose.msra.mxu0 0.0
  %4113 = vmatprep.subr.mxu0 0.0
  %4114 = vmatpush1.xpose.msra.mxu0 0.0
  %4115 = vmatprep.subr.mxu0 0.0
  %4116 = vmatpush1.xpose.msra.mxu0 0.0
  %4117 = vmatprep.subr.mxu0 0.0
  %4118 = vmatpush1.xpose.msra.mxu0 0.0
  %4119 = vmatprep.subr.mxu0 0.0
  %4120 = vmatpush1.xpose.msra.mxu0 0.0
  %4121 = vmatprep.subr.mxu0 0.0
  %4122 = vmatpush1.xpose.msra.mxu0 0.0
  %4123 = vmatprep.subr.mxu0 0.0
  %4124 = vmatpush1.xpose.msra.mxu0 0.0
  %4125 = vmatprep.subr.mxu0 0.0
  %4126 = vmatpush1.xpose.msra.mxu0 0.0
  %4127 = vmatprep.subr.mxu0 0.0
  %4128 = vmatpush1.xpose.msra.mxu0 0.0
  %4129 = vmatprep.subr.mxu0 0.0
  %4130 = vmatpush1.xpose.msra.mxu0 0.0
  %4131 = vmatprep.subr.mxu0 0.0
  %4132 = vmatpush1.xpose.msra.mxu0 0.0
  %4133 = vmatprep.subr.mxu0 0.0
  %4134 = vmatpush1.xpose.msra.mxu0 0.0
  %4135 = vmatprep.subr.mxu0 0.0
  %4136 = vmatpush1.xpose.msra.mxu0 0.0
  %4137 = vmatprep.subr.mxu0 0.0
  %4138 = vmatpush1.xpose.msra.mxu0 0.0
  %4139 = vmatprep.subr.mxu0 0.0
  %4140 = vmatpush1.xpose.msra.mxu0 0.0
  %4141 = vmatprep.subr.mxu0 0.0
  %4142 = vmatpush1.xpose.msra.mxu0 0.0
  %4143 = vmatprep.subr.mxu0 0.0
  %4144 = vmatpush1.xpose.msra.mxu0 0.0
  %4145 = vmatprep.subr.mxu0 0.0
  %4146 = vmatpush1.xpose.msra.mxu0 0.0
  %4147 = vmatprep.subr.mxu0 0.0
  %4148 = vmatpush1.xpose.msra.mxu0 0.0
  %4149 = vmatprep.subr.mxu0 0.0
  %4150 = vmatpush1.xpose.msra.mxu0 0.0
  %4151 = vmatprep.subr.mxu0 0.0
  %4152 = vmatpush1.xpose.msra.mxu0 0.0
  %4153 = vmatprep.subr.mxu0 0.0
  %4154 = vmatpush1.xpose.msra.mxu0 0.0
  %4155 = vmatprep.subr.mxu0 0.0
  %4156 = vmatpush1.xpose.msra.mxu0 0.0
  %4157 = vmatprep.subr.mxu0 0.0
  %4158 = vmatpush1.xpose.msra.mxu0 0.0
  %4159 = vmatprep.mubr.f32.mxu0 0.0
  %4160 = vmatmul.mubr.f32.gmra.mrb[0].mxu0 %v3095
  %v4161 = vpop.f32.mrb[0].mxu0
  %v4162 = vadd.f32 0.0, %v4161
  %v4163 = vpop.f32.mrb[0].mxu0
  %4164 = vdwg.mxu0
  %v4165 = vmul.f32 %v4162, 0.28867513
  %v4166 = vadd.f32 %v4165, %v73
  %v4167 = vsel %vm861, %v4166, -inf
  %4168 = vmax.xlane.f32.xlu0 %v4167
  %v4169 = vpop.xlane.xlu0 %4168
  %v4170 = vsub.f32 %v4166, %v4169
  %v4171 = vmul.f32 %v4170, 1.442695
  %v4172 = vpow.pop %v4171
  %v4173 = vsel %vm861, %v4172, 0.0
  %4174 = vadd.xlane.f32.xlu0 %v4173
  %v4175 = vpop.xlane.xlu0 %4174
  %v4176 = vrcp.pop %v4175
  %v4177 = vmul.f32 %v4172, %v4176
  %v4179 = vsel %vm861, %v4177, 0
  %4181 = vmatprep.subr.mxu0 0.0
  %4182 = vmatpush1.msra.mxu0 %v3157
  %4183 = vmatprep.subr.mxu0 0.0
  %4184 = vmatpush1.msra.mxu0 0.0
  %4185 = vmatprep.subr.mxu0 0.0
  %4186 = vmatpush1.msra.mxu0 0.0
  %4187 = vmatprep.subr.mxu0 0.0
  %4188 = vmatpush1.msra.mxu0 0.0
  %4189 = vmatprep.subr.mxu0 0.0
  %4190 = vmatpush1.msra.mxu0 0.0
  %4191 = vmatprep.subr.mxu0 0.0
  %4192 = vmatpush1.msra.mxu0 0.0
  %4193 = vmatprep.subr.mxu0 0.0
  %4194 = vmatpush1.msra.mxu0 0.0
  %4195 = vmatprep.subr.mxu0 0.0
  %4196 = vmatpush1.msra.mxu0 0.0
  %4197 = vmatprep.subr.mxu0 0.0
  %4198 = vmatpush1.msra.mxu0 0.0
  %4199 = vmatprep.subr.mxu0 0.0
  %4200 = vmatpush1.msra.mxu0 0.0
  %4201 = vmatprep.subr.mxu0 0.0
  %4202 = vmatpush1.msra.mxu0 0.0
  %4203 = vmatprep.subr.mxu0 0.0
  %4204 = vmatpush1.msra.mxu0 0.0
  %4205 = vmatprep.subr.mxu0 0.0
  %4206 = vmatpush1.msra.mxu0 0.0
  %4207 = vmatprep.subr.mxu0 0.0
  %4208 = vmatpush1.msra.mxu0 0.0
  %4209 = vmatprep.subr.mxu0 0.0
  %4210 = vmatpush1.msra.mxu0 0.0
  %4211 = vmatprep.subr.mxu0 0.0
  %4212 = vmatpush1.msra.mxu0 0.0
  %4213 = vmatprep.subr.mxu0 0.0
  %4214 = vmatpush1.msra.mxu0 0.0
  %4215 = vmatprep.subr.mxu0 0.0
  %4216 = vmatpush1.msra.mxu0 0.0
  %4217 = vmatprep.subr.mxu0 0.0
  %4218 = vmatpush1.msra.mxu0 0.0
  %4219 = vmatprep.subr.mxu0 0.0
  %4220 = vmatpush1.msra.mxu0 0.0
  %4221 = vmatprep.subr.mxu0 0.0
  %4222 = vmatpush1.msra.mxu0 0.0
  %4223 = vmatprep.subr.mxu0 0.0
  %4224 = vmatpush1.msra.mxu0 0.0
  %4225 = vmatprep.subr.mxu0 0.0
  %4226 = vmatpush1.msra.mxu0 0.0
  %4227 = vmatprep.subr.mxu0 0.0
  %4228 = vmatpush1.msra.mxu0 0.0
  %4229 = vmatprep.subr.mxu0 0.0
  %4230 = vmatpush1.msra.mxu0 0.0
  %4231 = vmatprep.subr.mxu0 0.0
  %4232 = vmatpush1.msra.mxu0 0.0
  %4233 = vmatprep.subr.mxu0 0.0
  %4234 = vmatpush1.msra.mxu0 0.0
  %4235 = vmatprep.subr.mxu0 0.0
  %4236 = vmatpush1.msra.mxu0 0.0
  %4237 = vmatprep.subr.mxu0 0.0
  %4238 = vmatpush1.msra.mxu0 0.0
  %4239 = vmatprep.subr.mxu0 0.0
  %4240 = vmatpush1.msra.mxu0 0.0
  %4241 = vmatprep.subr.mxu0 0.0
  %4242 = vmatpush1.msra.mxu0 0.0
  %4243 = vmatprep.subr.mxu0 0.0
  %4244 = vmatpush1.msra.mxu0 0.0
  %4245 = vmatprep.mubr.f32.mxu0 0.0
  %4246 = vmatmul.mubr.f32.gmra.mrb[0].mxu0 %v4179
  %v4247 = vpop.f32.mrb[0].mxu0
  %v4248 = vadd.f32 0.0, %v4247
  %v4249 = vpop.f32.mrb[0].mxu0
  %4250 = vdwg.mxu0
  %4251 = vmatprep.subr.mxu0 0.0
  %4252 = vmatpush1.xpose.msra.mxu0 %v3127
  %4253 = vmatprep.subr.mxu0 0.0
  %4254 = vmatpush1.xpose.msra.mxu0 0.0
  %4255 = vmatprep.subr.mxu0 0.0
  %4256 = vmatpush1.xpose.msra.mxu0 0.0
  %4257 = vmatprep.subr.mxu0 0.0
  %4258 = vmatpush1.xpose.msra.mxu0 0.0
  %4259 = vmatprep.subr.mxu0 0.0
  %4260 = vmatpush1.xpose.msra.mxu0 0.0
  %4261 = vmatprep.subr.mxu0 0.0
  %4262 = vmatpush1.xpose.msra.mxu0 0.0
  %4263 = vmatprep.subr.mxu0 0.0
  %4264 = vmatpush1.xpose.msra.mxu0 0.0
  %4265 = vmatprep.subr.mxu0 0.0
  %4266 = vmatpush1.xpose.msra.mxu0 0.0
  %4267 = vmatprep.subr.mxu0 0.0
  %4268 = vmatpush1.xpose.msra.mxu0 0.0
  %4269 = vmatprep.subr.mxu0 0.0
  %4270 = vmatpush1.xpose.msra.mxu0 0.0
  %4271 = vmatprep.subr.mxu0 0.0
  %4272 = vmatpush1.xpose.msra.mxu0 0.0
  %4273 = vmatprep.subr.mxu0 0.0
  %4274 = vmatpush1.xpose.msra.mxu0 0.0
  %4275 = vmatprep.subr.mxu0 0.0
  %4276 = vmatpush1.xpose.msra.mxu0 0.0
  %4277 = vmatprep.subr.mxu0 0.0
  %4278 = vmatpush1.xpose.msra.mxu0 0.0
  %4279 = vmatprep.subr.mxu0 0.0
  %4280 = vmatpush1.xpose.msra.mxu0 0.0
  %4281 = vmatprep.subr.mxu0 0.0
  %4282 = vmatpush1.xpose.msra.mxu0 0.0
  %4283 = vmatprep.subr.mxu0 0.0
  %4284 = vmatpush1.xpose.msra.mxu0 0.0
  %4285 = vmatprep.subr.mxu0 0.0
  %4286 = vmatpush1.xpose.msra.mxu0 0.0
  %4287 = vmatprep.subr.mxu0 0.0
  %4288 = vmatpush1.xpose.msra.mxu0 0.0
  %4289 = vmatprep.subr.mxu0 0.0
  %4290 = vmatpush1.xpose.msra.mxu0 0.0
  %4291 = vmatprep.subr.mxu0 0.0
  %4292 = vmatpush1.xpose.msra.mxu0 0.0
  %4293 = vmatprep.subr.mxu0 0.0
  %4294 = vmatpush1.xpose.msra.mxu0 0.0
  %4295 = vmatprep.subr.mxu0 0.0
  %4296 = vmatpush1.xpose.msra.mxu0 0.0
  %4297 = vmatprep.subr.mxu0 0.0
  %4298 = vmatpush1.xpose.msra.mxu0 0.0
  %4299 = vmatprep.subr.mxu0 0.0
  %4300 = vmatpush1.xpose.msra.mxu0 0.0
  %4301 = vmatprep.subr.mxu0 0.0
  %4302 = vmatpush1.xpose.msra.mxu0 0.0
  %4303 = vmatprep.subr.mxu0 0.0
  %4304 = vmatpush1.xpose.msra.mxu0 0.0
  %4305 = vmatprep.subr.mxu0 0.0
  %4306 = vmatpush1.xpose.msra.mxu0 0.0
  %4307 = vmatprep.subr.mxu0 0.0
  %4308 = vmatpush1.xpose.msra.mxu0 0.0
  %4309 = vmatprep.subr.mxu0 0.0
  %4310 = vmatpush1.xpose.msra.mxu0 0.0
  %4311 = vmatprep.subr.mxu0 0.0
  %4312 = vmatpush1.xpose.msra.mxu0 0.0
  %4313 = vmatprep.subr.mxu0 0.0
  %4314 = vmatpush1.xpose.msra.mxu0 0.0
  %4315 = vmatprep.mubr.f32.mxu0 0.0
  %4316 = vmatmul.mubr.f32.gmra.mrb[0].mxu0 %v3096
  %v4317 = vpop.f32.mrb[0].mxu0
  %v4318 = vadd.f32 0.0, %v4317
  %v4319 = vpop.f32.mrb[0].mxu0
  %4320 = vdwg.mxu0
  %v4321 = vmul.f32 %v4318, 0.28867513
  %v4322 = vadd.f32 %v4321, %v73
  %v4323 = vsel %vm861, %v4322, -inf
  %4324 = vmax.xlane.f32.xlu0 %v4323
  %v4325 = vpop.xlane.xlu0 %4324
  %v4326 = vsub.f32 %v4322, %v4325
  %v4327 = vmul.f32 %v4326, 1.442695
  %v4328 = vpow.pop %v4327
  %v4329 = vsel %vm861, %v4328, 0.0
  %4330 = vadd.xlane.f32.xlu0 %v4329
  %v4331 = vpop.xlane.xlu0 %4330
  %v4332 = vrcp.pop %v4331
  %v4333 = vmul.f32 %v4328, %v4332
  %v4335 = vsel %vm861, %v4333, 0
  %4337 = vmatprep.subr.mxu0 0.0
  %4338 = vmatpush1.msra.mxu0 %v3158
  %4339 = vmatprep.subr.mxu0 0.0
  %4340 = vmatpush1.msra.mxu0 0.0
  %4341 = vmatprep.subr.mxu0 0.0
  %4342 = vmatpush1.msra.mxu0 0.0
  %4343 = vmatprep.subr.mxu0 0.0
  %4344 = vmatpush1.msra.mxu0 0.0
  %4345 = vmatprep.subr.mxu0 0.0
  %4346 = vmatpush1.msra.mxu0 0.0
  %4347 = vmatprep.subr.mxu0 0.0
  %4348 = vmatpush1.msra.mxu0 0.0
  %4349 = vmatprep.subr.mxu0 0.0
  %4350 = vmatpush1.msra.mxu0 0.0
  %4351 = vmatprep.subr.mxu0 0.0
  %4352 = vmatpush1.msra.mxu0 0.0
  %4353 = vmatprep.subr.mxu0 0.0
  %4354 = vmatpush1.msra.mxu0 0.0
  %4355 = vmatprep.subr.mxu0 0.0
  %4356 = vmatpush1.msra.mxu0 0.0
  %4357 = vmatprep.subr.mxu0 0.0
  %4358 = vmatpush1.msra.mxu0 0.0
  %4359 = vmatprep.subr.mxu0 0.0
  %4360 = vmatpush1.msra.mxu0 0.0
  %4361 = vmatprep.subr.mxu0 0.0
  %4362 = vmatpush1.msra.mxu0 0.0
  %4363 = vmatprep.subr.mxu0 0.0
  %4364 = vmatpush1.msra.mxu0 0.0
  %4365 = vmatprep.subr.mxu0 0.0
  %4366 = vmatpush1.msra.mxu0 0.0
  %4367 = vmatprep.subr.mxu0 0.0
  %4368 = vmatpush1.msra.mxu0 0.0
  %4369 = vmatprep.subr.mxu0 0.0
  %4370 = vmatpush1.msra.mxu0 0.0
  %4371 = vmatprep.subr.mxu0 0.0
  %4372 = vmatpush1.msra.mxu0 0.0
  %4373 = vmatprep.subr.mxu0 0.0
  %4374 = vmatpush1.msra.mxu0 0.0
  %4375 = vmatprep.subr.mxu0 0.0
  %4376 = vmatpush1.msra.mxu0 0.0
  %4377 = vmatprep.subr.mxu0 0.0
  %4378 = vmatpush1.msra.mxu0 0.0
  %4379 = vmatprep.subr.mxu0 0.0
  %4380 = vmatpush1.msra.mxu0 0.0
  %4381 = vmatprep.subr.mxu0 0.0
  %4382 = vmatpush1.msra.mxu0 0.0
  %4383 = vmatprep.subr.mxu0 0.0
  %4384 = vmatpush1.msra.mxu0 0.0
  %4385 = vmatprep.subr.mxu0 0.0
  %4386 = vmatpush1.msra.mxu0 0.0
  %4387 = vmatprep.subr.mxu0 0.0
  %4388 = vmatpush1.msra.mxu0 0.0
  %4389 = vmatprep.subr.mxu0 0.0
  %4390 = vmatpush1.msra.mxu0 0.0
  %4391 = vmatprep.subr.mxu0 0.0
  %4392 = vmatpush1.msra.mxu0 0.0
  %4393 = vmatprep.subr.mxu0 0.0
  %4394 = vmatpush1.msra.mxu0 0.0
  %4395 = vmatprep.subr.mxu0 0.0
  %4396 = vmatpush1.msra.mxu0 0.0
  %4397 = vmatprep.subr.mxu0 0.0
  %4398 = vmatpush1.msra.mxu0 0.0
  %4399 = vmatprep.subr.mxu0 0.0
  %4400 = vmatpush1.msra.mxu0 0.0
  %4401 = vmatprep.mubr.f32.mxu0 0.0
  %4402 = vmatmul.mubr.f32.gmra.mrb[0].mxu0 %v4335
  %v4403 = vpop.f32.mrb[0].mxu0
  %v4404 = vadd.f32 0.0, %v4403
  %v4405 = vpop.f32.mrb[0].mxu0
  %4406 = vdwg.mxu0
  %v4407 = vld [vmem:[%s2 + $0x27] ss:$0 sm:$0xff]
  %4408 = vmatprep.subr.mxu0 0.0
  %4409 = vmatpush1.msra.mxu0 %v2514
  %4410 = vmatprep.subr.mxu0 0.0
  %4411 = vmatpush1.msra.mxu0 %v2515
  %4412 = vmatprep.subr.mxu0 0.0
  %4413 = vmatpush1.msra.mxu0 %v2516
  %4414 = vmatprep.subr.mxu0 0.0
  %4415 = vmatpush1.msra.mxu0 %v2517
  %4416 = vmatprep.subr.mxu0 0.0
  %4417 = vmatpush1.msra.mxu0 %v2518
  %4418 = vmatprep.subr.mxu0 0.0
  %4419 = vmatpush1.msra.mxu0 %v2519
  %4420 = vmatprep.subr.mxu0 0.0
  %4421 = vmatpush1.msra.mxu0 %v2520
  %4422 = vmatprep.subr.mxu0 0.0
  %4423 = vmatpush1.msra.mxu0 %v2521
  %4424 = vmatprep.subr.mxu0 0.0
  %4425 = vmatpush1.msra.mxu0 %v2522
  %4426 = vmatprep.subr.mxu0 0.0
  %4427 = vmatpush1.msra.mxu0 %v2523
  %4428 = vmatprep.subr.mxu0 0.0
  %4429 = vmatpush1.msra.mxu0 %v2524
  %4430 = vmatprep.subr.mxu0 0.0
  %4431 = vmatpush1.msra.mxu0 %v2525
  %4432 = vmatprep.subr.mxu0 0.0
  %4433 = vmatpush1.msra.mxu0 %v2526
  %4434 = vmatprep.subr.mxu0 0.0
  %4435 = vmatpush1.msra.mxu0 %v2527
  %4436 = vmatprep.subr.mxu0 0.0
  %4437 = vmatpush1.msra.mxu0 %v2528
  %4438 = vmatprep.subr.mxu0 0.0
  %4439 = vmatpush1.msra.mxu0 %v2529
  %4440 = vmatprep.subr.mxu0 0.0
  %4441 = vmatpush1.msra.mxu0 %v2530
  %4442 = vmatprep.subr.mxu0 0.0
  %4443 = vmatpush1.msra.mxu0 %v2531
  %4444 = vmatprep.subr.mxu0 0.0
  %4445 = vmatpush1.msra.mxu0 %v2532
  %4446 = vmatprep.subr.mxu0 0.0
  %4447 = vmatpush1.msra.mxu0 %v2533
  %4448 = vmatprep.subr.mxu0 0.0
  %4449 = vmatpush1.msra.mxu0 %v2534
  %4450 = vmatprep.subr.mxu0 0.0
  %4451 = vmatpush1.msra.mxu0 %v2535
  %4452 = vmatprep.subr.mxu0 0.0
  %4453 = vmatpush1.msra.mxu0 %v2536
  %4454 = vmatprep.subr.mxu0 0.0
  %4455 = vmatpush1.msra.mxu0 %v2537
  %4456 = vmatprep.subr.mxu0 0.0
  %4457 = vmatpush1.msra.mxu0 %v2538
  %4458 = vmatprep.subr.mxu0 0.0
  %4459 = vmatpush1.msra.mxu0 %v2539
  %4460 = vmatprep.subr.mxu0 0.0
  %4461 = vmatpush1.msra.mxu0 %v2540
  %4462 = vmatprep.subr.mxu0 0.0
  %4463 = vmatpush1.msra.mxu0 %v2541
  %4464 = vmatprep.subr.mxu0 0.0
  %4465 = vmatpush1.msra.mxu0 %v2542
  %4466 = vmatprep.subr.mxu0 0.0
  %4467 = vmatpush1.msra.mxu0 %v2543
  %4468 = vmatprep.subr.mxu0 0.0
  %4469 = vmatpush1.msra.mxu0 %v2544
  %4470 = vmatprep.subr.mxu0 0.0
  %4471 = vmatpush1.msra.mxu0 %v2545
  %4472 = vmatprep.mubr.f32.mxu0 %v3468
  %4473 = vmatmul.mubr.f32.gmra.mrb[0].mxu0 %v3312
  %v4474 = vpop.f32.mrb[0].mxu0
  %v4475 = vadd.f32 %v4407, %v4474
  %v4476 = vpop.f32.mrb[0].mxu0
  %4477 = vmatprep.mubr.f32.mxu0 %v4092
  %4478 = vmatmul.mubr.f32.gmra.mrb[0].mxu0 %v3936
  %v4479 = vpop.f32.mrb[0].mxu0
  %v4480 = vadd.f32 %v4407, %v4479
  %v4481 = vpop.f32.mrb[0].mxu0
  %4482 = vdwg.mxu0
  %4483 = vmatprep.subr.mxu0 0.0
  %4484 = vmatpush1.msra.mxu0 %v2546
  %4485 = vmatprep.subr.mxu0 0.0
  %4486 = vmatpush1.msra.mxu0 %v2547
  %4487 = vmatprep.subr.mxu0 0.0
  %4488 = vmatpush1.msra.mxu0 %v2548
  %4489 = vmatprep.subr.mxu0 0.0
  %4490 = vmatpush1.msra.mxu0 %v2549
  %4491 = vmatprep.subr.mxu0 0.0
  %4492 = vmatpush1.msra.mxu0 %v2550
  %4493 = vmatprep.subr.mxu0 0.0
  %4494 = vmatpush1.msra.mxu0 %v2551
  %4495 = vmatprep.subr.mxu0 0.0
  %4496 = vmatpush1.msra.mxu0 %v2552
  %4497 = vmatprep.subr.mxu0 0.0
  %4498 = vmatpush1.msra.mxu0 %v2553
  %4499 = vmatprep.subr.mxu0 0.0
  %4500 = vmatpush1.msra.mxu0 %v2554
  %4501 = vmatprep.subr.mxu0 0.0
  %4502 = vmatpush1.msra.mxu0 %v2555
  %4503 = vmatprep.subr.mxu0 0.0
  %4504 = vmatpush1.msra.mxu0 %v2556
  %4505 = vmatprep.subr.mxu0 0.0
  %4506 = vmatpush1.msra.mxu0 %v2557
  %4507 = vmatprep.subr.mxu0 0.0
  %4508 = vmatpush1.msra.mxu0 %v2558
  %4509 = vmatprep.subr.mxu0 0.0
  %4510 = vmatpush1.msra.mxu0 %v2559
  %4511 = vmatprep.subr.mxu0 0.0
  %4512 = vmatpush1.msra.mxu0 %v2560
  %4513 = vmatprep.subr.mxu0 0.0
  %4514 = vmatpush1.msra.mxu0 %v2561
  %4515 = vmatprep.subr.mxu0 0.0
  %4516 = vmatpush1.msra.mxu0 %v2562
  %4517 = vmatprep.subr.mxu0 0.0
  %4518 = vmatpush1.msra.mxu0 %v2563
  %4519 = vmatprep.subr.mxu0 0.0
  %4520 = vmatpush1.msra.mxu0 %v2564
  %4521 = vmatprep.subr.mxu0 0.0
  %4522 = vmatpush1.msra.mxu0 %v2565
  %4523 = vmatprep.subr.mxu0 0.0
  %4524 = vmatpush1.msra.mxu0 %v2566
  %4525 = vmatprep.subr.mxu0 0.0
  %4526 = vmatpush1.msra.mxu0 %v2567
  %4527 = vmatprep.subr.mxu0 0.0
  %4528 = vmatpush1.msra.mxu0 %v2568
  %4529 = vmatprep.subr.mxu0 0.0
  %4530 = vmatpush1.msra.mxu0 %v2569
  %4531 = vmatprep.subr.mxu0 0.0
  %4532 = vmatpush1.msra.mxu0 %v2570
  %4533 = vmatprep.subr.mxu0 0.0
  %4534 = vmatpush1.msra.mxu0 %v2571
  %4535 = vmatprep.subr.mxu0 0.0
  %4536 = vmatpush1.msra.mxu0 %v2572
  %4537 = vmatprep.subr.mxu0 0.0
  %4538 = vmatpush1.msra.mxu0 %v2573
  %4539 = vmatprep.subr.mxu0 0.0
  %4540 = vmatpush1.msra.mxu0 %v2574
  %4541 = vmatprep.subr.mxu0 0.0
  %4542 = vmatpush1.msra.mxu0 %v2575
  %4543 = vmatprep.subr.mxu0 0.0
  %4544 = vmatpush1.msra.mxu0 %v2576
  %4545 = vmatprep.subr.mxu0 0.0
  %4546 = vmatpush1.msra.mxu0 %v2577
  %4547 = vmatprep.mubr.f32.mxu0 %v3780
  %4548 = vmatmul.mubr.f32.gmra.mrb[0].mxu0 %v3624
  %v4549 = vpop.f32.mrb[0].mxu0
  %v4550 = vadd.f32 %v4475, %v4549
  %v4551 = vpop.f32.mrb[0].mxu0
  %4552 = vmatprep.mubr.f32.mxu0 %v4404
  %4553 = vmatmul.mubr.f32.gmra.mrb[0].mxu0 %v4248
  %v4554 = vpop.f32.mrb[0].mxu0
  %v4555 = vadd.f32 %v4480, %v4554
  %v4556 = vpop.f32.mrb[0].mxu0
  %4557 = vdwg.mxu0
  %v4558 = vadd.f32 %v2438, %v4550
  %v4559 = vadd.f32 %v2439, %v4555
  %v4560 = vld [vmem:[%s2 + $0x40] ss:$0 sm:$0xff]
  %v4561 = vld [vmem:[%s2 + $0x41] ss:$0 sm:$0xff]
  %v4562 = vsel %vm33, %v4558, 0.0
  %4563 = vadd.xlane.f32.xlu0 %v4562
  %v4564 = vpop.xlane.xlu0 %4563
  %v4565 = vsel %vm33, %v4559, 0.0
  %4566 = vadd.xlane.f32.xlu0 %v4565
  %v4567 = vpop.xlane.xlu0 %4566
  %v4568 = vmul.f32 %v4564, %v40
  %v4569 = vmul.f32 %v4567, %v40
  %v4570 = vsub.f32 %v4558, %v4568
  %v4571 = vsub.f32 %v4559, %v4569
  %v4572 = vmul.f32 %v4570, %v4570
  %v4573 = vmul.f32 %v4571, %v4571
  %v4574 = vsel %vm33, %v4572, 0.0
  %4575 = vadd.xlane.f32.xlu0 %v4574
  %v4576 = vpop.xlane.xlu0 %4575
  %v4577 = vsel %vm33, %v4573, 0.0
  %4578 = vadd.xlane.f32.xlu0 %v4577
  %v4579 = vpop.xlane.xlu0 %4578
  %v4580 = vmul.f32 %v4576, %v40
  %v4581 = vmul.f32 %v4579, %v40
  %v4582 = vadd.f32 %v4580, 1e-12
  %v4583 = vadd.f32 %v4581, 1e-12
  %v4584 = vrsqrt.pop %v4582
  %v4585 = vrsqrt.pop %v4583
  %v4586 = vmul.f32 %v4570, %v4584
  %v4587 = vmul.f32 %v4571, %v4585
  %v4588 = vmul.f32 %v4586, %v4560
  %v4589 = vmul.f32 %v4587, %v4560
  %v4590 = vadd.f32 %v4588, %v4561
  %v4591 = vadd.f32 %v4589, %v4561
  %v4592 = vld [vmem:[%s2 + $0x42] ss:$0 sm:$0xff]
  %v4594 = vsel %vm33, %v4590, 0
  %v4597 = vsel %vm33, %v4591, 0
  %4599 = vmatprep.subr.mxu0 0.0
  %4600 = vmatpush1.msra.mxu0 %v2579
  %4601 = vmatprep.subr.mxu0 0.0
  %4602 = vmatpush1.msra.mxu0 %v2580
  %4603 = vmatprep.subr.mxu0 0.0
  %4604 = vmatpush1.msra.mxu0 %v2581
  %4605 = vmatprep.subr.mxu0 0.0
  %4606 = vmatpush1.msra.mxu0 %v2582
  %4607 = vmatprep.subr.mxu0 0.0
  %4608 = vmatpush1.msra.mxu0 %v2583
  %4609 = vmatprep.subr.mxu0 0.0
  %4610 = vmatpush1.msra.mxu0 %v2584
  %4611 = vmatprep.subr.mxu0 0.0
  %4612 = vmatpush1.msra.mxu0 0.0
  %4613 = vmatprep.subr.mxu0 0.0
  %4614 = vmatpush1.msra.mxu0 0.0
  %4615 = vmatprep.subr.mxu0 0.0
  %4616 = vmatpush1.msra.mxu0 0.0
  %4617 = vmatprep.subr.mxu0 0.0
  %4618 = vmatpush1.msra.mxu0 0.0
  %4619 = vmatprep.subr.mxu0 0.0
  %4620 = vmatpush1.msra.mxu0 0.0
  %4621 = vmatprep.subr.mxu0 0.0
  %4622 = vmatpush1.msra.mxu0 0.0
  %4623 = vmatprep.subr.mxu0 0.0
  %4624 = vmatpush1.msra.mxu0 0.0
  %4625 = vmatprep.subr.mxu0 0.0
  %4626 = vmatpush1.msra.mxu0 0.0
  %4627 = vmatprep.subr.mxu0 0.0
  %4628 = vmatpush1.msra.mxu0 0.0
  %4629 = vmatprep.subr.mxu0 0.0
  %4630 = vmatpush1.msra.mxu0 0.0
  %4631 = vmatprep.subr.mxu0 0.0
  %4632 = vmatpush1.msra.mxu0 0.0
  %4633 = vmatprep.subr.mxu0 0.0
  %4634 = vmatpush1.msra.mxu0 0.0
  %4635 = vmatprep.subr.mxu0 0.0
  %4636 = vmatpush1.msra.mxu0 0.0
  %4637 = vmatprep.subr.mxu0 0.0
  %4638 = vmatpush1.msra.mxu0 0.0
  %4639 = vmatprep.subr.mxu0 0.0
  %4640 = vmatpush1.msra.mxu0 0.0
  %4641 = vmatprep.subr.mxu0 0.0
  %4642 = vmatpush1.msra.mxu0 0.0
  %4643 = vmatprep.subr.mxu0 0.0
  %4644 = vmatpush1.msra.mxu0 0.0
  %4645 = vmatprep.subr.mxu0 0.0
  %4646 = vmatpush1.msra.mxu0 0.0
  %4647 = vmatprep.subr.mxu0 0.0
  %4648 = vmatpush1.msra.mxu0 0.0
  %4649 = vmatprep.subr.mxu0 0.0
  %4650 = vmatpush1.msra.mxu0 0.0
  %4651 = vmatprep.subr.mxu0 0.0
  %4652 = vmatpush1.msra.mxu0 0.0
  %4653 = vmatprep.subr.mxu0 0.0
  %4654 = vmatpush1.msra.mxu0 0.0
  %4655 = vmatprep.subr.mxu0 0.0
  %4656 = vmatpush1.msra.mxu0 0.0
  %4657 = vmatprep.subr.mxu0 0.0
  %4658 = vmatpush1.msra.mxu0 0.0
  %4659 = vmatprep.subr.mxu0 0.0
  %4660 = vmatpush1.msra.mxu0 0.0
  %4661 = vmatprep.subr.mxu0 0.0
  %4662 = vmatpush1.msra.mxu0 0.0
  %4663 = vmatprep.mubr.f32.mxu0 0.0
  %4664 = vmatmul.mubr.f32.gmra.mrb[0].mxu0 %v4594
  %v4665 = vpop.f32.mrb[0].mxu0
  %v4666 = vadd.f32 %v4592, %v4665
  %v4667 = vpop.f32.mrb[0].mxu0
  %4668 = vmatprep.mubr.f32.mxu0 0.0
  %4669 = vmatmul.mubr.f32.gmra.mrb[0].mxu0 %v4597
  %v4670 = vpop.f32.mrb[0].mxu0
  %v4671 = vadd.f32 %v4592, %v4670
  %v4672 = vpop.f32.mrb[0].mxu0
  %4673 = vdwg.mxu0
  %v4674 = vmul.f32 %v4666, %v4666
  %v4675 = vmul.f32 %v4671, %v4671
  %v4676 = vmul.f32 %v4666, %v4674
  %v4677 = vmul.f32 %v4671, %v4675
  %v4678 = vmul.f32 %v4676, 0.044715
  %v4679 = vmul.f32 %v4677, 0.044715
  %v4680 = vadd.f32 %v4666, %v4678
  %v4681 = vadd.f32 %v4671, %v4679
  %v4682 = vmul.f32 %v4680, 0.7978846
  %v4683 = vmul.f32 %v4681, 0.7978846
  %v4684 = vtanh.pop %v4682
  %v4685 = vtanh.pop %v4683
  %v4686 = vadd.f32 %v4684, 1.0
  %v4687 = vadd.f32 %v4685, 1.0
  %v4688 = vmul.f32 %v4686, 0.5
  %v4689 = vmul.f32 %v4687, 0.5
  %v4690 = vmul.f32 %v4666, %v4688
  %v4691 = vmul.f32 %v4671, %v4689
  %v4692 = vld [vmem:[%s2 + $0x43] ss:$0 sm:$0xff]
  %v4694 = vsel %vm2324, %v4690, 0
  %v4697 = vsel %vm2324, %v4691, 0
  %4699 = vmatprep.subr.mxu0 0.0
  %4700 = vmatpush1.msra.mxu0 %v2586
  %4701 = vmatprep.subr.mxu0 0.0
  %4702 = vmatpush1.msra.mxu0 %v2587
  %4703 = vmatprep.subr.mxu0 0.0
  %4704 = vmatpush1.msra.mxu0 %v2588
  %4705 = vmatprep.subr.mxu0 0.0
  %4706 = vmatpush1.msra.mxu0 %v2589
  %4707 = vmatprep.subr.mxu0 0.0
  %4708 = vmatpush1.msra.mxu0 %v2590
  %4709 = vmatprep.subr.mxu0 0.0
  %4710 = vmatpush1.msra.mxu0 %v2591
  %4711 = vmatprep.subr.mxu0 0.0
  %4712 = vmatpush1.msra.mxu0 %v2592
  %4713 = vmatprep.subr.mxu0 0.0
  %4714 = vmatpush1.msra.mxu0 %v2593
  %4715 = vmatprep.subr.mxu0 0.0
  %4716 = vmatpush1.msra.mxu0 %v2594
  %4717 = vmatprep.subr.mxu0 0.0
  %4718 = vmatpush1.msra.mxu0 %v2595
  %4719 = vmatprep.subr.mxu0 0.0
  %4720 = vmatpush1.msra.mxu0 %v2596
  %4721 = vmatprep.subr.mxu0 0.0
  %4722 = vmatpush1.msra.mxu0 %v2597
  %4723 = vmatprep.subr.mxu0 0.0
  %4724 = vmatpush1.msra.mxu0 0.0
  %4725 = vmatprep.subr.mxu0 0.0
  %4726 = vmatpush1.msra.mxu0 0.0
  %4727 = vmatprep.subr.mxu0 0.0
  %4728 = vmatpush1.msra.mxu0 0.0
  %4729 = vmatprep.subr.mxu0 0.0
  %4730 = vmatpush1.msra.mxu0 0.0
  %4731 = vmatprep.subr.mxu0 0.0
  %4732 = vmatpush1.msra.mxu0 0.0
  %4733 = vmatprep.subr.mxu0 0.0
  %4734 = vmatpush1.msra.mxu0 0.0
  %4735 = vmatprep.subr.mxu0 0.0
  %4736 = vmatpush1.msra.mxu0 0.0
  %4737 = vmatprep.subr.mxu0 0.0
  %4738 = vmatpush1.msra.mxu0 0.0
  %4739 = vmatprep.subr.mxu0 0.0
  %4740 = vmatpush1.msra.mxu0 0.0
  %4741 = vmatprep.subr.mxu0 0.0
  %4742 = vmatpush1.msra.mxu0 0.0
  %4743 = vmatprep.subr.mxu0 0.0
  %4744 = vmatpush1.msra.mxu0 0.0
  %4745 = vmatprep.subr.mxu0 0.0
  %4746 = vmatpush1.msra.mxu0 0.0
  %4747 = vmatprep.subr.mxu0 0.0
  %4748 = vmatpush1.msra.mxu0 0.0
  %4749 = vmatprep.subr.mxu0 0.0
  %4750 = vmatpush1.msra.mxu0 0.0
  %4751 = vmatprep.subr.mxu0 0.0
  %4752 = vmatpush1.msra.mxu0 0.0
  %4753 = vmatprep.subr.mxu0 0.0
  %4754 = vmatpush1.msra.mxu0 0.0
  %4755 = vmatprep.subr.mxu0 0.0
  %4756 = vmatpush1.msra.mxu0 0.0
  %4757 = vmatprep.subr.mxu0 0.0
  %4758 = vmatpush1.msra.mxu0 0.0
  %4759 = vmatprep.subr.mxu0 0.0
  %4760 = vmatpush1.msra.mxu0 0.0
  %4761 = vmatprep.subr.mxu0 0.0
  %4762 = vmatpush1.msra.mxu0 0.0
  %4763 = vmatprep.mubr.f32.mxu0 0.0
  %4764 = vmatmul.mubr.f32.gmra.mrb[0].mxu0 %v4694
  %v4765 = vpop.f32.mrb[0].mxu0
  %v4766 = vadd.f32 %v4692, %v4765
  %v4767 = vpop.f32.mrb[0].mxu0
  %4768 = vmatprep.mubr.f32.mxu0 0.0
  %4769 = vmatmul.mubr.f32.gmra.mrb[0].mxu0 %v4697
  %v4770 = vpop.f32.mrb[0].mxu0
  %v4771 = vadd.f32 %v4692, %v4770
  %v4772 = vpop.f32.mrb[0].mxu0
  %4773 = vdwg.mxu0
  %v4774 = vadd.f32 %v4590, %v4766
  %v4775 = vadd.f32 %v4591, %v4771
  %v4776 = vld [vmem:[%s2 + $0x44] ss:$0 sm:$0xff]
  %v4777 = vld [vmem:[%s2 + $0x45] ss:$0 sm:$0xff]
  %v4778 = vsel %vm33, %v4774, 0.0
  %4779 = vadd.xlane.f32.xlu0 %v4778
  %v4780 = vpop.xlane.xlu0 %4779
  %v4781 = vsel %vm33, %v4775, 0.0
  %4782 = vadd.xlane.f32.xlu0 %v4781
  %v4783 = vpop.xlane.xlu0 %4782
  %v4784 = vmul.f32 %v4780, %v40
  %v4785 = vmul.f32 %v4783, %v40
  %v4786 = vsub.f32 %v4774, %v4784
  %v4787 = vsub.f32 %v4775, %v4785
  %v4788 = vmul.f32 %v4786, %v4786
  %v4789 = vmul.f32 %v4787, %v4787
  %v4790 = vsel %vm33, %v4788, 0.0
  %4791 = vadd.xlane.f32.xlu0 %v4790
  %v4792 = vpop.xlane.xlu0 %4791
  %v4793 = vsel %vm33, %v4789, 0.0
  %4794 = vadd.xlane.f32.xlu0 %v4793
  %v4795 = vpop.xlane.xlu0 %4794
  %v4796 = vmul.f32 %v4792, %v40
  %v4797 = vmul.f32 %v4795, %v40
  %v4798 = vadd.f32 %v4796, 1e-12
  %v4799 = vadd.f32 %v4797, 1e-12
  %v4800 = vrsqrt.pop %v4798
  %v4801 = vrsqrt.pop %v4799
  %v4802 = vmul.f32 %v4786, %v4800
  %v4803 = vmul.f32 %v4787, %v4801
  %v4804 = vmul.f32 %v4802, %v4776
  %v4805 = vmul.f32 %v4803, %v4776
  %v4806 = vadd.f32 %v4804, %v4777
  %v4807 = vadd.f32 %v4805, %v4777
  %v4808 = vld [vmem:[%s7] sm:$0xff]
  %v4809 = vld [vmem:[%s7 + $0x8] sm:$0xff]
  %v4810 = vld [vmem:[%s7 + $0x10] sm:$0xff]
  %v4811 = vld [vmem:[%s7 + $0x18] sm:$0xff]
  %v4812 = vld [vmem:[%s7 + $0x20] sm:$0xff]
  %v4813 = vld [vmem:[%s7 + $0x28] sm:$0xff]
  %v4814 = vld [vmem:[%s2 + $0x46] ss:$0 sm:$0xff]
  %v4816 = vsel %vm33, %v4806, 0
  %v4819 = vsel %vm33, %v4807, 0
  %4821 = vmatprep.subr.mxu0 0.0
  %4822 = vmatpush1.msra.mxu0 %v4808
  %4823 = vmatprep.subr.mxu0 0.0
  %4824 = vmatpush1.msra.mxu0 %v4809
  %4825 = vmatprep.subr.mxu0 0.0
  %4826 = vmatpush1.msra.mxu0 %v4810
  %4827 = vmatprep.subr.mxu0 0.0
  %4828 = vmatpush1.msra.mxu0 %v4811
  %4829 = vmatprep.subr.mxu0 0.0
  %4830 = vmatpush1.msra.mxu0 %v4812
  %4831 = vmatprep.subr.mxu0 0.0
  %4832 = vmatpush1.msra.mxu0 %v4813
  %4833 = vmatprep.subr.mxu0 0.0
  %4834 = vmatpush1.msra.mxu0 0.0
  %4835 = vmatprep.subr.mxu0 0.0
  %4836 = vmatpush1.msra.mxu0 0.0
  %4837 = vmatprep.subr.mxu0 0.0
  %4838 = vmatpush1.msra.mxu0 0.0
  %4839 = vmatprep.subr.mxu0 0.0
  %4840 = vmatpush1.msra.mxu0 0.0
  %4841 = vmatprep.subr.mxu0 0.0
  %4842 = vmatpush1.msra.mxu0 0.0
  %4843 = vmatprep.subr.mxu0 0.0
  %4844 = vmatpush1.msra.mxu0 0.0
  %4845 = vmatprep.subr.mxu0 0.0
  %4846 = vmatpush1.msra.mxu0 0.0
  %4847 = vmatprep.subr.mxu0 0.0
  %4848 = vmatpush1.msra.mxu0 0.0
  %4849 = vmatprep.subr.mxu0 0.0
  %4850 = vmatpush1.msra.mxu0 0.0
  %4851 = vmatprep.subr.mxu0 0.0
  %4852 = vmatpush1.msra.mxu0 0.0
  %4853 = vmatprep.subr.mxu0 0.0
  %4854 = vmatpush1.msra.mxu0 0.0
  %4855 = vmatprep.subr.mxu0 0.0
  %4856 = vmatpush1.msra.mxu0 0.0
  %4857 = vmatprep.subr.mxu0 0.0
  %4858 = vmatpush1.msra.mxu0 0.0
  %4859 = vmatprep.subr.mxu0 0.0
  %4860 = vmatpush1.msra.mxu0 0.0
  %4861 = vmatprep.subr.mxu0 0.0
  %4862 = vmatpush1.msra.mxu0 0.0
  %4863 = vmatprep.subr.mxu0 0.0
  %4864 = vmatpush1.msra.mxu0 0.0
  %4865 = vmatprep.subr.mxu0 0.0
  %4866 = vmatpush1.msra.mxu0 0.0
  %4867 = vmatprep.subr.mxu0 0.0
  %4868 = vmatpush1.msra.mxu0 0.0
  %4869 = vmatprep.subr.mxu0 0.0
  %4870 = vmatpush1.msra.mxu0 0.0
  %4871 = vmatprep.subr.mxu0 0.0
  %4872 = vmatpush1.msra.mxu0 0.0
  %4873 = vmatprep.subr.mxu0 0.0
  %4874 = vmatpush1.msra.mxu0 0.0
  %4875 = vmatprep.subr.mxu0 0.0
  %4876 = vmatpush1.msra.mxu0 0.0
  %4877 = vmatprep.subr.mxu0 0.0
  %4878 = vmatpush1.msra.mxu0 0.0
  %4879 = vmatprep.subr.mxu0 0.0
  %4880 = vmatpush1.msra.mxu0 0.0
  %4881 = vmatprep.subr.mxu0 0.0
  %4882 = vmatpush1.msra.mxu0 0.0
  %4883 = vmatprep.subr.mxu0 0.0
  %4884 = vmatpush1.msra.mxu0 0.0
  %4885 = vmatprep.mubr.f32.mxu0 0.0
  %4886 = vmatmul.mubr.f32.gmra.mrb[0].mxu0 %v4816
  %v4887 = vpop.f32.mrb[0].mxu0
  %v4888 = vadd.f32 %v4814, %v4887
  %v4889 = vpop.f32.mrb[0].mxu0
  %4890 = vmatprep.mubr.f32.mxu0 0.0
  %4891 = vmatmul.mubr.f32.gmra.mrb[0].mxu0 %v4819
  %v4892 = vpop.f32.mrb[0].mxu0
  %v4893 = vadd.f32 %v4814, %v4892
  %v4894 = vpop.f32.mrb[0].mxu0
  %4895 = vdwg.mxu0
  %4896 = vst [vmem:[%s8] sm:$0xff] %v4888
  %4897 = vst [vmem:[%s8 + $0x8] sm:$0xff] %v4893
  // Predicated region
  $region34: #{nutrition_layout_forward.1} parent=0 // pred_check
    _
  $region35: #{nutrition_layout_forward.1} parent=0 // pred_check_branch
    %4899 = sbr.rel (0) target = $region37
  $region36: #{nutrition_layout_forward.1} parent=0 // pred_region
    _
  $region37: #{nutrition_layout_forward.1} parent=0 // pred_fallthru
    _
  // Predicated region
  $region38: #{nutrition_layout_forward.1} parent=0 // pred_check
    _
  $region39: #{nutrition_layout_forward.1} parent=0 // pred_check_branch
    %4901 = sbr.rel (0) target = $region41
  $region40: #{nutrition_layout_forward.1} parent=0 // pred_region
    _
  $region41: #{nutrition_layout_forward.1} parent=0 // pred_fallthru
    _

</llo_original>
